<compile_context>
chip_gen: v6e
topology: v6e:2x2x1
jax: 0.10.0
libtpu: 0.0.40
codegen_flags: <defaults>
</compile_context>

<pallas_src>
import math
import functools

import jax
import jax.numpy as jnp
import numpy as np
from jax.experimental import pallas as pl
from jax.experimental.pallas import tpu as pltpu


def _layernorm(x, w, b, eps=1e-5):
    mu = jnp.mean(x, axis=-1, keepdims=True)
    var = jnp.mean((x - mu) ** 2, axis=-1, keepdims=True)
    return (x - mu) * jax.lax.rsqrt(var + eps) * w + b


def block_kernel(x_ref, mask_ref, vecs_ref, wqkv_ref, bqkv_ref, e_ref,
                 wo_ref, w1_ref, b1_ref, w2_ref, out_ref, *,
                 batch_block, seq_len, dim, num_head, head_dim, compute_dtype):
    TB, S, D, H = batch_block, seq_len, head_dim, num_head
    HD = H * D
    N = TB * S
    cd = compute_dtype

    x3 = x_ref[...]                               # (TB, S, dim) f32
    xf = x3.reshape(N, dim)                       # fold batch into rows (leading-dim merge)
    m2 = mask_ref[...]                            # (TB, S) f32, S stays in lanes

    ln1_w, ln1_b = vecs_ref[0], vecs_ref[1]
    ln2_w, ln2_b = vecs_ref[2], vecs_ref[3]
    bo, b2 = vecs_ref[4], vecs_ref[5]

    # ---- norm1 + fused QKV projection (single wide MXU matmul) -----------------
    xn = _layernorm(xf, ln1_w, ln1_b)                                  # f32
    qkv = jnp.dot(xn.astype(cd), wqkv_ref[...],
                  preferred_element_type=jnp.float32) + bqkv_ref[...]  # (N, 3*HD) f32
    qkv3 = qkv.reshape(TB, S, 3 * HD)

    # ---- multi-head Linformer attention ----------------------------------------
    head_outs = []
    for h in range(H):
        lo = h * D
        q3 = qkv3[:, :, lo:lo + D].astype(cd)                    # (TB, S, D); scale pre-folded
        k3 = qkv3[:, :, HD + lo:HD + lo + D].astype(cd)
        v3 = qkv3[:, :, 2 * HD + lo:2 * HD + lo + D].astype(cd)

        # Sequence mask folded into E once: E @ (K*mask) == (E*mask) @ K  (0/1 mask).
        e_m = (e_ref[h] * m2[:, None, :]).astype(cd)             # (TB, k_lin, S)

        # All einsums below are native dot_generals (no transposes / broadcasts).
        kp = jnp.einsum('bsd,bks->bdk', k3, e_m, preferred_element_type=jnp.float32)
        vp = jnp.einsum('bsd,bks->bdk', v3, e_m, preferred_element_type=jnp.float32)

        dot = jnp.einsum('bsd,bdk->bsk', q3, kp.astype(cd),
                         preferred_element_type=jnp.float32)     # (TB, S, k_lin)
        dot = dot - jnp.max(dot, axis=-1, keepdims=True)
        p = jnp.exp(dot)
        attn = p / jnp.sum(p, axis=-1, keepdims=True)            # exact divide (approx vrcp
                                                                 # caused the old mismatch)
        head_outs.append(
            jnp.einsum('bsk,bdk->bsd', attn.astype(cd), vp.astype(cd),
                       preferred_element_type=jnp.float32))      # (TB, S, D)

    # ---- fused output projection + residual 1 ----------------------------------
    head_cat = jnp.concatenate(head_outs, axis=-1).reshape(N, HD)  # (N, HD)
    mha = jnp.dot(head_cat.astype(cd), wo_ref[...],
                  preferred_element_type=jnp.float32) + bo
    x1 = mha + xf                                                  # dropout1 = identity (eval)

    # ---- norm2 + MLP (Linear -> exact GELU -> Linear) + residual 2 --------------
    xn2 = _layernorm(x1, ln2_w, ln2_b)
    h1 = jnp.dot(xn2.astype(cd), w1_ref[...],
                 preferred_element_type=jnp.float32) + b1_ref[...]
    g = 0.5 * h1 * (1.0 + jax.lax.erf(h1 * (1.0 / math.sqrt(2.0))))  # PyTorch default GELU
    h2 = jnp.dot(g.astype(cd), w2_ref[...],
                 preferred_element_type=jnp.float32) + b2

    out_ref[...] = (h2 + x1).reshape(TB, S, dim)                   # dropouts = identity (eval)


def prepare_params(params, *, num_head, head_dim, compute_dtype=jnp.bfloat16):
    """One-time (init-time) packing: head fusion, scale folding, dtype casts."""
    scale = 1.0 / math.sqrt(head_dim)          # power of two for head_dim=16 -> exact fold
    wd = compute_dtype
    wqkv = jnp.concatenate([params["wq_t"] * scale, params["wk_t"], params["wv_t"]],
                           axis=1).astype(wd)                         # (dim, 3*H*D)
    bqkv = jnp.concatenate([params["bq"] * scale, params["bk"], params["bv"]],
                           axis=1).astype(jnp.float32)                # (1, 3*H*D)
    vecs = jnp.concatenate([params["ln1_w"], params["ln1_b"],
                            params["ln2_w"], params["ln2_b"],
                            params["bo"], params["b2"]], axis=0).astype(jnp.float32)  # (6, dim)
    return dict(
        vecs=vecs, wqkv=wqkv, bqkv=bqkv,
        e=params["E"].astype(wd),                                     # (H, k_lin, S)
        wo=params["wo_t"].astype(wd),                                 # (H*D, dim)
        w1=params["w1_t"].astype(wd), b1=params["b1"].astype(jnp.float32),
        w2=params["w2_t"].astype(wd),
        compute_dtype=compute_dtype, num_head=num_head, head_dim=head_dim)


def linformer_block(x, mask, packed, *, batch_block=None):
    B, S, dim = x.shape
    H, D = packed["num_head"], packed["head_dim"]
    cd = packed["compute_dtype"]

    if batch_block is None:
        batch_block = B      # single big slab: best for v5e/v6e (1 TC); use B//2 on v7x
    TB = batch_block
    assert B % TB == 0, "batch_block must divide B"
    num_blocks = B // TB

    param_list = [packed["vecs"], packed["wqkv"], packed["bqkv"], packed["e"],
                  packed["wo"], packed["w1"], packed["b1"], packed["w2"]]

    def const_spec(shape):
        n = len(shape)
        return pl.BlockSpec(shape, lambda g, _n=n: (0,) * _n)

    in_specs = [
        pl.BlockSpec((TB, S, dim), lambda g: (g, 0, 0)),
        pl.BlockSpec((TB, S), lambda g: (g, 0)),          # lane-dense 2-D mask block
    ] + [const_spec(tuple(p.shape)) for p in param_list]

    kern = functools.partial(block_kernel, batch_block=TB, seq_len=S, dim=dim,
                             num_head=H, head_dim=D, compute_dtype=cd)

    return pl.pallas_call(
        kern,
        out_shape=jax.ShapeDtypeStruct((B, S, dim), jnp.float32),
        grid=(num_blocks,),
        in_specs=in_specs,
        out_specs=pl.BlockSpec((TB, S, dim), lambda g: (g, 0, 0)),
        compiler_params=pltpu.CompilerParams(dimension_semantics=("parallel",)),
    )(x, mask.astype(jnp.float32), *param_list)


def reference_block(x, mask, params, *, num_head, head_dim, compute_dtype=jnp.float32):
    """Pure-JAX reference mirroring the PyTorch Block forward (eval mode).

    compute_dtype=float32 reproduces the PyTorch math; bfloat16 mirrors the
    kernel's mixed-precision matmuls (bf16 inputs, f32 accumulation)."""
    cd = compute_dtype
    B, S, _ = x.shape
    H, D = num_head, head_dim

    def mm(a, b):
        return jnp.dot(a.astype(cd), b.astype(cd), preferred_element_type=jnp.float32)

    xn = _layernorm(x, params["ln1_w"][0], params["ln1_b"][0])
    q = mm(xn, params["wq_t"]) + params["bq"][0]
    k = mm(xn, params["wk_t"]) + params["bk"][0]
    v = mm(xn, params["wv_t"]) + params["bv"][0]

    def split(t):
        return t.reshape(B, S, H, D).transpose(0, 2, 1, 3)     # (B, H, S, D)

    Q, K, V = split(q), split(k), split(v)
    m = mask[:, None, :, None]
    E = params["E"].astype(cd)
    Kp = jnp.einsum("hks,bhsd->bhkd", E, (K * m).astype(cd),
                    preferred_element_type=jnp.float32)
    Vp = jnp.einsum("hks,bhsd->bhkd", E, (V * m).astype(cd),
                    preferred_element_type=jnp.float32)
    dot = jnp.einsum("bhsd,bhkd->bhsk", Q.astype(cd), Kp.astype(cd),
                     preferred_element_type=jnp.float32) / math.sqrt(D)
    attn = jax.nn.softmax(dot, axis=-1)
    Xh = jnp.einsum("bhsk,bhkd->bhsd", attn.astype(cd), Vp.astype(cd),
                    preferred_element_type=jnp.float32)
    Xh = Xh.transpose(0, 2, 1, 3).reshape(B, S, H * D)
    mha = mm(Xh, params["wo_t"]) + params["bo"][0]
    x1 = mha + x
    xn2 = _layernorm(x1, params["ln2_w"][0], params["ln2_b"][0])
    h1 = mm(xn2, params["w1_t"]) + params["b1"][0]
    g = 0.5 * h1 * (1.0 + jax.lax.erf(h1 / math.sqrt(2.0)))
    h2 = mm(g, params["w2_t"]) + params["b2"][0]
    return h2 + x1


if __name__ == "__main__":
    # Small config consistent with the module.
    B, S, dim = 2, 64, 32
    num_head, head_dim = 2, 16
    linformer_k = 16
    hidden_dim = 64

    key = jax.random.PRNGKey(0)
    keys = jax.random.split(key, 16)

    def rnd(k, shape, scale):
        return jax.random.normal(k, shape, dtype=jnp.float32) * scale

    params = {
        "ln1_w": jnp.ones((1, dim), jnp.float32) + rnd(keys[0], (1, dim), 0.05),
        "ln1_b": rnd(keys[1], (1, dim), 0.05),
        "wq_t": rnd(keys[2], (dim, num_head * head_dim), 1.0 / math.sqrt(dim)),
        "bq": rnd(keys[3], (1, num_head * head_dim), 0.02),
        "wk_t": rnd(keys[4], (dim, num_head * head_dim), 1.0 / math.sqrt(dim)),
        "bk": rnd(keys[5], (1, num_head * head_dim), 0.02),
        "wv_t": rnd(keys[6], (dim, num_head * head_dim), 1.0 / math.sqrt(dim)),
        "bv": rnd(keys[7], (1, num_head * head_dim), 0.02),
        "E": rnd(keys[8], (num_head, linformer_k, S), 1.0 / math.sqrt(linformer_k)),
        "wo_t": rnd(keys[9], (num_head * head_dim, dim), 1.0 / math.sqrt(num_head * head_dim)),
        "bo": rnd(keys[10], (1, dim), 0.02),
        "ln2_w": jnp.ones((1, dim), jnp.float32) + rnd(keys[11], (1, dim), 0.05),
        "ln2_b": rnd(keys[12], (1, dim), 0.05),
        "w1_t": rnd(keys[13], (dim, hidden_dim), 1.0 / math.sqrt(dim)),
        "b1": rnd(keys[14], (1, hidden_dim), 0.02),
        "w2_t": rnd(keys[15], (hidden_dim, dim), 1.0 / math.sqrt(hidden_dim)),
        "b2": jnp.zeros((1, dim), jnp.float32),
    }

    kx, km = jax.random.split(jax.random.PRNGKey(1))
    x = jax.random.normal(kx, (B, S, dim), dtype=jnp.float32)
    # mask: 1.0 for valid tokens, last few tokens of batch element 1 masked out.
    mask = jnp.ones((B, S), jnp.float32).at[1, S - 8:].set(0.0)

    # --- check 1: f32 kernel against the exact f32 PyTorch-equivalent reference ---
    packed_f32 = prepare_params(params, num_head=num_head, head_dim=head_dim,
                                compute_dtype=jnp.float32)
    out_f32 = jax.block_until_ready(linformer_block(x, mask, packed_f32))
    ref_f32 = reference_block(x, mask, params, num_head=num_head, head_dim=head_dim)
    np.testing.assert_allclose(np.asarray(out_f32), np.asarray(ref_f32),
                               rtol=1e-3, atol=1e-3)

    # --- check 2: bf16-matmul kernel (production config) against a reference with
    #     matching mixed precision (bf16 MXU inputs, f32 accumulation) -------------
    packed_bf16 = prepare_params(params, num_head=num_head, head_dim=head_dim,
                                 compute_dtype=jnp.bfloat16)
    out_bf16 = jax.block_until_ready(linformer_block(x, mask, packed_bf16))
    ref_bf16 = reference_block(x, mask, params, num_head=num_head, head_dim=head_dim,
                               compute_dtype=jnp.bfloat16)
    np.testing.assert_allclose(np.asarray(out_bf16), np.asarray(ref_bf16),
                               rtol=1e-2, atol=1e-2)

    print("KERNEL_OK")
</pallas_src>

<mosaic_0001>
module attributes {stable_mosaic.version = 11 : i64} {
  func.func @block_kernel(%arg0: i32, %arg1: memref<2x64x32xf32, #tpu.memory_space<vmem>>, %arg2: memref<2x64xf32, #tpu.memory_space<vmem>>, %arg3: memref<6x32xf32, #tpu.memory_space<vmem>>, %arg4: memref<32x96xf32, #tpu.memory_space<vmem>>, %arg5: memref<1x96xf32, #tpu.memory_space<vmem>>, %arg6: memref<2x16x64xf32, #tpu.memory_space<vmem>>, %arg7: memref<32x32xf32, #tpu.memory_space<vmem>>, %arg8: memref<32x64xf32, #tpu.memory_space<vmem>>, %arg9: memref<1x64xf32, #tpu.memory_space<vmem>>, %arg10: memref<64x32xf32, #tpu.memory_space<vmem>>, %arg11: memref<2x64x32xf32, #tpu.memory_space<vmem>>) attributes {dimension_semantics = [#tpu.dimension_semantics<parallel>], iteration_bounds = array<i64: 1>, scalar_prefetch = 0 : i64, scratch_operands = 0 : i64, tpu.core_type = #tpu.core_type<tc>, window_params = [{transform_indices = @transform_0, window_bounds = array<i64: 2, 64, 32>}, {transform_indices = @transform_1, window_bounds = array<i64: 2, 64>}, {pipeline_mode = #tpu.pipeline_mode<synchronous>, transform_indices = @transform_2, window_bounds = array<i64: 6, 32>}, {pipeline_mode = #tpu.pipeline_mode<synchronous>, transform_indices = @transform_3, window_bounds = array<i64: 32, 96>}, {pipeline_mode = #tpu.pipeline_mode<synchronous>, transform_indices = @transform_4, window_bounds = array<i64: 1, 96>}, {pipeline_mode = #tpu.pipeline_mode<synchronous>, transform_indices = @transform_5, window_bounds = array<i64: 2, 16, 64>}, {pipeline_mode = #tpu.pipeline_mode<synchronous>, transform_indices = @transform_6, window_bounds = array<i64: 32, 32>}, {pipeline_mode = #tpu.pipeline_mode<synchronous>, transform_indices = @transform_7, window_bounds = array<i64: 32, 64>}, {pipeline_mode = #tpu.pipeline_mode<synchronous>, transform_indices = @transform_8, window_bounds = array<i64: 1, 64>}, {pipeline_mode = #tpu.pipeline_mode<synchronous>, transform_indices = @transform_9, window_bounds = array<i64: 64, 32>}, {transform_indices = @transform_10, window_bounds = array<i64: 2, 64, 32>}]} {
    %c0 = arith.constant 0 : index
    %c0_0 = arith.constant 0 : index
    %c0_1 = arith.constant 0 : index
    %0 = vector.load %arg1[%c0, %c0_0, %c0_1] : memref<2x64x32xf32, #tpu.memory_space<vmem>>, vector<2x64x32xf32>
    %1 = vector.shape_cast %0 : vector<2x64x32xf32> to vector<128x32xf32>
    %c0_2 = arith.constant 0 : index
    %c0_3 = arith.constant 0 : index
    %2 = vector.load %arg2[%c0_2, %c0_3] : memref<2x64xf32, #tpu.memory_space<vmem>>, vector<2x64xf32>
    %c0_4 = arith.constant 0 : index
    %c0_5 = arith.constant 0 : index
    %3 = vector.load %arg3[%c0_4, %c0_5] : memref<6x32xf32, #tpu.memory_space<vmem>>, vector<1x32xf32>
    %4 = vector.shape_cast %3 : vector<1x32xf32> to vector<32xf32>
    %c1 = arith.constant 1 : index
    %c0_6 = arith.constant 0 : index
    %5 = vector.load %arg3[%c1, %c0_6] : memref<6x32xf32, #tpu.memory_space<vmem>>, vector<1x32xf32>
    %6 = vector.shape_cast %5 : vector<1x32xf32> to vector<32xf32>
    %c2 = arith.constant 2 : index
    %c0_7 = arith.constant 0 : index
    %7 = vector.load %arg3[%c2, %c0_7] : memref<6x32xf32, #tpu.memory_space<vmem>>, vector<1x32xf32>
    %8 = vector.shape_cast %7 : vector<1x32xf32> to vector<32xf32>
    %c3 = arith.constant 3 : index
    %c0_8 = arith.constant 0 : index
    %9 = vector.load %arg3[%c3, %c0_8] : memref<6x32xf32, #tpu.memory_space<vmem>>, vector<1x32xf32>
    %10 = vector.shape_cast %9 : vector<1x32xf32> to vector<32xf32>
    %c4 = arith.constant 4 : index
    %c0_9 = arith.constant 0 : index
    %11 = vector.load %arg3[%c4, %c0_9] : memref<6x32xf32, #tpu.memory_space<vmem>>, vector<1x32xf32>
    %12 = vector.shape_cast %11 : vector<1x32xf32> to vector<32xf32>
    %c5 = arith.constant 5 : index
    %c0_10 = arith.constant 0 : index
    %13 = vector.load %arg3[%c5, %c0_10] : memref<6x32xf32, #tpu.memory_space<vmem>>, vector<1x32xf32>
    %14 = vector.shape_cast %13 : vector<1x32xf32> to vector<32xf32>
    %cst = arith.constant dense<0.000000e+00> : vector<128xf32>
    %15 = vector.multi_reduction <add>, %1, %cst [1] : vector<128x32xf32> to vector<128xf32>
    %16 = vector.shape_cast %15 : vector<128xf32> to vector<128x1xf32>
    %cst_11 = arith.constant 3.200000e+01 : f32
    %17 = vector.broadcast %cst_11 : f32 to vector<128x1xf32>
    %18 = arith.divf %16, %17 : vector<128x1xf32>
    %19 = vector.broadcast %18 : vector<128x1xf32> to vector<128x32xf32>
    %20 = arith.subf %1, %19 : vector<128x32xf32>
    %21 = arith.mulf %20, %20 : vector<128x32xf32>
    %cst_12 = arith.constant dense<0.000000e+00> : vector<128xf32>
    %22 = vector.multi_reduction <add>, %21, %cst_12 [1] : vector<128x32xf32> to vector<128xf32>
    %23 = vector.shape_cast %22 : vector<128xf32> to vector<128x1xf32>
    %cst_13 = arith.constant 3.200000e+01 : f32
    %24 = vector.broadcast %cst_13 : f32 to vector<128x1xf32>
    %25 = arith.divf %23, %24 : vector<128x1xf32>
    %26 = vector.broadcast %18 : vector<128x1xf32> to vector<128x32xf32>
    %27 = arith.subf %1, %26 : vector<128x32xf32>
    %cst_14 = arith.constant 9.99999974E-6 : f32
    %28 = vector.broadcast %cst_14 : f32 to vector<128x1xf32>
    %29 = arith.addf %25, %28 : vector<128x1xf32>
    %30 = math.rsqrt %29 : vector<128x1xf32>
    %31 = vector.broadcast %30 : vector<128x1xf32> to vector<128x32xf32>
    %32 = arith.mulf %27, %31 : vector<128x32xf32>
    %33 = vector.shape_cast %4 : vector<32xf32> to vector<1x32xf32>
    %34 = vector.broadcast %33 : vector<1x32xf32> to vector<128x32xf32>
    %35 = arith.mulf %32, %34 : vector<128x32xf32>
    %36 = vector.shape_cast %6 : vector<32xf32> to vector<1x32xf32>
    %37 = vector.broadcast %36 : vector<1x32xf32> to vector<128x32xf32>
    %38 = arith.addf %35, %37 : vector<128x32xf32>
    %c0_15 = arith.constant 0 : index
    %c0_16 = arith.constant 0 : index
    %39 = vector.load %arg4[%c0_15, %c0_16] : memref<32x96xf32, #tpu.memory_space<vmem>>, vector<32x96xf32>
    %cst_17 = arith.constant dense<0.000000e+00> : vector<128x96xf32>
    %40 = tpu.matmul %38, %39, %cst_17 {dimension_numbers = #tpu.dot_dimension_numbers<[1], [0], [0], [1], [0, 0, 1, 1], [], []>} : vector<128x32xf32>, vector<32x96xf32>, vector<128x96xf32> -> vector<128x96xf32>
    %c0_18 = arith.constant 0 : index
    %c0_19 = arith.constant 0 : index
    %41 = vector.load %arg5[%c0_18, %c0_19] : memref<1x96xf32, #tpu.memory_space<vmem>>, vector<1x96xf32>
    %42 = vector.broadcast %41 : vector<1x96xf32> to vector<128x96xf32>
    %43 = arith.addf %40, %42 : vector<128x96xf32>
    %44 = vector.shape_cast %43 : vector<128x96xf32> to vector<2x64x96xf32>
    %45 = vector.extract_strided_slice %44 {offsets = [0, 0, 0], sizes = [2, 64, 16], strides = [1, 1, 1]} : vector<2x64x96xf32> to vector<2x64x16xf32>
    %46 = vector.extract_strided_slice %44 {offsets = [0, 0, 32], sizes = [2, 64, 16], strides = [1, 1, 1]} : vector<2x64x96xf32> to vector<2x64x16xf32>
    %47 = vector.extract_strided_slice %44 {offsets = [0, 0, 64], sizes = [2, 64, 16], strides = [1, 1, 1]} : vector<2x64x96xf32> to vector<2x64x16xf32>
    %c0_20 = arith.constant 0 : index
    %c0_21 = arith.constant 0 : index
    %c0_22 = arith.constant 0 : index
    %48 = vector.load %arg6[%c0_20, %c0_21, %c0_22] : memref<2x16x64xf32, #tpu.memory_space<vmem>>, vector<1x16x64xf32>
    %49 = vector.shape_cast %48 : vector<1x16x64xf32> to vector<16x64xf32>
    %50 = vector.shape_cast %2 : vector<2x64xf32> to vector<2x1x64xf32>
    %51 = vector.shape_cast %49 : vector<16x64xf32> to vector<1x16x64xf32>
    %52 = vector.broadcast %51 : vector<1x16x64xf32> to vector<2x16x64xf32>
    %53 = vector.broadcast %50 : vector<2x1x64xf32> to vector<2x16x64xf32>
    %54 = arith.mulf %52, %53 : vector<2x16x64xf32>
    "tpu.trace_start"() <{level = 10 : i32, message = "bsd,bks->bdk"}> : () -> ()
    %cst_23 = arith.constant dense<0.000000e+00> : vector<2x16x16xf32>
    %55 = tpu.matmul %46, %54, %cst_23 {dimension_numbers = #tpu.dot_dimension_numbers<[1], [2], [2], [1], [0, 0, 0, 2, 1, 1], [0], [0]>} : vector<2x64x16xf32>, vector<2x16x64xf32>, vector<2x16x16xf32> -> vector<2x16x16xf32>
    %cst_24 = arith.constant dense<0.000000e+00> : vector<2x16x16xf32>
    %56 = tpu.matmul %47, %54, %cst_24 {dimension_numbers = #tpu.dot_dimension_numbers<[1], [2], [2], [1], [0, 0, 0, 2, 1, 1], [0], [0]>} : vector<2x64x16xf32>, vector<2x16x64xf32>, vector<2x16x16xf32> -> vector<2x16x16xf32>
    "tpu.trace_stop"() : () -> ()
    "tpu.trace_start"() <{level = 10 : i32, message = "bsd,bdk->bsk"}> : () -> ()
    %cst_25 = arith.constant dense<0.000000e+00> : vector<2x64x16xf32>
    %57 = tpu.matmul %45, %55, %cst_25 {dimension_numbers = #tpu.dot_dimension_numbers<[2], [1], [1], [2], [0, 0, 0, 1, 1, 2], [0], [0]>} : vector<2x64x16xf32>, vector<2x16x16xf32>, vector<2x64x16xf32> -> vector<2x64x16xf32>
    "tpu.trace_stop"() : () -> ()
    %cst_26 = arith.constant dense<0xFF800000> : vector<2x64xf32>
    %58 = vector.multi_reduction <maximumf>, %57, %cst_26 [2] : vector<2x64x16xf32> to vector<2x64xf32>
    %59 = vector.shape_cast %58 : vector<2x64xf32> to vector<2x64x1xf32>
    %60 = vector.broadcast %59 : vector<2x64x1xf32> to vector<2x64x16xf32>
    %61 = arith.subf %57, %60 : vector<2x64x16xf32>
    %62 = math.exp %61 : vector<2x64x16xf32>
    %cst_27 = arith.constant dense<0.000000e+00> : vector<2x64xf32>
    %63 = vector.multi_reduction <add>, %62, %cst_27 [2] : vector<2x64x16xf32> to vector<2x64xf32>
    %64 = vector.shape_cast %63 : vector<2x64xf32> to vector<2x64x1xf32>
    %65 = vector.broadcast %64 : vector<2x64x1xf32> to vector<2x64x16xf32>
    %66 = arith.divf %62, %65 : vector<2x64x16xf32>
    "tpu.trace_start"() <{level = 10 : i32, message = "bsk,bdk->bsd"}> : () -> ()
    %cst_28 = arith.constant dense<0.000000e+00> : vector<2x64x16xf32>
    %67 = tpu.matmul %66, %56, %cst_28 {dimension_numbers = #tpu.dot_dimension_numbers<[2], [2], [1], [1], [0, 0, 0, 1, 1, 1], [0], [0]>} : vector<2x64x16xf32>, vector<2x16x16xf32>, vector<2x64x16xf32> -> vector<2x64x16xf32>
    "tpu.trace_stop"() : () -> ()
    %68 = vector.extract_strided_slice %44 {offsets = [0, 0, 16], sizes = [2, 64, 16], strides = [1, 1, 1]} : vector<2x64x96xf32> to vector<2x64x16xf32>
    %69 = vector.extract_strided_slice %44 {offsets = [0, 0, 48], sizes = [2, 64, 16], strides = [1, 1, 1]} : vector<2x64x96xf32> to vector<2x64x16xf32>
    %70 = vector.extract_strided_slice %44 {offsets = [0, 0, 80], sizes = [2, 64, 16], strides = [1, 1, 1]} : vector<2x64x96xf32> to vector<2x64x16xf32>
    %c1_29 = arith.constant 1 : index
    %c0_30 = arith.constant 0 : index
    %c0_31 = arith.constant 0 : index
    %71 = vector.load %arg6[%c1_29, %c0_30, %c0_31] : memref<2x16x64xf32, #tpu.memory_space<vmem>>, vector<1x16x64xf32>
    %72 = vector.shape_cast %71 : vector<1x16x64xf32> to vector<16x64xf32>
    %73 = vector.shape_cast %2 : vector<2x64xf32> to vector<2x1x64xf32>
    %74 = vector.shape_cast %72 : vector<16x64xf32> to vector<1x16x64xf32>
    %75 = vector.broadcast %74 : vector<1x16x64xf32> to vector<2x16x64xf32>
    %76 = vector.broadcast %73 : vector<2x1x64xf32> to vector<2x16x64xf32>
    %77 = arith.mulf %75, %76 : vector<2x16x64xf32>
    "tpu.trace_start"() <{level = 10 : i32, message = "bsd,bks->bdk"}> : () -> ()
    %cst_32 = arith.constant dense<0.000000e+00> : vector<2x16x16xf32>
    %78 = tpu.matmul %69, %77, %cst_32 {dimension_numbers = #tpu.dot_dimension_numbers<[1], [2], [2], [1], [0, 0, 0, 2, 1, 1], [0], [0]>} : vector<2x64x16xf32>, vector<2x16x64xf32>, vector<2x16x16xf32> -> vector<2x16x16xf32>
    %cst_33 = arith.constant dense<0.000000e+00> : vector<2x16x16xf32>
    %79 = tpu.matmul %70, %77, %cst_33 {dimension_numbers = #tpu.dot_dimension_numbers<[1], [2], [2], [1], [0, 0, 0, 2, 1, 1], [0], [0]>} : vector<2x64x16xf32>, vector<2x16x64xf32>, vector<2x16x16xf32> -> vector<2x16x16xf32>
    "tpu.trace_stop"() : () -> ()
    "tpu.trace_start"() <{level = 10 : i32, message = "bsd,bdk->bsk"}> : () -> ()
    %cst_34 = arith.constant dense<0.000000e+00> : vector<2x64x16xf32>
    %80 = tpu.matmul %68, %78, %cst_34 {dimension_numbers = #tpu.dot_dimension_numbers<[2], [1], [1], [2], [0, 0, 0, 1, 1, 2], [0], [0]>} : vector<2x64x16xf32>, vector<2x16x16xf32>, vector<2x64x16xf32> -> vector<2x64x16xf32>
    "tpu.trace_stop"() : () -> ()
    %cst_35 = arith.constant dense<0xFF800000> : vector<2x64xf32>
    %81 = vector.multi_reduction <maximumf>, %80, %cst_35 [2] : vector<2x64x16xf32> to vector<2x64xf32>
    %82 = vector.shape_cast %81 : vector<2x64xf32> to vector<2x64x1xf32>
    %83 = vector.broadcast %82 : vector<2x64x1xf32> to vector<2x64x16xf32>
    %84 = arith.subf %80, %83 : vector<2x64x16xf32>
    %85 = math.exp %84 : vector<2x64x16xf32>
    %cst_36 = arith.constant dense<0.000000e+00> : vector<2x64xf32>
    %86 = vector.multi_reduction <add>, %85, %cst_36 [2] : vector<2x64x16xf32> to vector<2x64xf32>
    %87 = vector.shape_cast %86 : vector<2x64xf32> to vector<2x64x1xf32>
    %88 = vector.broadcast %87 : vector<2x64x1xf32> to vector<2x64x16xf32>
    %89 = arith.divf %85, %88 : vector<2x64x16xf32>
    "tpu.trace_start"() <{level = 10 : i32, message = "bsk,bdk->bsd"}> : () -> ()
    %cst_37 = arith.constant dense<0.000000e+00> : vector<2x64x16xf32>
    %90 = tpu.matmul %89, %79, %cst_37 {dimension_numbers = #tpu.dot_dimension_numbers<[2], [2], [1], [1], [0, 0, 0, 1, 1, 1], [0], [0]>} : vector<2x64x16xf32>, vector<2x16x16xf32>, vector<2x64x16xf32> -> vector<2x64x16xf32>
    "tpu.trace_stop"() : () -> ()
    %91 = tpu.concatenate %67, %90 in 2 : vector<2x64x16xf32>, vector<2x64x16xf32> -> vector<2x64x32xf32>
    %92 = vector.shape_cast %91 : vector<2x64x32xf32> to vector<128x32xf32>
    %c0_38 = arith.constant 0 : index
    %c0_39 = arith.constant 0 : index
    %93 = vector.load %arg7[%c0_38, %c0_39] : memref<32x32xf32, #tpu.memory_space<vmem>>, vector<32x32xf32>
    %cst_40 = arith.constant dense<0.000000e+00> : vector<128x32xf32>
    %94 = tpu.matmul %92, %93, %cst_40 {dimension_numbers = #tpu.dot_dimension_numbers<[1], [0], [0], [1], [0, 0, 1, 1], [], []>} : vector<128x32xf32>, vector<32x32xf32>, vector<128x32xf32> -> vector<128x32xf32>
    %95 = vector.shape_cast %12 : vector<32xf32> to vector<1x32xf32>
    %96 = vector.broadcast %95 : vector<1x32xf32> to vector<128x32xf32>
    %97 = arith.addf %94, %96 : vector<128x32xf32>
    %98 = arith.addf %97, %1 : vector<128x32xf32>
    %cst_41 = arith.constant dense<0.000000e+00> : vector<128xf32>
    %99 = vector.multi_reduction <add>, %98, %cst_41 [1] : vector<128x32xf32> to vector<128xf32>
    %100 = vector.shape_cast %99 : vector<128xf32> to vector<128x1xf32>
    %cst_42 = arith.constant 3.200000e+01 : f32
    %101 = vector.broadcast %cst_42 : f32 to vector<128x1xf32>
    %102 = arith.divf %100, %101 : vector<128x1xf32>
    %103 = vector.broadcast %102 : vector<128x1xf32> to vector<128x32xf32>
    %104 = arith.subf %98, %103 : vector<128x32xf32>
    %105 = arith.mulf %104, %104 : vector<128x32xf32>
    %cst_43 = arith.constant dense<0.000000e+00> : vector<128xf32>
    %106 = vector.multi_reduction <add>, %105, %cst_43 [1] : vector<128x32xf32> to vector<128xf32>
    %107 = vector.shape_cast %106 : vector<128xf32> to vector<128x1xf32>
    %cst_44 = arith.constant 3.200000e+01 : f32
    %108 = vector.broadcast %cst_44 : f32 to vector<128x1xf32>
    %109 = arith.divf %107, %108 : vector<128x1xf32>
    %110 = vector.broadcast %102 : vector<128x1xf32> to vector<128x32xf32>
    %111 = arith.subf %98, %110 : vector<128x32xf32>
    %cst_45 = arith.constant 9.99999974E-6 : f32
    %112 = vector.broadcast %cst_45 : f32 to vector<128x1xf32>
    %113 = arith.addf %109, %112 : vector<128x1xf32>
    %114 = math.rsqrt %113 : vector<128x1xf32>
    %115 = vector.broadcast %114 : vector<128x1xf32> to vector<128x32xf32>
    %116 = arith.mulf %111, %115 : vector<128x32xf32>
    %117 = vector.shape_cast %8 : vector<32xf32> to vector<1x32xf32>
    %118 = vector.broadcast %117 : vector<1x32xf32> to vector<128x32xf32>
    %119 = arith.mulf %116, %118 : vector<128x32xf32>
    %120 = vector.shape_cast %10 : vector<32xf32> to vector<1x32xf32>
    %121 = vector.broadcast %120 : vector<1x32xf32> to vector<128x32xf32>
    %122 = arith.addf %119, %121 : vector<128x32xf32>
    %c0_46 = arith.constant 0 : index
    %c0_47 = arith.constant 0 : index
    %123 = vector.load %arg8[%c0_46, %c0_47] : memref<32x64xf32, #tpu.memory_space<vmem>>, vector<32x64xf32>
    %cst_48 = arith.constant dense<0.000000e+00> : vector<128x64xf32>
    %124 = tpu.matmul %122, %123, %cst_48 {dimension_numbers = #tpu.dot_dimension_numbers<[1], [0], [0], [1], [0, 0, 1, 1], [], []>} : vector<128x32xf32>, vector<32x64xf32>, vector<128x64xf32> -> vector<128x64xf32>
    %c0_49 = arith.constant 0 : index
    %c0_50 = arith.constant 0 : index
    %125 = vector.load %arg9[%c0_49, %c0_50] : memref<1x64xf32, #tpu.memory_space<vmem>>, vector<1x64xf32>
    %126 = vector.broadcast %125 : vector<1x64xf32> to vector<128x64xf32>
    %127 = arith.addf %124, %126 : vector<128x64xf32>
    %cst_51 = arith.constant 5.000000e-01 : f32
    %128 = vector.broadcast %cst_51 : f32 to vector<128x64xf32>
    %129 = arith.mulf %128, %127 : vector<128x64xf32>
    %cst_52 = arith.constant 0.707106769 : f32
    %130 = vector.broadcast %cst_52 : f32 to vector<128x64xf32>
    %131 = arith.mulf %127, %130 : vector<128x64xf32>
    %132 = math.erf %131 : vector<128x64xf32>
    %cst_53 = arith.constant 1.000000e+00 : f32
    %133 = vector.broadcast %cst_53 : f32 to vector<128x64xf32>
    %134 = arith.addf %133, %132 : vector<128x64xf32>
    %135 = arith.mulf %129, %134 : vector<128x64xf32>
    %c0_54 = arith.constant 0 : index
    %c0_55 = arith.constant 0 : index
    %136 = vector.load %arg10[%c0_54, %c0_55] : memref<64x32xf32, #tpu.memory_space<vmem>>, vector<64x32xf32>
    %cst_56 = arith.constant dense<0.000000e+00> : vector<128x32xf32>
    %137 = tpu.matmul %135, %136, %cst_56 {dimension_numbers = #tpu.dot_dimension_numbers<[1], [0], [0], [1], [0, 0, 1, 1], [], []>} : vector<128x64xf32>, vector<64x32xf32>, vector<128x32xf32> -> vector<128x32xf32>
    %138 = vector.shape_cast %14 : vector<32xf32> to vector<1x32xf32>
    %139 = vector.broadcast %138 : vector<1x32xf32> to vector<128x32xf32>
    %140 = arith.addf %137, %139 : vector<128x32xf32>
    %141 = arith.addf %140, %98 : vector<128x32xf32>
    %142 = vector.shape_cast %141 : vector<128x32xf32> to vector<2x64x32xf32>
    %c0_57 = arith.constant 0 : index
    %c0_58 = arith.constant 0 : index
    %c0_59 = arith.constant 0 : index
    %143 = vector.load %arg11[%c0_57, %c0_58, %c0_59] : memref<2x64x32xf32, #tpu.memory_space<vmem>>, vector<2x64x32xf32>
    tpu.vector_store %arg11[%c0_57, %c0_58, %c0_59], %142 {strides = array<i32>} : memref<2x64x32xf32, #tpu.memory_space<vmem>>, vector<2x64x32xf32>,
    return
  }
  func.func @transform_0(%arg0: i32) -> (i32, i32, i32) {
    %c0_i32 = arith.constant 0 : i32
    %c0_i32_0 = arith.constant 0 : i32
    %c0_i32_1 = arith.constant 0 : i32
    return %arg0, %c0_i32, %c0_i32_0 : i32, i32, i32
  }
  func.func @transform_1(%arg0: i32) -> (i32, i32) {
    %c0_i32 = arith.constant 0 : i32
    %c0_i32_0 = arith.constant 0 : i32
    return %arg0, %c0_i32 : i32, i32
  }
  func.func @transform_2(%arg0: i32) -> (i32, i32) {
    %c0_i32 = arith.constant 0 : i32
    %c0_i32_0 = arith.constant 0 : i32
    %c0_i32_1 = arith.constant 0 : i32
    return %c0_i32, %c0_i32_0 : i32, i32
  }
  func.func @transform_3(%arg0: i32) -> (i32, i32) {
    %c0_i32 = arith.constant 0 : i32
    %c0_i32_0 = arith.constant 0 : i32
    %c0_i32_1 = arith.constant 0 : i32
    return %c0_i32, %c0_i32_0 : i32, i32
  }
  func.func @transform_4(%arg0: i32) -> (i32, i32) {
    %c0_i32 = arith.constant 0 : i32
    %c0_i32_0 = arith.constant 0 : i32
    %c0_i32_1 = arith.constant 0 : i32
    return %c0_i32, %c0_i32_0 : i32, i32
  }
  func.func @transform_5(%arg0: i32) -> (i32, i32, i32) {
    %c0_i32 = arith.constant 0 : i32
    %c0_i32_0 = arith.constant 0 : i32
    %c0_i32_1 = arith.constant 0 : i32
    %c0_i32_2 = arith.constant 0 : i32
    return %c0_i32, %c0_i32_0, %c0_i32_1 : i32, i32, i32
  }
  func.func @transform_6(%arg0: i32) -> (i32, i32) {
    %c0_i32 = arith.constant 0 : i32
    %c0_i32_0 = arith.constant 0 : i32
    %c0_i32_1 = arith.constant 0 : i32
    return %c0_i32, %c0_i32_0 : i32, i32
  }
  func.func @transform_7(%arg0: i32) -> (i32, i32) {
    %c0_i32 = arith.constant 0 : i32
    %c0_i32_0 = arith.constant 0 : i32
    %c0_i32_1 = arith.constant 0 : i32
    return %c0_i32, %c0_i32_0 : i32, i32
  }
  func.func @transform_8(%arg0: i32) -> (i32, i32) {
    %c0_i32 = arith.constant 0 : i32
    %c0_i32_0 = arith.constant 0 : i32
    %c0_i32_1 = arith.constant 0 : i32
    return %c0_i32, %c0_i32_0 : i32, i32
  }
  func.func @transform_9(%arg0: i32) -> (i32, i32) {
    %c0_i32 = arith.constant 0 : i32
    %c0_i32_0 = arith.constant 0 : i32
    %c0_i32_1 = arith.constant 0 : i32
    return %c0_i32, %c0_i32_0 : i32, i32
  }
  func.func @transform_10(%arg0: i32) -> (i32, i32, i32) {
    %c0_i32 = arith.constant 0 : i32
    %c0_i32_0 = arith.constant 0 : i32
    %c0_i32_1 = arith.constant 0 : i32
    return %arg0, %c0_i32, %c0_i32_0 : i32, i32, i32
  }
}

</mosaic_0001>

<llo_original>
// kernel: tpu_custom_call.1
$region0: #{tpu_custom_call.1}
  #allocation0 [shape = 'u32[]', space=smem, size = 0x4, offset = 0x4, fixed_abs, tag = 'smem constant byte address 0x4 - core index']
  #allocation1 [shape = 'u32[144,128]{1,0:T(1,128)}', space=vmem, size = 0x12000, scoped, tag = 'internal scratch']
  %s0 = inlined_call_operand.vmem [shape: f32[2,64,32], index: 0, kind: input, shape index: {}]
  %s1 = inlined_call_operand.vmem [shape: f32[2,64], index: 1, kind: input, shape index: {}]
  %s2 = inlined_call_operand.vmem [shape: f32[6,32], index: 2, kind: input, shape index: {}]
  %s3 = inlined_call_operand.vmem [shape: f32[32,96], index: 3, kind: input, shape index: {}]
  %s4 = inlined_call_operand.vmem [shape: f32[1,96], index: 4, kind: input, shape index: {}]
  %s5 = inlined_call_operand.vmem [shape: f32[2,16,64], index: 5, kind: input, shape index: {}]
  %s6 = inlined_call_operand.vmem [shape: f32[32,32], index: 6, kind: input, shape index: {}]
  %s7 = inlined_call_operand.vmem [shape: f32[32,64], index: 7, kind: input, shape index: {}]
  %s8 = inlined_call_operand.vmem [shape: f32[1,64], index: 8, kind: input, shape index: {}]
  %s9 = inlined_call_operand.vmem [shape: f32[64,32], index: 9, kind: input, shape index: {}]
  %s10 = inlined_call_operand.vmem [shape: f32[2,64,32], index: 10, kind: output, shape index: {}]
  %s11 = sld [smem:[#allocation0]]
  $region50: #{tpu_custom_call.1} parent=0
    _
  %s13 = ssub.s32 1, %s11
  %s14 = scalar_select 0, %s13, %s11
  // Predicated region
  $region2: #{tpu_custom_call.1} parent=0 // pred_check
    _
  $region3: #{tpu_custom_call.1} parent=0 // pred_check_branch
    %16 = sbr.rel (0) target = $region5
  $region4: #{tpu_custom_call.1} parent=0 // pred_region
    _
  $region5: #{tpu_custom_call.1} parent=0 // pred_fallthru
    _
  // Predicated region
  $region6: #{tpu_custom_call.1} parent=0 // pred_check
    _
  $region7: #{tpu_custom_call.1} parent=0 // pred_check_branch
    %18 = sbr.rel (0) target = $region9
  $region8: #{tpu_custom_call.1} parent=0 // pred_region
    _
  $region9: #{tpu_custom_call.1} parent=0 // pred_fallthru
    _
  // Predicated region
  $region10: #{tpu_custom_call.1} parent=0 // pred_check
    _
  $region11: #{tpu_custom_call.1} parent=0 // pred_check_branch
    %20 = sbr.rel (0) target = $region13
  $region12: #{tpu_custom_call.1} parent=0 // pred_region
    _
  $region13: #{tpu_custom_call.1} parent=0 // pred_fallthru
    _
  // Predicated region
  $region14: #{tpu_custom_call.1} parent=0 // pred_check
    _
  $region15: #{tpu_custom_call.1} parent=0 // pred_check_branch
    %22 = sbr.rel (0) target = $region17
  $region16: #{tpu_custom_call.1} parent=0 // pred_region
    _
  $region17: #{tpu_custom_call.1} parent=0 // pred_fallthru
    _
  // Predicated region
  $region18: #{tpu_custom_call.1} parent=0 // pred_check
    _
  $region19: #{tpu_custom_call.1} parent=0 // pred_check_branch
    %24 = sbr.rel (0) target = $region21
  $region20: #{tpu_custom_call.1} parent=0 // pred_region
    _
  $region21: #{tpu_custom_call.1} parent=0 // pred_fallthru
    _
  // Predicated region
  $region22: #{tpu_custom_call.1} parent=0 // pred_check
    _
  $region23: #{tpu_custom_call.1} parent=0 // pred_check_branch
    %26 = sbr.rel (0) target = $region25
  $region24: #{tpu_custom_call.1} parent=0 // pred_region
    _
  $region25: #{tpu_custom_call.1} parent=0 // pred_fallthru
    _
  // Predicated region
  $region26: #{tpu_custom_call.1} parent=0 // pred_check
    _
  $region27: #{tpu_custom_call.1} parent=0 // pred_check_branch
    %28 = sbr.rel (0) target = $region29
  $region28: #{tpu_custom_call.1} parent=0 // pred_region
    _
  $region29: #{tpu_custom_call.1} parent=0 // pred_fallthru
    _
  // Predicated region
  $region30: #{tpu_custom_call.1} parent=0 // pred_check
    _
  $region31: #{tpu_custom_call.1} parent=0 // pred_check_branch
    %30 = sbr.rel (0) target = $region33
  $region32: #{tpu_custom_call.1} parent=0 // pred_region
    _
  $region33: #{tpu_custom_call.1} parent=0 // pred_fallthru
    _
  // Predicated region
  $region34: #{tpu_custom_call.1} parent=0 // pred_check
    _
  $region35: #{tpu_custom_call.1} parent=0 // pred_check_branch
    %32 = sbr.rel (0) target = $region37
  $region36: #{tpu_custom_call.1} parent=0 // pred_region
    _
  $region37: #{tpu_custom_call.1} parent=0 // pred_fallthru
    _
  // Predicated region
  $region38: #{tpu_custom_call.1} parent=0 // pred_check
    _
  $region39: #{tpu_custom_call.1} parent=0 // pred_check_branch
    %34 = sbr.rel (0) target = $region41
  $region40: #{tpu_custom_call.1} parent=0 // pred_region
    _
  $region41: #{tpu_custom_call.1} parent=0 // pred_fallthru
    _
  %v35 = vld [vmem:[%s0] sm:$0xff]
  %v36 = vld [vmem:[%s0 + $0x8] sm:$0xff]
  %v37 = vld [vmem:[%s0 + $0x10] sm:$0xff]
  %v38 = vld [vmem:[%s0 + $0x18] sm:$0xff]
  %v39 = vld [vmem:[%s0 + $0x20] sm:$0xff]
  %v40 = vld [vmem:[%s0 + $0x28] sm:$0xff]
  %v41 = vld [vmem:[%s0 + $0x30] sm:$0xff]
  %v42 = vld [vmem:[%s0 + $0x38] sm:$0xff]
  %v43 = vld [vmem:[%s0 + $0x40] sm:$0xff]
  %v44 = vld [vmem:[%s0 + $0x48] sm:$0xff]
  %v45 = vld [vmem:[%s0 + $0x50] sm:$0xff]
  %v46 = vld [vmem:[%s0 + $0x58] sm:$0xff]
  %v47 = vld [vmem:[%s0 + $0x60] sm:$0xff]
  %v48 = vld [vmem:[%s0 + $0x68] sm:$0xff]
  %v49 = vld [vmem:[%s0 + $0x70] sm:$0xff]
  %v50 = vld [vmem:[%s0 + $0x78] sm:$0xff]
  %v51 = vld [vmem:[%s1] sm:$0x3]
  %v52 = vld [vmem:[%s2] sm:$0x1]
  %v53 = vld [vmem:[%s2 + $0x1] sm:$0x1]
  %v54 = vld [vmem:[%s2 + $0x2] sm:$0x1]
  %v55 = vld [vmem:[%s2 + $0x3] sm:$0x1]
  %v56 = vld [vmem:[%s2 + $0x4] sm:$0x1]
  %v57 = vld [vmem:[%s2 + $0x5] sm:$0x1]
  %vm58 = vcmask 261120
  %v59 = vsel %vm58, %v35, 0.0
  %60 = vadd.xlane.f32.xlu0 %v59
  %v61 = vpop.xlane.xlu0 %60
  %v62 = vsel %vm58, %v36, 0.0
  %63 = vadd.xlane.f32.xlu0 %v62
  %v64 = vpop.xlane.xlu0 %63
  %v65 = vsel %vm58, %v37, 0.0
  %66 = vadd.xlane.f32.xlu0 %v65
  %v67 = vpop.xlane.xlu0 %66
  %v68 = vsel %vm58, %v38, 0.0
  %69 = vadd.xlane.f32.xlu0 %v68
  %v70 = vpop.xlane.xlu0 %69
  %v71 = vsel %vm58, %v39, 0.0
  %72 = vadd.xlane.f32.xlu0 %v71
  %v73 = vpop.xlane.xlu0 %72
  %v74 = vsel %vm58, %v40, 0.0
  %75 = vadd.xlane.f32.xlu0 %v74
  %v76 = vpop.xlane.xlu0 %75
  %v77 = vsel %vm58, %v41, 0.0
  %78 = vadd.xlane.f32.xlu0 %v77
  %v79 = vpop.xlane.xlu0 %78
  %v80 = vsel %vm58, %v42, 0.0
  %81 = vadd.xlane.f32.xlu0 %v80
  %v82 = vpop.xlane.xlu0 %81
  %v83 = vsel %vm58, %v43, 0.0
  %84 = vadd.xlane.f32.xlu0 %v83
  %v85 = vpop.xlane.xlu0 %84
  %v86 = vsel %vm58, %v44, 0.0
  %87 = vadd.xlane.f32.xlu0 %v86
  %v88 = vpop.xlane.xlu0 %87
  %v89 = vsel %vm58, %v45, 0.0
  %90 = vadd.xlane.f32.xlu0 %v89
  %v91 = vpop.xlane.xlu0 %90
  %v92 = vsel %vm58, %v46, 0.0
  %93 = vadd.xlane.f32.xlu0 %v92
  %v94 = vpop.xlane.xlu0 %93
  %v95 = vsel %vm58, %v47, 0.0
  %96 = vadd.xlane.f32.xlu0 %v95
  %v97 = vpop.xlane.xlu0 %96
  %v98 = vsel %vm58, %v48, 0.0
  %99 = vadd.xlane.f32.xlu0 %v98
  %v100 = vpop.xlane.xlu0 %99
  %v101 = vsel %vm58, %v49, 0.0
  %102 = vadd.xlane.f32.xlu0 %v101
  %v103 = vpop.xlane.xlu0 %102
  %v104 = vsel %vm58, %v50, 0.0
  %105 = vadd.xlane.f32.xlu0 %v104
  %v106 = vpop.xlane.xlu0 %105
  %v107 = vrcp.pop 32.0
  %v108 = vmul.f32 %v61, %v107
  %v109 = vmul.f32 %v64, %v107
  %v110 = vmul.f32 %v67, %v107
  %v111 = vmul.f32 %v70, %v107
  %v112 = vmul.f32 %v73, %v107
  %v113 = vmul.f32 %v76, %v107
  %v114 = vmul.f32 %v79, %v107
  %v115 = vmul.f32 %v82, %v107
  %v116 = vmul.f32 %v85, %v107
  %v117 = vmul.f32 %v88, %v107
  %v118 = vmul.f32 %v91, %v107
  %v119 = vmul.f32 %v94, %v107
  %v120 = vmul.f32 %v97, %v107
  %v121 = vmul.f32 %v100, %v107
  %v122 = vmul.f32 %v103, %v107
  %v123 = vmul.f32 %v106, %v107
  %v124 = vsub.f32 %v35, %v108
  %v125 = vsub.f32 %v36, %v109
  %v126 = vsub.f32 %v37, %v110
  %v127 = vsub.f32 %v38, %v111
  %v128 = vsub.f32 %v39, %v112
  %v129 = vsub.f32 %v40, %v113
  %v130 = vsub.f32 %v41, %v114
  %v131 = vsub.f32 %v42, %v115
  %v132 = vsub.f32 %v43, %v116
  %v133 = vsub.f32 %v44, %v117
  %v134 = vsub.f32 %v45, %v118
  %v135 = vsub.f32 %v46, %v119
  %v136 = vsub.f32 %v47, %v120
  %v137 = vsub.f32 %v48, %v121
  %v138 = vsub.f32 %v49, %v122
  %v139 = vsub.f32 %v50, %v123
  %v140 = vmul.f32 %v124, %v124
  %v141 = vmul.f32 %v125, %v125
  %v142 = vmul.f32 %v126, %v126
  %v143 = vmul.f32 %v127, %v127
  %v144 = vmul.f32 %v128, %v128
  %v145 = vmul.f32 %v129, %v129
  %v146 = vmul.f32 %v130, %v130
  %v147 = vmul.f32 %v131, %v131
  %v148 = vmul.f32 %v132, %v132
  %v149 = vmul.f32 %v133, %v133
  %v150 = vmul.f32 %v134, %v134
  %v151 = vmul.f32 %v135, %v135
  %v152 = vmul.f32 %v136, %v136
  %v153 = vmul.f32 %v137, %v137
  %v154 = vmul.f32 %v138, %v138
  %v155 = vmul.f32 %v139, %v139
  %v156 = vsel %vm58, %v140, 0.0
  %157 = vadd.xlane.f32.xlu0 %v156
  %v158 = vpop.xlane.xlu0 %157
  %v159 = vsel %vm58, %v141, 0.0
  %160 = vadd.xlane.f32.xlu0 %v159
  %v161 = vpop.xlane.xlu0 %160
  %v162 = vsel %vm58, %v142, 0.0
  %163 = vadd.xlane.f32.xlu0 %v162
  %v164 = vpop.xlane.xlu0 %163
  %v165 = vsel %vm58, %v143, 0.0
  %166 = vadd.xlane.f32.xlu0 %v165
  %v167 = vpop.xlane.xlu0 %166
  %v168 = vsel %vm58, %v144, 0.0
  %169 = vadd.xlane.f32.xlu0 %v168
  %v170 = vpop.xlane.xlu0 %169
  %v171 = vsel %vm58, %v145, 0.0
  %172 = vadd.xlane.f32.xlu0 %v171
  %v173 = vpop.xlane.xlu0 %172
  %v174 = vsel %vm58, %v146, 0.0
  %175 = vadd.xlane.f32.xlu0 %v174
  %v176 = vpop.xlane.xlu0 %175
  %v177 = vsel %vm58, %v147, 0.0
  %178 = vadd.xlane.f32.xlu0 %v177
  %v179 = vpop.xlane.xlu0 %178
  %v180 = vsel %vm58, %v148, 0.0
  %181 = vadd.xlane.f32.xlu0 %v180
  %v182 = vpop.xlane.xlu0 %181
  %v183 = vsel %vm58, %v149, 0.0
  %184 = vadd.xlane.f32.xlu0 %v183
  %v185 = vpop.xlane.xlu0 %184
  %v186 = vsel %vm58, %v150, 0.0
  %187 = vadd.xlane.f32.xlu0 %v186
  %v188 = vpop.xlane.xlu0 %187
  %v189 = vsel %vm58, %v151, 0.0
  %190 = vadd.xlane.f32.xlu0 %v189
  %v191 = vpop.xlane.xlu0 %190
  %v192 = vsel %vm58, %v152, 0.0
  %193 = vadd.xlane.f32.xlu0 %v192
  %v194 = vpop.xlane.xlu0 %193
  %v195 = vsel %vm58, %v153, 0.0
  %196 = vadd.xlane.f32.xlu0 %v195
  %v197 = vpop.xlane.xlu0 %196
  %v198 = vsel %vm58, %v154, 0.0
  %199 = vadd.xlane.f32.xlu0 %v198
  %v200 = vpop.xlane.xlu0 %199
  %v201 = vsel %vm58, %v155, 0.0
  %202 = vadd.xlane.f32.xlu0 %v201
  %v203 = vpop.xlane.xlu0 %202
  %v204 = vmul.f32 %v158, %v107
  %v205 = vmul.f32 %v161, %v107
  %v206 = vmul.f32 %v164, %v107
  %v207 = vmul.f32 %v167, %v107
  %v208 = vmul.f32 %v170, %v107
  %v209 = vmul.f32 %v173, %v107
  %v210 = vmul.f32 %v176, %v107
  %v211 = vmul.f32 %v179, %v107
  %v212 = vmul.f32 %v182, %v107
  %v213 = vmul.f32 %v185, %v107
  %v214 = vmul.f32 %v188, %v107
  %v215 = vmul.f32 %v191, %v107
  %v216 = vmul.f32 %v194, %v107
  %v217 = vmul.f32 %v197, %v107
  %v218 = vmul.f32 %v200, %v107
  %v219 = vmul.f32 %v203, %v107
  %v220 = vadd.f32 %v204, 1e-05
  %v221 = vadd.f32 %v205, 1e-05
  %v222 = vadd.f32 %v206, 1e-05
  %v223 = vadd.f32 %v207, 1e-05
  %v224 = vadd.f32 %v208, 1e-05
  %v225 = vadd.f32 %v209, 1e-05
  %v226 = vadd.f32 %v210, 1e-05
  %v227 = vadd.f32 %v211, 1e-05
  %v228 = vadd.f32 %v212, 1e-05
  %v229 = vadd.f32 %v213, 1e-05
  %v230 = vadd.f32 %v214, 1e-05
  %v231 = vadd.f32 %v215, 1e-05
  %v232 = vadd.f32 %v216, 1e-05
  %v233 = vadd.f32 %v217, 1e-05
  %v234 = vadd.f32 %v218, 1e-05
  %v235 = vadd.f32 %v219, 1e-05
  %v236 = vrsqrt.pop %v220
  %v237 = vrsqrt.pop %v221
  %v238 = vrsqrt.pop %v222
  %v239 = vrsqrt.pop %v223
  %v240 = vrsqrt.pop %v224
  %v241 = vrsqrt.pop %v225
  %v242 = vrsqrt.pop %v226
  %v243 = vrsqrt.pop %v227
  %v244 = vrsqrt.pop %v228
  %v245 = vrsqrt.pop %v229
  %v246 = vrsqrt.pop %v230
  %v247 = vrsqrt.pop %v231
  %v248 = vrsqrt.pop %v232
  %v249 = vrsqrt.pop %v233
  %v250 = vrsqrt.pop %v234
  %v251 = vrsqrt.pop %v235
  %v252 = vmul.f32 %v124, %v236
  %v253 = vmul.f32 %v125, %v237
  %v254 = vmul.f32 %v126, %v238
  %v255 = vmul.f32 %v127, %v239
  %v256 = vmul.f32 %v128, %v240
  %v257 = vmul.f32 %v129, %v241
  %v258 = vmul.f32 %v130, %v242
  %v259 = vmul.f32 %v131, %v243
  %v260 = vmul.f32 %v132, %v244
  %v261 = vmul.f32 %v133, %v245
  %v262 = vmul.f32 %v134, %v246
  %v263 = vmul.f32 %v135, %v247
  %v264 = vmul.f32 %v136, %v248
  %v265 = vmul.f32 %v137, %v249
  %v266 = vmul.f32 %v138, %v250
  %v267 = vmul.f32 %v139, %v251
  %v268 = vlaneseq
  %v269 = vshrl.u32 %v268, 7
  %v270 = vsub.s32 0, %v269
  %v271 = vrot.slane %v52, %v270
  %v272 = vmul.f32 %v252, %v271
  %v273 = vmul.f32 %v253, %v271
  %v274 = vmul.f32 %v254, %v271
  %v275 = vmul.f32 %v255, %v271
  %v276 = vmul.f32 %v256, %v271
  %v277 = vmul.f32 %v257, %v271
  %v278 = vmul.f32 %v258, %v271
  %v279 = vmul.f32 %v259, %v271
  %v280 = vmul.f32 %v260, %v271
  %v281 = vmul.f32 %v261, %v271
  %v282 = vmul.f32 %v262, %v271
  %v283 = vmul.f32 %v263, %v271
  %v284 = vmul.f32 %v264, %v271
  %v285 = vmul.f32 %v265, %v271
  %v286 = vmul.f32 %v266, %v271
  %v287 = vmul.f32 %v267, %v271
  %v288 = vlaneseq
  %v289 = vshrl.u32 %v288, 7
  %v290 = vsub.s32 0, %v289
  %v291 = vrot.slane %v53, %v290
  %v292 = vadd.f32 %v272, %v291
  %v293 = vadd.f32 %v273, %v291
  %v294 = vadd.f32 %v274, %v291
  %v295 = vadd.f32 %v275, %v291
  %v296 = vadd.f32 %v276, %v291
  %v297 = vadd.f32 %v277, %v291
  %v298 = vadd.f32 %v278, %v291
  %v299 = vadd.f32 %v279, %v291
  %v300 = vadd.f32 %v280, %v291
  %v301 = vadd.f32 %v281, %v291
  %v302 = vadd.f32 %v282, %v291
  %v303 = vadd.f32 %v283, %v291
  %v304 = vadd.f32 %v284, %v291
  %v305 = vadd.f32 %v285, %v291
  %v306 = vadd.f32 %v286, %v291
  %v307 = vadd.f32 %v287, %v291
  %v308 = vld [vmem:[%s3] sm:$0xff]
  %v309 = vld [vmem:[%s3 + $0x8] sm:$0xff]
  %v310 = vld [vmem:[%s3 + $0x10] sm:$0xff]
  %v311 = vld [vmem:[%s3 + $0x18] sm:$0xff]
  %v312 = vld [vmem:[%s4] sm:$0x1]
  %v314 = vlaneseq
  %v315 = vshrl.u32 %v314, 7
  %v316 = vsub.s32 0, %v315
  %v317 = vrot.slane %v312, %v316
  %v320 = vsel %vm58, %v292, 0
  %v323 = vsel %vm58, %v293, 0
  %v326 = vsel %vm58, %v294, 0
  %v329 = vsel %vm58, %v295, 0
  %v332 = vsel %vm58, %v296, 0
  %v335 = vsel %vm58, %v297, 0
  %v338 = vsel %vm58, %v298, 0
  %v341 = vsel %vm58, %v299, 0
  %v344 = vsel %vm58, %v300, 0
  %v347 = vsel %vm58, %v301, 0
  %v350 = vsel %vm58, %v302, 0
  %v353 = vsel %vm58, %v303, 0
  %v356 = vsel %vm58, %v304, 0
  %v359 = vsel %vm58, %v305, 0
  %v362 = vsel %vm58, %v306, 0
  %v365 = vsel %vm58, %v307, 0
  %367 = vmatprep.subr.mxu0 0.0
  %368 = vmatpush1.msra.mxu0 0.0
  %369 = vmatprep.subr.mxu0 0.0
  %370 = vmatpush1.msra.mxu0 0.0
  %371 = vmatprep.subr.mxu0 0.0
  %372 = vmatpush1.msra.mxu0 0.0
  %373 = vmatprep.subr.mxu0 0.0
  %374 = vmatpush1.msra.mxu0 0.0
  %375 = vmatprep.subr.mxu0 0.0
  %376 = vmatpush1.msra.mxu0 0.0
  %377 = vmatprep.subr.mxu0 0.0
  %378 = vmatpush1.msra.mxu0 0.0
  %379 = vmatprep.subr.mxu0 0.0
  %380 = vmatpush1.msra.mxu0 0.0
  %381 = vmatprep.subr.mxu0 0.0
  %382 = vmatpush1.msra.mxu0 0.0
  %383 = vmatprep.subr.mxu0 0.0
  %384 = vmatpush1.msra.mxu0 0.0
  %385 = vmatprep.subr.mxu0 0.0
  %386 = vmatpush1.msra.mxu0 0.0
  %387 = vmatprep.subr.mxu0 0.0
  %388 = vmatpush1.msra.mxu0 0.0
  %389 = vmatprep.subr.mxu0 0.0
  %390 = vmatpush1.msra.mxu0 0.0
  %391 = vmatprep.subr.mxu0 0.0
  %392 = vmatpush1.msra.mxu0 %v311
  %393 = vmatprep.subr.mxu0 0.0
  %394 = vmatpush1.msra.mxu0 %v310
  %395 = vmatprep.subr.mxu0 0.0
  %396 = vmatpush1.msra.mxu0 %v309
  %397 = vmatprep.subr.mxu0 0.0
  %398 = vmatpush1.msra.mxu0 %v308
  %399 = vmatprep.subr.mxu0 0.0
  %400 = vmatpush2.msra.mxu0 0.0
  %401 = vmatprep.subr.mxu0 0.0
  %402 = vmatpush2.msra.mxu0 0.0
  %403 = vmatprep.subr.mxu0 0.0
  %404 = vmatpush2.msra.mxu0 0.0
  %405 = vmatprep.subr.mxu0 0.0
  %406 = vmatpush2.msra.mxu0 0.0
  %407 = vmatprep.subr.mxu0 0.0
  %408 = vmatpush2.msra.mxu0 0.0
  %409 = vmatprep.subr.mxu0 0.0
  %410 = vmatpush2.msra.mxu0 0.0
  %411 = vmatprep.subr.mxu0 0.0
  %412 = vmatpush2.msra.mxu0 0.0
  %413 = vmatprep.subr.mxu0 0.0
  %414 = vmatpush2.msra.mxu0 0.0
  %415 = vmatprep.subr.mxu0 0.0
  %416 = vmatpush2.msra.mxu0 0.0
  %417 = vmatprep.subr.mxu0 0.0
  %418 = vmatpush2.msra.mxu0 0.0
  %419 = vmatprep.subr.mxu0 0.0
  %420 = vmatpush2.msra.mxu0 0.0
  %421 = vmatprep.subr.mxu0 0.0
  %422 = vmatpush2.msra.mxu0 0.0
  %423 = vmatprep.subr.mxu0 0.0
  %424 = vmatpush2.msra.mxu0 0.0
  %425 = vmatprep.subr.mxu0 0.0
  %426 = vmatpush2.msra.mxu0 0.0
  %427 = vmatprep.subr.mxu0 0.0
  %428 = vmatpush2.msra.mxu0 0.0
  %429 = vmatprep.subr.mxu0 0.0
  %430 = vmatpush2.msra.mxu0 0.0
  %431 = vmatprep.mubr.f32.mxu0 0.0
  %432 = vmatmul.mubr.f32.gmra.mxu0 %v320
  %v433 = vpop.f32.mrf.mxu0
  %v434 = vadd.f32 %v317, %v433
  %v435 = vpop.f32.mrf.mxu0
  %436 = vmatprep.mubr.f32.mxu0 0.0
  %437 = vmatmul.mubr.f32.gmra.mxu0 %v323
  %v438 = vpop.f32.mrf.mxu0
  %v439 = vadd.f32 %v317, %v438
  %v440 = vpop.f32.mrf.mxu0
  %441 = vmatprep.mubr.f32.mxu0 0.0
  %442 = vmatmul.mubr.f32.gmra.mxu0 %v326
  %v443 = vpop.f32.mrf.mxu0
  %v444 = vadd.f32 %v317, %v443
  %v445 = vpop.f32.mrf.mxu0
  %446 = vmatprep.mubr.f32.mxu0 0.0
  %447 = vmatmul.mubr.f32.gmra.mxu0 %v329
  %v448 = vpop.f32.mrf.mxu0
  %v449 = vadd.f32 %v317, %v448
  %v450 = vpop.f32.mrf.mxu0
  %451 = vmatprep.mubr.f32.mxu0 0.0
  %452 = vmatmul.mubr.f32.gmra.mxu0 %v332
  %v453 = vpop.f32.mrf.mxu0
  %v454 = vadd.f32 %v317, %v453
  %v455 = vpop.f32.mrf.mxu0
  %456 = vmatprep.mubr.f32.mxu0 0.0
  %457 = vmatmul.mubr.f32.gmra.mxu0 %v335
  %v458 = vpop.f32.mrf.mxu0
  %v459 = vadd.f32 %v317, %v458
  %v460 = vpop.f32.mrf.mxu0
  %461 = vmatprep.mubr.f32.mxu0 0.0
  %462 = vmatmul.mubr.f32.gmra.mxu0 %v338
  %v463 = vpop.f32.mrf.mxu0
  %v464 = vadd.f32 %v317, %v463
  %v465 = vpop.f32.mrf.mxu0
  %466 = vmatprep.mubr.f32.mxu0 0.0
  %467 = vmatmul.mubr.f32.gmra.mxu0 %v341
  %v468 = vpop.f32.mrf.mxu0
  %v469 = vadd.f32 %v317, %v468
  %v470 = vpop.f32.mrf.mxu0
  %471 = vmatprep.mubr.f32.mxu0 0.0
  %472 = vmatmul.mubr.f32.gmra.mxu0 %v344
  %v473 = vpop.f32.mrf.mxu0
  %v474 = vadd.f32 %v317, %v473
  %v475 = vpop.f32.mrf.mxu0
  %476 = vmatprep.mubr.f32.mxu0 0.0
  %477 = vmatmul.mubr.f32.gmra.mxu0 %v347
  %v478 = vpop.f32.mrf.mxu0
  %v479 = vadd.f32 %v317, %v478
  %v480 = vpop.f32.mrf.mxu0
  %481 = vmatprep.mubr.f32.mxu0 0.0
  %482 = vmatmul.mubr.f32.gmra.mxu0 %v350
  %v483 = vpop.f32.mrf.mxu0
  %v484 = vadd.f32 %v317, %v483
  %v485 = vpop.f32.mrf.mxu0
  %486 = vmatprep.mubr.f32.mxu0 0.0
  %487 = vmatmul.mubr.f32.gmra.mxu0 %v353
  %v488 = vpop.f32.mrf.mxu0
  %v489 = vadd.f32 %v317, %v488
  %v490 = vpop.f32.mrf.mxu0
  %491 = vmatprep.mubr.f32.mxu0 0.0
  %492 = vmatmul.mubr.f32.gmra.mxu0 %v356
  %v493 = vpop.f32.mrf.mxu0
  %v494 = vadd.f32 %v317, %v493
  %v495 = vpop.f32.mrf.mxu0
  %496 = vmatprep.mubr.f32.mxu0 0.0
  %497 = vmatmul.mubr.f32.gmra.mxu0 %v359
  %v498 = vpop.f32.mrf.mxu0
  %v499 = vadd.f32 %v317, %v498
  %v500 = vpop.f32.mrf.mxu0
  %501 = vmatprep.mubr.f32.mxu0 0.0
  %502 = vmatmul.mubr.f32.gmra.mxu0 %v362
  %v503 = vpop.f32.mrf.mxu0
  %v504 = vadd.f32 %v317, %v503
  %v505 = vpop.f32.mrf.mxu0
  %506 = vmatprep.mubr.f32.mxu0 0.0
  %507 = vmatmul.mubr.f32.gmra.mxu0 %v365
  %v508 = vpop.f32.mrf.mxu0
  %v509 = vadd.f32 %v317, %v508
  %v510 = vpop.f32.mrf.mxu0
  %511 = vdwg.mxu0
  %v512 = vld [vmem:[%s5] sm:$0xff]
  %v513 = vld [vmem:[%s5 + $0x8] sm:$0xff]
  %v516 = vunpack.c.l.s4 1966171168
  %v517 = vunpack.c.0.s8 %v516
  %v518 = vlaneseq
  %v519 = vshrl.u32 %v518, 7
  %v520 = vsub.s32 %v517, %v519
  %v521 = vrot.slane %v51, %v520
  %v522 = vcombine.high %v521, %v521
  %v524 = vunpack.c.l.s4 1966171168
  %v525 = vunpack.c.0.s8 %v524
  %v526 = vlaneseq
  %v527 = vshrl.u32 %v526, 7
  %v528 = vsub.s32 %v525, %v527
  %v529 = vrot.slane %v521, %v528
  %v531 = vunpack.c.l.s4 1966171168
  %v532 = vunpack.c.0.s8 %v531
  %v533 = vlaneseq
  %v534 = vshrl.u32 %v533, 7
  %v535 = vsub.s32 %v532, %v534
  %v536 = vrot.slane %v522, %v535
  %v537 = vlaneseq
  %v538 = vshrl.u32 %v537, 7
  %v539 = vsub.s32 0, %v538
  %v540 = vrot.slane %v529, %v539
  %v541 = vlaneseq
  %v542 = vshrl.u32 %v541, 7
  %v543 = vsub.s32 0, %v542
  %v544 = vrot.slane %v536, %v543
  %v547 = vmul.f32 %v512, %v540
  %v548 = vmul.f32 %v513, %v540
  %v549 = vmul.f32 %v512, %v544
  %v550 = vmul.f32 %v513, %v544
  %559 = vrot.lane.b32.xlu0 %v434, 96
  %v560 = vpop.permute.xlu0 %559
  %561 = vrot.lane.b32.xlu0 %v439, 96
  %v562 = vpop.permute.xlu0 %561
  %563 = vrot.lane.b32.xlu0 %v444, 96
  %v564 = vpop.permute.xlu0 %563
  %565 = vrot.lane.b32.xlu0 %v449, 96
  %v566 = vpop.permute.xlu0 %565
  %567 = vrot.lane.b32.xlu0 %v454, 96
  %v568 = vpop.permute.xlu0 %567
  %569 = vrot.lane.b32.xlu0 %v459, 96
  %v570 = vpop.permute.xlu0 %569
  %571 = vrot.lane.b32.xlu0 %v464, 96
  %v572 = vpop.permute.xlu0 %571
  %573 = vrot.lane.b32.xlu0 %v469, 96
  %v574 = vpop.permute.xlu0 %573
  %583 = vxpose.xlu0.b32.start [1/16] %v560, 128
  %584 = vxpose.xlu0.b32.cont [2/16] %v562, 128
  %585 = vxpose.xlu0.b32.cont [3/16] %v564, 128
  %586 = vxpose.xlu0.b32.cont [4/16] %v566, 128
  %587 = vxpose.xlu0.b32.cont [5/16] %v568, 128
  %588 = vxpose.xlu0.b32.cont [6/16] %v570, 128
  %589 = vxpose.xlu0.b32.cont [7/16] %v572, 128
  %590 = vxpose.xlu0.b32.cont [8/16] %v574, 128
  %591 = vxpose.xlu0.b32.cont [9/16] 0.0, 128
  %592 = vxpose.xlu0.b32.cont [10/16] 0.0, 128
  %593 = vxpose.xlu0.b32.cont [11/16] 0.0, 128
  %594 = vxpose.xlu0.b32.cont [12/16] 0.0, 128
  %595 = vxpose.xlu0.b32.cont [13/16] 0.0, 128
  %596 = vxpose.xlu0.b32.cont [14/16] 0.0, 128
  %597 = vxpose.xlu0.b32.cont [15/16] 0.0, 128
  %598 = vxpose.xlu0.b32.end [16/16] 0.0, 128
  %v599 = vpop.trf.xlu0
  %v600 = vpop.trf.xlu0
  %v601 = vpop.trf.xlu0
  %v602 = vpop.trf.xlu0
  %v603 = vpop.trf.xlu0
  %v604 = vpop.trf.xlu0
  %v605 = vpop.trf.xlu0
  %v606 = vpop.trf.xlu0
  %v607 = vpop.trf.xlu0
  %v608 = vpop.trf.xlu0
  %v609 = vpop.trf.xlu0
  %v610 = vpop.trf.xlu0
  %v611 = vpop.trf.xlu0
  %v612 = vpop.trf.xlu0
  %v613 = vpop.trf.xlu0
  %v614 = vpop.trf.xlu0
  %vm615 = vcmask 523264
  %v617 = vsel %vm615, %v599, 0
  %v620 = vsel %vm615, %v600, 0
  %v623 = vsel %vm615, %v547, 0
  %v626 = vsel %vm615, %v548, 0
  %628 = vmatprep.subr.mxu0 0.0
  %629 = vmatpush1.xpose.msra.mxu0 0.0
  %630 = vmatprep.subr.mxu0 0.0
  %631 = vmatpush1.xpose.msra.mxu0 0.0
  %632 = vmatprep.subr.mxu0 0.0
  %633 = vmatpush1.xpose.msra.mxu0 0.0
  %634 = vmatprep.subr.mxu0 0.0
  %635 = vmatpush1.xpose.msra.mxu0 0.0
  %636 = vmatprep.subr.mxu0 0.0
  %637 = vmatpush1.xpose.msra.mxu0 0.0
  %638 = vmatprep.subr.mxu0 0.0
  %639 = vmatpush1.xpose.msra.mxu0 0.0
  %640 = vmatprep.subr.mxu0 0.0
  %641 = vmatpush1.xpose.msra.mxu0 0.0
  %642 = vmatprep.subr.mxu0 0.0
  %643 = vmatpush1.xpose.msra.mxu0 0.0
  %644 = vmatprep.subr.mxu0 0.0
  %645 = vmatpush1.xpose.msra.mxu0 0.0
  %646 = vmatprep.subr.mxu0 0.0
  %647 = vmatpush1.xpose.msra.mxu0 0.0
  %648 = vmatprep.subr.mxu0 0.0
  %649 = vmatpush1.xpose.msra.mxu0 0.0
  %650 = vmatprep.subr.mxu0 0.0
  %651 = vmatpush1.xpose.msra.mxu0 0.0
  %652 = vmatprep.subr.mxu0 0.0
  %653 = vmatpush1.xpose.msra.mxu0 0.0
  %654 = vmatprep.subr.mxu0 0.0
  %655 = vmatpush1.xpose.msra.mxu0 0.0
  %656 = vmatprep.subr.mxu0 0.0
  %657 = vmatpush1.xpose.msra.mxu0 %v626
  %658 = vmatprep.subr.mxu0 0.0
  %659 = vmatpush1.xpose.msra.mxu0 %v623
  %660 = vmatprep.subr.mxu0 0.0
  %661 = vmatpush2.xpose.msra.mxu0 0.0
  %662 = vmatprep.subr.mxu0 0.0
  %663 = vmatpush2.xpose.msra.mxu0 0.0
  %664 = vmatprep.subr.mxu0 0.0
  %665 = vmatpush2.xpose.msra.mxu0 0.0
  %666 = vmatprep.subr.mxu0 0.0
  %667 = vmatpush2.xpose.msra.mxu0 0.0
  %668 = vmatprep.subr.mxu0 0.0
  %669 = vmatpush2.xpose.msra.mxu0 0.0
  %670 = vmatprep.subr.mxu0 0.0
  %671 = vmatpush2.xpose.msra.mxu0 0.0
  %672 = vmatprep.subr.mxu0 0.0
  %673 = vmatpush2.xpose.msra.mxu0 0.0
  %674 = vmatprep.subr.mxu0 0.0
  %675 = vmatpush2.xpose.msra.mxu0 0.0
  %676 = vmatprep.subr.mxu0 0.0
  %677 = vmatpush2.xpose.msra.mxu0 0.0
  %678 = vmatprep.subr.mxu0 0.0
  %679 = vmatpush2.xpose.msra.mxu0 0.0
  %680 = vmatprep.subr.mxu0 0.0
  %681 = vmatpush2.xpose.msra.mxu0 0.0
  %682 = vmatprep.subr.mxu0 0.0
  %683 = vmatpush2.xpose.msra.mxu0 0.0
  %684 = vmatprep.subr.mxu0 0.0
  %685 = vmatpush2.xpose.msra.mxu0 0.0
  %686 = vmatprep.subr.mxu0 0.0
  %687 = vmatpush2.xpose.msra.mxu0 0.0
  %688 = vmatprep.subr.mxu0 0.0
  %689 = vmatpush2.xpose.msra.mxu0 0.0
  %690 = vmatprep.subr.mxu0 0.0
  %691 = vmatpush2.xpose.msra.mxu0 0.0
  %692 = vmatprep.mubr.f32.mxu0 0.0
  %693 = vmatmul.mubr.f32.gmra.mxu0 %v617
  %v694 = vpop.f32.mrf.mxu0
  %v695 = vadd.f32 0.0, %v694
  %v696 = vpop.f32.mrf.mxu0
  %697 = vmatprep.mubr.f32.mxu0 0.0
  %698 = vmatmul.mubr.f32.gmra.mxu0 %v620
  %v699 = vpop.f32.mrf.mxu0
  %v700 = vadd.f32 0.0, %v699
  %v701 = vpop.f32.mrf.mxu0
  %702 = vdwg.mxu0
  %711 = vrot.lane.b32.xlu0 %v474, 96
  %v712 = vpop.permute.xlu0 %711
  %713 = vrot.lane.b32.xlu0 %v479, 96
  %v714 = vpop.permute.xlu0 %713
  %715 = vrot.lane.b32.xlu0 %v484, 96
  %v716 = vpop.permute.xlu0 %715
  %717 = vrot.lane.b32.xlu0 %v489, 96
  %v718 = vpop.permute.xlu0 %717
  %719 = vrot.lane.b32.xlu0 %v494, 96
  %v720 = vpop.permute.xlu0 %719
  %721 = vrot.lane.b32.xlu0 %v499, 96
  %v722 = vpop.permute.xlu0 %721
  %723 = vrot.lane.b32.xlu0 %v504, 96
  %v724 = vpop.permute.xlu0 %723
  %725 = vrot.lane.b32.xlu0 %v509, 96
  %v726 = vpop.permute.xlu0 %725
  %735 = vxpose.xlu0.b32.start [1/16] %v712, 128
  %736 = vxpose.xlu0.b32.cont [2/16] %v714, 128
  %737 = vxpose.xlu0.b32.cont [3/16] %v716, 128
  %738 = vxpose.xlu0.b32.cont [4/16] %v718, 128
  %739 = vxpose.xlu0.b32.cont [5/16] %v720, 128
  %740 = vxpose.xlu0.b32.cont [6/16] %v722, 128
  %741 = vxpose.xlu0.b32.cont [7/16] %v724, 128
  %742 = vxpose.xlu0.b32.cont [8/16] %v726, 128
  %743 = vxpose.xlu0.b32.cont [9/16] 0.0, 128
  %744 = vxpose.xlu0.b32.cont [10/16] 0.0, 128
  %745 = vxpose.xlu0.b32.cont [11/16] 0.0, 128
  %746 = vxpose.xlu0.b32.cont [12/16] 0.0, 128
  %747 = vxpose.xlu0.b32.cont [13/16] 0.0, 128
  %748 = vxpose.xlu0.b32.cont [14/16] 0.0, 128
  %749 = vxpose.xlu0.b32.cont [15/16] 0.0, 128
  %750 = vxpose.xlu0.b32.end [16/16] 0.0, 128
  %v751 = vpop.trf.xlu0
  %v752 = vpop.trf.xlu0
  %v753 = vpop.trf.xlu0
  %v754 = vpop.trf.xlu0
  %v755 = vpop.trf.xlu0
  %v756 = vpop.trf.xlu0
  %v757 = vpop.trf.xlu0
  %v758 = vpop.trf.xlu0
  %v759 = vpop.trf.xlu0
  %v760 = vpop.trf.xlu0
  %v761 = vpop.trf.xlu0
  %v762 = vpop.trf.xlu0
  %v763 = vpop.trf.xlu0
  %v764 = vpop.trf.xlu0
  %v765 = vpop.trf.xlu0
  %v766 = vpop.trf.xlu0
  %v768 = vsel %vm615, %v751, 0
  %v771 = vsel %vm615, %v752, 0
  %v774 = vsel %vm615, %v549, 0
  %v777 = vsel %vm615, %v550, 0
  %779 = vmatprep.subr.mxu0 0.0
  %780 = vmatpush1.xpose.msra.mxu0 0.0
  %781 = vmatprep.subr.mxu0 0.0
  %782 = vmatpush1.xpose.msra.mxu0 0.0
  %783 = vmatprep.subr.mxu0 0.0
  %784 = vmatpush1.xpose.msra.mxu0 0.0
  %785 = vmatprep.subr.mxu0 0.0
  %786 = vmatpush1.xpose.msra.mxu0 0.0
  %787 = vmatprep.subr.mxu0 0.0
  %788 = vmatpush1.xpose.msra.mxu0 0.0
  %789 = vmatprep.subr.mxu0 0.0
  %790 = vmatpush1.xpose.msra.mxu0 0.0
  %791 = vmatprep.subr.mxu0 0.0
  %792 = vmatpush1.xpose.msra.mxu0 0.0
  %793 = vmatprep.subr.mxu0 0.0
  %794 = vmatpush1.xpose.msra.mxu0 0.0
  %795 = vmatprep.subr.mxu0 0.0
  %796 = vmatpush1.xpose.msra.mxu0 0.0
  %797 = vmatprep.subr.mxu0 0.0
  %798 = vmatpush1.xpose.msra.mxu0 0.0
  %799 = vmatprep.subr.mxu0 0.0
  %800 = vmatpush1.xpose.msra.mxu0 0.0
  %801 = vmatprep.subr.mxu0 0.0
  %802 = vmatpush1.xpose.msra.mxu0 0.0
  %803 = vmatprep.subr.mxu0 0.0
  %804 = vmatpush1.xpose.msra.mxu0 0.0
  %805 = vmatprep.subr.mxu0 0.0
  %806 = vmatpush1.xpose.msra.mxu0 0.0
  %807 = vmatprep.subr.mxu0 0.0
  %808 = vmatpush1.xpose.msra.mxu0 %v777
  %809 = vmatprep.subr.mxu0 0.0
  %810 = vmatpush1.xpose.msra.mxu0 %v774
  %811 = vmatprep.subr.mxu0 0.0
  %812 = vmatpush2.xpose.msra.mxu0 0.0
  %813 = vmatprep.subr.mxu0 0.0
  %814 = vmatpush2.xpose.msra.mxu0 0.0
  %815 = vmatprep.subr.mxu0 0.0
  %816 = vmatpush2.xpose.msra.mxu0 0.0
  %817 = vmatprep.subr.mxu0 0.0
  %818 = vmatpush2.xpose.msra.mxu0 0.0
  %819 = vmatprep.subr.mxu0 0.0
  %820 = vmatpush2.xpose.msra.mxu0 0.0
  %821 = vmatprep.subr.mxu0 0.0
  %822 = vmatpush2.xpose.msra.mxu0 0.0
  %823 = vmatprep.subr.mxu0 0.0
  %824 = vmatpush2.xpose.msra.mxu0 0.0
  %825 = vmatprep.subr.mxu0 0.0
  %826 = vmatpush2.xpose.msra.mxu0 0.0
  %827 = vmatprep.subr.mxu0 0.0
  %828 = vmatpush2.xpose.msra.mxu0 0.0
  %829 = vmatprep.subr.mxu0 0.0
  %830 = vmatpush2.xpose.msra.mxu0 0.0
  %831 = vmatprep.subr.mxu0 0.0
  %832 = vmatpush2.xpose.msra.mxu0 0.0
  %833 = vmatprep.subr.mxu0 0.0
  %834 = vmatpush2.xpose.msra.mxu0 0.0
  %835 = vmatprep.subr.mxu0 0.0
  %836 = vmatpush2.xpose.msra.mxu0 0.0
  %837 = vmatprep.subr.mxu0 0.0
  %838 = vmatpush2.xpose.msra.mxu0 0.0
  %839 = vmatprep.subr.mxu0 0.0
  %840 = vmatpush2.xpose.msra.mxu0 0.0
  %841 = vmatprep.subr.mxu0 0.0
  %842 = vmatpush2.xpose.msra.mxu0 0.0
  %843 = vmatprep.mubr.f32.mxu0 0.0
  %844 = vmatmul.mubr.f32.gmra.mxu0 %v768
  %v845 = vpop.f32.mrf.mxu0
  %v846 = vadd.f32 0.0, %v845
  %v847 = vpop.f32.mrf.mxu0
  %848 = vmatprep.mubr.f32.mxu0 0.0
  %849 = vmatmul.mubr.f32.gmra.mxu0 %v771
  %v850 = vpop.f32.mrf.mxu0
  %v851 = vadd.f32 0.0, %v850
  %v852 = vpop.f32.mrf.mxu0
  %853 = vdwg.mxu0
  %854 = vrot.lane.b32.xlu0 %v434, 64
  %v855 = vpop.permute.xlu0 %854
  %856 = vrot.lane.b32.xlu0 %v439, 64
  %v857 = vpop.permute.xlu0 %856
  %858 = vrot.lane.b32.xlu0 %v444, 64
  %v859 = vpop.permute.xlu0 %858
  %860 = vrot.lane.b32.xlu0 %v449, 64
  %v861 = vpop.permute.xlu0 %860
  %862 = vrot.lane.b32.xlu0 %v454, 64
  %v863 = vpop.permute.xlu0 %862
  %864 = vrot.lane.b32.xlu0 %v459, 64
  %v865 = vpop.permute.xlu0 %864
  %866 = vrot.lane.b32.xlu0 %v464, 64
  %v867 = vpop.permute.xlu0 %866
  %868 = vrot.lane.b32.xlu0 %v469, 64
  %v869 = vpop.permute.xlu0 %868
  %878 = vxpose.xlu0.b32.start [1/16] %v855, 128
  %879 = vxpose.xlu0.b32.cont [2/16] %v857, 128
  %880 = vxpose.xlu0.b32.cont [3/16] %v859, 128
  %881 = vxpose.xlu0.b32.cont [4/16] %v861, 128
  %882 = vxpose.xlu0.b32.cont [5/16] %v863, 128
  %883 = vxpose.xlu0.b32.cont [6/16] %v865, 128
  %884 = vxpose.xlu0.b32.cont [7/16] %v867, 128
  %885 = vxpose.xlu0.b32.cont [8/16] %v869, 128
  %886 = vxpose.xlu0.b32.cont [9/16] 0.0, 128
  %887 = vxpose.xlu0.b32.cont [10/16] 0.0, 128
  %888 = vxpose.xlu0.b32.cont [11/16] 0.0, 128
  %889 = vxpose.xlu0.b32.cont [12/16] 0.0, 128
  %890 = vxpose.xlu0.b32.cont [13/16] 0.0, 128
  %891 = vxpose.xlu0.b32.cont [14/16] 0.0, 128
  %892 = vxpose.xlu0.b32.cont [15/16] 0.0, 128
  %893 = vxpose.xlu0.b32.end [16/16] 0.0, 128
  %v894 = vpop.trf.xlu0
  %v895 = vpop.trf.xlu0
  %v896 = vpop.trf.xlu0
  %v897 = vpop.trf.xlu0
  %v898 = vpop.trf.xlu0
  %v899 = vpop.trf.xlu0
  %v900 = vpop.trf.xlu0
  %v901 = vpop.trf.xlu0
  %v902 = vpop.trf.xlu0
  %v903 = vpop.trf.xlu0
  %v904 = vpop.trf.xlu0
  %v905 = vpop.trf.xlu0
  %v906 = vpop.trf.xlu0
  %v907 = vpop.trf.xlu0
  %v908 = vpop.trf.xlu0
  %v909 = vpop.trf.xlu0
  %v911 = vsel %vm615, %v894, 0
  %v914 = vsel %vm615, %v895, 0
  %916 = vmatprep.subr.mxu0 0.0
  %917 = vmatpush1.xpose.msra.mxu0 0.0
  %918 = vmatprep.subr.mxu0 0.0
  %919 = vmatpush1.xpose.msra.mxu0 0.0
  %920 = vmatprep.subr.mxu0 0.0
  %921 = vmatpush1.xpose.msra.mxu0 0.0
  %922 = vmatprep.subr.mxu0 0.0
  %923 = vmatpush1.xpose.msra.mxu0 0.0
  %924 = vmatprep.subr.mxu0 0.0
  %925 = vmatpush1.xpose.msra.mxu0 0.0
  %926 = vmatprep.subr.mxu0 0.0
  %927 = vmatpush1.xpose.msra.mxu0 0.0
  %928 = vmatprep.subr.mxu0 0.0
  %929 = vmatpush1.xpose.msra.mxu0 0.0
  %930 = vmatprep.subr.mxu0 0.0
  %931 = vmatpush1.xpose.msra.mxu0 0.0
  %932 = vmatprep.subr.mxu0 0.0
  %933 = vmatpush1.xpose.msra.mxu0 0.0
  %934 = vmatprep.subr.mxu0 0.0
  %935 = vmatpush1.xpose.msra.mxu0 0.0
  %936 = vmatprep.subr.mxu0 0.0
  %937 = vmatpush1.xpose.msra.mxu0 0.0
  %938 = vmatprep.subr.mxu0 0.0
  %939 = vmatpush1.xpose.msra.mxu0 0.0
  %940 = vmatprep.subr.mxu0 0.0
  %941 = vmatpush1.xpose.msra.mxu0 0.0
  %942 = vmatprep.subr.mxu0 0.0
  %943 = vmatpush1.xpose.msra.mxu0 0.0
  %944 = vmatprep.subr.mxu0 0.0
  %945 = vmatpush1.xpose.msra.mxu0 %v626
  %946 = vmatprep.subr.mxu0 0.0
  %947 = vmatpush1.xpose.msra.mxu0 %v623
  %948 = vmatprep.subr.mxu0 0.0
  %949 = vmatpush2.xpose.msra.mxu0 0.0
  %950 = vmatprep.subr.mxu0 0.0
  %951 = vmatpush2.xpose.msra.mxu0 0.0
  %952 = vmatprep.subr.mxu0 0.0
  %953 = vmatpush2.xpose.msra.mxu0 0.0
  %954 = vmatprep.subr.mxu0 0.0
  %955 = vmatpush2.xpose.msra.mxu0 0.0
  %956 = vmatprep.subr.mxu0 0.0
  %957 = vmatpush2.xpose.msra.mxu0 0.0
  %958 = vmatprep.subr.mxu0 0.0
  %959 = vmatpush2.xpose.msra.mxu0 0.0
  %960 = vmatprep.subr.mxu0 0.0
  %961 = vmatpush2.xpose.msra.mxu0 0.0
  %962 = vmatprep.subr.mxu0 0.0
  %963 = vmatpush2.xpose.msra.mxu0 0.0
  %964 = vmatprep.subr.mxu0 0.0
  %965 = vmatpush2.xpose.msra.mxu0 0.0
  %966 = vmatprep.subr.mxu0 0.0
  %967 = vmatpush2.xpose.msra.mxu0 0.0
  %968 = vmatprep.subr.mxu0 0.0
  %969 = vmatpush2.xpose.msra.mxu0 0.0
  %970 = vmatprep.subr.mxu0 0.0
  %971 = vmatpush2.xpose.msra.mxu0 0.0
  %972 = vmatprep.subr.mxu0 0.0
  %973 = vmatpush2.xpose.msra.mxu0 0.0
  %974 = vmatprep.subr.mxu0 0.0
  %975 = vmatpush2.xpose.msra.mxu0 0.0
  %976 = vmatprep.subr.mxu0 0.0
  %977 = vmatpush2.xpose.msra.mxu0 0.0
  %978 = vmatprep.subr.mxu0 0.0
  %979 = vmatpush2.xpose.msra.mxu0 0.0
  %980 = vmatprep.mubr.f32.mxu0 0.0
  %981 = vmatmul.mubr.f32.gmra.mxu0 %v911
  %v982 = vpop.f32.mrf.mxu0
  %v983 = vadd.f32 0.0, %v982
  %v984 = vpop.f32.mrf.mxu0
  %985 = vmatprep.mubr.f32.mxu0 0.0
  %986 = vmatmul.mubr.f32.gmra.mxu0 %v914
  %v987 = vpop.f32.mrf.mxu0
  %v988 = vadd.f32 0.0, %v987
  %v989 = vpop.f32.mrf.mxu0
  %990 = vdwg.mxu0
  %991 = vrot.lane.b32.xlu0 %v474, 64
  %v992 = vpop.permute.xlu0 %991
  %993 = vrot.lane.b32.xlu0 %v479, 64
  %v994 = vpop.permute.xlu0 %993
  %995 = vrot.lane.b32.xlu0 %v484, 64
  %v996 = vpop.permute.xlu0 %995
  %997 = vrot.lane.b32.xlu0 %v489, 64
  %v998 = vpop.permute.xlu0 %997
  %999 = vrot.lane.b32.xlu0 %v494, 64
  %v1000 = vpop.permute.xlu0 %999
  %1001 = vrot.lane.b32.xlu0 %v499, 64
  %v1002 = vpop.permute.xlu0 %1001
  %1003 = vrot.lane.b32.xlu0 %v504, 64
  %v1004 = vpop.permute.xlu0 %1003
  %1005 = vrot.lane.b32.xlu0 %v509, 64
  %v1006 = vpop.permute.xlu0 %1005
  %1015 = vxpose.xlu0.b32.start [1/16] %v992, 128
  %1016 = vxpose.xlu0.b32.cont [2/16] %v994, 128
  %1017 = vxpose.xlu0.b32.cont [3/16] %v996, 128
  %1018 = vxpose.xlu0.b32.cont [4/16] %v998, 128
  %1019 = vxpose.xlu0.b32.cont [5/16] %v1000, 128
  %1020 = vxpose.xlu0.b32.cont [6/16] %v1002, 128
  %1021 = vxpose.xlu0.b32.cont [7/16] %v1004, 128
  %1022 = vxpose.xlu0.b32.cont [8/16] %v1006, 128
  %1023 = vxpose.xlu0.b32.cont [9/16] 0.0, 128
  %1024 = vxpose.xlu0.b32.cont [10/16] 0.0, 128
  %1025 = vxpose.xlu0.b32.cont [11/16] 0.0, 128
  %1026 = vxpose.xlu0.b32.cont [12/16] 0.0, 128
  %1027 = vxpose.xlu0.b32.cont [13/16] 0.0, 128
  %1028 = vxpose.xlu0.b32.cont [14/16] 0.0, 128
  %1029 = vxpose.xlu0.b32.cont [15/16] 0.0, 128
  %1030 = vxpose.xlu0.b32.end [16/16] 0.0, 128
  %v1031 = vpop.trf.xlu0
  %v1032 = vpop.trf.xlu0
  %v1033 = vpop.trf.xlu0
  %v1034 = vpop.trf.xlu0
  %v1035 = vpop.trf.xlu0
  %v1036 = vpop.trf.xlu0
  %v1037 = vpop.trf.xlu0
  %v1038 = vpop.trf.xlu0
  %v1039 = vpop.trf.xlu0
  %v1040 = vpop.trf.xlu0
  %v1041 = vpop.trf.xlu0
  %v1042 = vpop.trf.xlu0
  %v1043 = vpop.trf.xlu0
  %v1044 = vpop.trf.xlu0
  %v1045 = vpop.trf.xlu0
  %v1046 = vpop.trf.xlu0
  %v1048 = vsel %vm615, %v1031, 0
  %v1051 = vsel %vm615, %v1032, 0
  %1053 = vmatprep.subr.mxu0 0.0
  %1054 = vmatpush1.xpose.msra.mxu0 0.0
  %1055 = vmatprep.subr.mxu0 0.0
  %1056 = vmatpush1.xpose.msra.mxu0 0.0
  %1057 = vmatprep.subr.mxu0 0.0
  %1058 = vmatpush1.xpose.msra.mxu0 0.0
  %1059 = vmatprep.subr.mxu0 0.0
  %1060 = vmatpush1.xpose.msra.mxu0 0.0
  %1061 = vmatprep.subr.mxu0 0.0
  %1062 = vmatpush1.xpose.msra.mxu0 0.0
  %1063 = vmatprep.subr.mxu0 0.0
  %1064 = vmatpush1.xpose.msra.mxu0 0.0
  %1065 = vmatprep.subr.mxu0 0.0
  %1066 = vmatpush1.xpose.msra.mxu0 0.0
  %1067 = vmatprep.subr.mxu0 0.0
  %1068 = vmatpush1.xpose.msra.mxu0 0.0
  %1069 = vmatprep.subr.mxu0 0.0
  %1070 = vmatpush1.xpose.msra.mxu0 0.0
  %1071 = vmatprep.subr.mxu0 0.0
  %1072 = vmatpush1.xpose.msra.mxu0 0.0
  %1073 = vmatprep.subr.mxu0 0.0
  %1074 = vmatpush1.xpose.msra.mxu0 0.0
  %1075 = vmatprep.subr.mxu0 0.0
  %1076 = vmatpush1.xpose.msra.mxu0 0.0
  %1077 = vmatprep.subr.mxu0 0.0
  %1078 = vmatpush1.xpose.msra.mxu0 0.0
  %1079 = vmatprep.subr.mxu0 0.0
  %1080 = vmatpush1.xpose.msra.mxu0 0.0
  %1081 = vmatprep.subr.mxu0 0.0
  %1082 = vmatpush1.xpose.msra.mxu0 %v777
  %1083 = vmatprep.subr.mxu0 0.0
  %1084 = vmatpush1.xpose.msra.mxu0 %v774
  %1085 = vmatprep.subr.mxu0 0.0
  %1086 = vmatpush2.xpose.msra.mxu0 0.0
  %1087 = vmatprep.subr.mxu0 0.0
  %1088 = vmatpush2.xpose.msra.mxu0 0.0
  %1089 = vmatprep.subr.mxu0 0.0
  %1090 = vmatpush2.xpose.msra.mxu0 0.0
  %1091 = vmatprep.subr.mxu0 0.0
  %1092 = vmatpush2.xpose.msra.mxu0 0.0
  %1093 = vmatprep.subr.mxu0 0.0
  %1094 = vmatpush2.xpose.msra.mxu0 0.0
  %1095 = vmatprep.subr.mxu0 0.0
  %1096 = vmatpush2.xpose.msra.mxu0 0.0
  %1097 = vmatprep.subr.mxu0 0.0
  %1098 = vmatpush2.xpose.msra.mxu0 0.0
  %1099 = vmatprep.subr.mxu0 0.0
  %1100 = vmatpush2.xpose.msra.mxu0 0.0
  %1101 = vmatprep.subr.mxu0 0.0
  %1102 = vmatpush2.xpose.msra.mxu0 0.0
  %1103 = vmatprep.subr.mxu0 0.0
  %1104 = vmatpush2.xpose.msra.mxu0 0.0
  %1105 = vmatprep.subr.mxu0 0.0
  %1106 = vmatpush2.xpose.msra.mxu0 0.0
  %1107 = vmatprep.subr.mxu0 0.0
  %1108 = vmatpush2.xpose.msra.mxu0 0.0
  %1109 = vmatprep.subr.mxu0 0.0
  %1110 = vmatpush2.xpose.msra.mxu0 0.0
  %1111 = vmatprep.subr.mxu0 0.0
  %1112 = vmatpush2.xpose.msra.mxu0 0.0
  %1113 = vmatprep.subr.mxu0 0.0
  %1114 = vmatpush2.xpose.msra.mxu0 0.0
  %1115 = vmatprep.subr.mxu0 0.0
  %1116 = vmatpush2.xpose.msra.mxu0 0.0
  %1117 = vmatprep.mubr.f32.mxu0 0.0
  %1118 = vmatmul.mubr.f32.gmra.mxu0 %v1048
  %v1119 = vpop.f32.mrf.mxu0
  %v1120 = vadd.f32 0.0, %v1119
  %v1121 = vpop.f32.mrf.mxu0
  %1122 = vmatprep.mubr.f32.mxu0 0.0
  %1123 = vmatmul.mubr.f32.gmra.mxu0 %v1051
  %v1124 = vpop.f32.mrf.mxu0
  %v1125 = vadd.f32 0.0, %v1124
  %v1126 = vpop.f32.mrf.mxu0
  %1127 = vdwg.mxu0
  %vm1128 = vcmask 130048
  %v1129 = vsel %vm1128, %v434, 0
  %v1131 = vsel %vm1128, %v439, 0
  %v1133 = vsel %vm1128, %v444, 0
  %v1135 = vsel %vm1128, %v449, 0
  %v1137 = vsel %vm1128, %v454, 0
  %v1139 = vsel %vm1128, %v459, 0
  %v1141 = vsel %vm1128, %v464, 0
  %v1143 = vsel %vm1128, %v469, 0
  %1145 = vmatprep.subr.mxu0 0.0
  %1146 = vmatpush1.msra.mxu0 0.0
  %1147 = vmatprep.subr.mxu0 0.0
  %1148 = vmatpush1.msra.mxu0 0.0
  %1149 = vmatprep.subr.mxu0 0.0
  %1150 = vmatpush1.msra.mxu0 0.0
  %1151 = vmatprep.subr.mxu0 0.0
  %1152 = vmatpush1.msra.mxu0 0.0
  %1153 = vmatprep.subr.mxu0 0.0
  %1154 = vmatpush1.msra.mxu0 0.0
  %1155 = vmatprep.subr.mxu0 0.0
  %1156 = vmatpush1.msra.mxu0 0.0
  %1157 = vmatprep.subr.mxu0 0.0
  %1158 = vmatpush1.msra.mxu0 0.0
  %1159 = vmatprep.subr.mxu0 0.0
  %1160 = vmatpush1.msra.mxu0 0.0
  %1161 = vmatprep.subr.mxu0 0.0
  %1162 = vmatpush1.msra.mxu0 0.0
  %1163 = vmatprep.subr.mxu0 0.0
  %1164 = vmatpush1.msra.mxu0 0.0
  %1165 = vmatprep.subr.mxu0 0.0
  %1166 = vmatpush1.msra.mxu0 0.0
  %1167 = vmatprep.subr.mxu0 0.0
  %1168 = vmatpush1.msra.mxu0 0.0
  %1169 = vmatprep.subr.mxu0 0.0
  %1170 = vmatpush1.msra.mxu0 0.0
  %1171 = vmatprep.subr.mxu0 0.0
  %1172 = vmatpush1.msra.mxu0 0.0
  %1173 = vmatprep.subr.mxu0 0.0
  %1174 = vmatpush1.msra.mxu0 %v700
  %1175 = vmatprep.subr.mxu0 0.0
  %1176 = vmatpush1.msra.mxu0 %v695
  %1177 = vmatprep.subr.mxu0 0.0
  %1178 = vmatpush2.msra.mxu0 0.0
  %1179 = vmatprep.subr.mxu0 0.0
  %1180 = vmatpush2.msra.mxu0 0.0
  %1181 = vmatprep.subr.mxu0 0.0
  %1182 = vmatpush2.msra.mxu0 0.0
  %1183 = vmatprep.subr.mxu0 0.0
  %1184 = vmatpush2.msra.mxu0 0.0
  %1185 = vmatprep.subr.mxu0 0.0
  %1186 = vmatpush2.msra.mxu0 0.0
  %1187 = vmatprep.subr.mxu0 0.0
  %1188 = vmatpush2.msra.mxu0 0.0
  %1189 = vmatprep.subr.mxu0 0.0
  %1190 = vmatpush2.msra.mxu0 0.0
  %1191 = vmatprep.subr.mxu0 0.0
  %1192 = vmatpush2.msra.mxu0 0.0
  %1193 = vmatprep.subr.mxu0 0.0
  %1194 = vmatpush2.msra.mxu0 0.0
  %1195 = vmatprep.subr.mxu0 0.0
  %1196 = vmatpush2.msra.mxu0 0.0
  %1197 = vmatprep.subr.mxu0 0.0
  %1198 = vmatpush2.msra.mxu0 0.0
  %1199 = vmatprep.subr.mxu0 0.0
  %1200 = vmatpush2.msra.mxu0 0.0
  %1201 = vmatprep.subr.mxu0 0.0
  %1202 = vmatpush2.msra.mxu0 0.0
  %1203 = vmatprep.subr.mxu0 0.0
  %1204 = vmatpush2.msra.mxu0 0.0
  %1205 = vmatprep.subr.mxu0 0.0
  %1206 = vmatpush2.msra.mxu0 0.0
  %1207 = vmatprep.subr.mxu0 0.0
  %1208 = vmatpush2.msra.mxu0 0.0
  %1209 = vmatprep.mubr.f32.mxu0 0.0
  %1210 = vmatmul.mubr.f32.gmra.mxu0 %v1129
  %v1211 = vpop.f32.mrf.mxu0
  %v1212 = vadd.f32 0.0, %v1211
  %v1213 = vpop.f32.mrf.mxu0
  %1214 = vmatprep.mubr.f32.mxu0 0.0
  %1215 = vmatmul.mubr.f32.gmra.mxu0 %v1131
  %v1216 = vpop.f32.mrf.mxu0
  %v1217 = vadd.f32 0.0, %v1216
  %v1218 = vpop.f32.mrf.mxu0
  %1219 = vmatprep.mubr.f32.mxu0 0.0
  %1220 = vmatmul.mubr.f32.gmra.mxu0 %v1133
  %v1221 = vpop.f32.mrf.mxu0
  %v1222 = vadd.f32 0.0, %v1221
  %v1223 = vpop.f32.mrf.mxu0
  %1224 = vmatprep.mubr.f32.mxu0 0.0
  %1225 = vmatmul.mubr.f32.gmra.mxu0 %v1135
  %v1226 = vpop.f32.mrf.mxu0
  %v1227 = vadd.f32 0.0, %v1226
  %v1228 = vpop.f32.mrf.mxu0
  %1229 = vmatprep.mubr.f32.mxu0 0.0
  %1230 = vmatmul.mubr.f32.gmra.mxu0 %v1137
  %v1231 = vpop.f32.mrf.mxu0
  %v1232 = vadd.f32 0.0, %v1231
  %v1233 = vpop.f32.mrf.mxu0
  %1234 = vmatprep.mubr.f32.mxu0 0.0
  %1235 = vmatmul.mubr.f32.gmra.mxu0 %v1139
  %v1236 = vpop.f32.mrf.mxu0
  %v1237 = vadd.f32 0.0, %v1236
  %v1238 = vpop.f32.mrf.mxu0
  %1239 = vmatprep.mubr.f32.mxu0 0.0
  %1240 = vmatmul.mubr.f32.gmra.mxu0 %v1141
  %v1241 = vpop.f32.mrf.mxu0
  %v1242 = vadd.f32 0.0, %v1241
  %v1243 = vpop.f32.mrf.mxu0
  %1244 = vmatprep.mubr.f32.mxu0 0.0
  %1245 = vmatmul.mubr.f32.gmra.mxu0 %v1143
  %v1246 = vpop.f32.mrf.mxu0
  %v1247 = vadd.f32 0.0, %v1246
  %v1248 = vpop.f32.mrf.mxu0
  %1249 = vdwg.mxu0
  %v1250 = vsel %vm1128, %v474, 0
  %v1252 = vsel %vm1128, %v479, 0
  %v1254 = vsel %vm1128, %v484, 0
  %v1256 = vsel %vm1128, %v489, 0
  %v1258 = vsel %vm1128, %v494, 0
  %v1260 = vsel %vm1128, %v499, 0
  %v1262 = vsel %vm1128, %v504, 0
  %v1264 = vsel %vm1128, %v509, 0
  %1266 = vmatprep.subr.mxu0 0.0
  %1267 = vmatpush1.msra.mxu0 0.0
  %1268 = vmatprep.subr.mxu0 0.0
  %1269 = vmatpush1.msra.mxu0 0.0
  %1270 = vmatprep.subr.mxu0 0.0
  %1271 = vmatpush1.msra.mxu0 0.0
  %1272 = vmatprep.subr.mxu0 0.0
  %1273 = vmatpush1.msra.mxu0 0.0
  %1274 = vmatprep.subr.mxu0 0.0
  %1275 = vmatpush1.msra.mxu0 0.0
  %1276 = vmatprep.subr.mxu0 0.0
  %1277 = vmatpush1.msra.mxu0 0.0
  %1278 = vmatprep.subr.mxu0 0.0
  %1279 = vmatpush1.msra.mxu0 0.0
  %1280 = vmatprep.subr.mxu0 0.0
  %1281 = vmatpush1.msra.mxu0 0.0
  %1282 = vmatprep.subr.mxu0 0.0
  %1283 = vmatpush1.msra.mxu0 0.0
  %1284 = vmatprep.subr.mxu0 0.0
  %1285 = vmatpush1.msra.mxu0 0.0
  %1286 = vmatprep.subr.mxu0 0.0
  %1287 = vmatpush1.msra.mxu0 0.0
  %1288 = vmatprep.subr.mxu0 0.0
  %1289 = vmatpush1.msra.mxu0 0.0
  %1290 = vmatprep.subr.mxu0 0.0
  %1291 = vmatpush1.msra.mxu0 0.0
  %1292 = vmatprep.subr.mxu0 0.0
  %1293 = vmatpush1.msra.mxu0 0.0
  %1294 = vmatprep.subr.mxu0 0.0
  %1295 = vmatpush1.msra.mxu0 %v851
  %1296 = vmatprep.subr.mxu0 0.0
  %1297 = vmatpush1.msra.mxu0 %v846
  %1298 = vmatprep.subr.mxu0 0.0
  %1299 = vmatpush2.msra.mxu0 0.0
  %1300 = vmatprep.subr.mxu0 0.0
  %1301 = vmatpush2.msra.mxu0 0.0
  %1302 = vmatprep.subr.mxu0 0.0
  %1303 = vmatpush2.msra.mxu0 0.0
  %1304 = vmatprep.subr.mxu0 0.0
  %1305 = vmatpush2.msra.mxu0 0.0
  %1306 = vmatprep.subr.mxu0 0.0
  %1307 = vmatpush2.msra.mxu0 0.0
  %1308 = vmatprep.subr.mxu0 0.0
  %1309 = vmatpush2.msra.mxu0 0.0
  %1310 = vmatprep.subr.mxu0 0.0
  %1311 = vmatpush2.msra.mxu0 0.0
  %1312 = vmatprep.subr.mxu0 0.0
  %1313 = vmatpush2.msra.mxu0 0.0
  %1314 = vmatprep.subr.mxu0 0.0
  %1315 = vmatpush2.msra.mxu0 0.0
  %1316 = vmatprep.subr.mxu0 0.0
  %1317 = vmatpush2.msra.mxu0 0.0
  %1318 = vmatprep.subr.mxu0 0.0
  %1319 = vmatpush2.msra.mxu0 0.0
  %1320 = vmatprep.subr.mxu0 0.0
  %1321 = vmatpush2.msra.mxu0 0.0
  %1322 = vmatprep.subr.mxu0 0.0
  %1323 = vmatpush2.msra.mxu0 0.0
  %1324 = vmatprep.subr.mxu0 0.0
  %1325 = vmatpush2.msra.mxu0 0.0
  %1326 = vmatprep.subr.mxu0 0.0
  %1327 = vmatpush2.msra.mxu0 0.0
  %1328 = vmatprep.subr.mxu0 0.0
  %1329 = vmatpush2.msra.mxu0 0.0
  %1330 = vmatprep.mubr.f32.mxu0 0.0
  %1331 = vmatmul.mubr.f32.gmra.mxu0 %v1250
  %v1332 = vpop.f32.mrf.mxu0
  %v1333 = vadd.f32 0.0, %v1332
  %v1334 = vpop.f32.mrf.mxu0
  %1335 = vmatprep.mubr.f32.mxu0 0.0
  %1336 = vmatmul.mubr.f32.gmra.mxu0 %v1252
  %v1337 = vpop.f32.mrf.mxu0
  %v1338 = vadd.f32 0.0, %v1337
  %v1339 = vpop.f32.mrf.mxu0
  %1340 = vmatprep.mubr.f32.mxu0 0.0
  %1341 = vmatmul.mubr.f32.gmra.mxu0 %v1254
  %v1342 = vpop.f32.mrf.mxu0
  %v1343 = vadd.f32 0.0, %v1342
  %v1344 = vpop.f32.mrf.mxu0
  %1345 = vmatprep.mubr.f32.mxu0 0.0
  %1346 = vmatmul.mubr.f32.gmra.mxu0 %v1256
  %v1347 = vpop.f32.mrf.mxu0
  %v1348 = vadd.f32 0.0, %v1347
  %v1349 = vpop.f32.mrf.mxu0
  %1350 = vmatprep.mubr.f32.mxu0 0.0
  %1351 = vmatmul.mubr.f32.gmra.mxu0 %v1258
  %v1352 = vpop.f32.mrf.mxu0
  %v1353 = vadd.f32 0.0, %v1352
  %v1354 = vpop.f32.mrf.mxu0
  %1355 = vmatprep.mubr.f32.mxu0 0.0
  %1356 = vmatmul.mubr.f32.gmra.mxu0 %v1260
  %v1357 = vpop.f32.mrf.mxu0
  %v1358 = vadd.f32 0.0, %v1357
  %v1359 = vpop.f32.mrf.mxu0
  %1360 = vmatprep.mubr.f32.mxu0 0.0
  %1361 = vmatmul.mubr.f32.gmra.mxu0 %v1262
  %v1362 = vpop.f32.mrf.mxu0
  %v1363 = vadd.f32 0.0, %v1362
  %v1364 = vpop.f32.mrf.mxu0
  %1365 = vmatprep.mubr.f32.mxu0 0.0
  %1366 = vmatmul.mubr.f32.gmra.mxu0 %v1264
  %v1367 = vpop.f32.mrf.mxu0
  %v1368 = vadd.f32 0.0, %v1367
  %v1369 = vpop.f32.mrf.mxu0
  %1370 = vdwg.mxu0
  %v1371 = vsel %vm1128, %v1212, -inf
  %1372 = vmax.xlane.f32.xlu0 %v1371
  %v1373 = vpop.xlane.xlu0 %1372
  %v1374 = vsel %vm1128, %v1217, -inf
  %1375 = vmax.xlane.f32.xlu0 %v1374
  %v1376 = vpop.xlane.xlu0 %1375
  %v1377 = vsel %vm1128, %v1222, -inf
  %1378 = vmax.xlane.f32.xlu0 %v1377
  %v1379 = vpop.xlane.xlu0 %1378
  %v1380 = vsel %vm1128, %v1227, -inf
  %1381 = vmax.xlane.f32.xlu0 %v1380
  %v1382 = vpop.xlane.xlu0 %1381
  %v1383 = vsel %vm1128, %v1232, -inf
  %1384 = vmax.xlane.f32.xlu0 %v1383
  %v1385 = vpop.xlane.xlu0 %1384
  %v1386 = vsel %vm1128, %v1237, -inf
  %1387 = vmax.xlane.f32.xlu0 %v1386
  %v1388 = vpop.xlane.xlu0 %1387
  %v1389 = vsel %vm1128, %v1242, -inf
  %1390 = vmax.xlane.f32.xlu0 %v1389
  %v1391 = vpop.xlane.xlu0 %1390
  %v1392 = vsel %vm1128, %v1247, -inf
  %1393 = vmax.xlane.f32.xlu0 %v1392
  %v1394 = vpop.xlane.xlu0 %1393
  %v1395 = vsel %vm1128, %v1333, -inf
  %1396 = vmax.xlane.f32.xlu0 %v1395
  %v1397 = vpop.xlane.xlu0 %1396
  %v1398 = vsel %vm1128, %v1338, -inf
  %1399 = vmax.xlane.f32.xlu0 %v1398
  %v1400 = vpop.xlane.xlu0 %1399
  %v1401 = vsel %vm1128, %v1343, -inf
  %1402 = vmax.xlane.f32.xlu0 %v1401
  %v1403 = vpop.xlane.xlu0 %1402
  %v1404 = vsel %vm1128, %v1348, -inf
  %1405 = vmax.xlane.f32.xlu0 %v1404
  %v1406 = vpop.xlane.xlu0 %1405
  %v1407 = vsel %vm1128, %v1353, -inf
  %1408 = vmax.xlane.f32.xlu0 %v1407
  %v1409 = vpop.xlane.xlu0 %1408
  %v1410 = vsel %vm1128, %v1358, -inf
  %1411 = vmax.xlane.f32.xlu0 %v1410
  %v1412 = vpop.xlane.xlu0 %1411
  %v1413 = vsel %vm1128, %v1363, -inf
  %1414 = vmax.xlane.f32.xlu0 %v1413
  %v1415 = vpop.xlane.xlu0 %1414
  %v1416 = vsel %vm1128, %v1368, -inf
  %1417 = vmax.xlane.f32.xlu0 %v1416
  %v1418 = vpop.xlane.xlu0 %1417
  %v1419 = vsub.f32 %v1212, %v1373
  %v1420 = vsub.f32 %v1217, %v1376
  %v1421 = vsub.f32 %v1222, %v1379
  %v1422 = vsub.f32 %v1227, %v1382
  %v1423 = vsub.f32 %v1232, %v1385
  %v1424 = vsub.f32 %v1237, %v1388
  %v1425 = vsub.f32 %v1242, %v1391
  %v1426 = vsub.f32 %v1247, %v1394
  %v1427 = vsub.f32 %v1333, %v1397
  %v1428 = vsub.f32 %v1338, %v1400
  %v1429 = vsub.f32 %v1343, %v1403
  %v1430 = vsub.f32 %v1348, %v1406
  %v1431 = vsub.f32 %v1353, %v1409
  %v1432 = vsub.f32 %v1358, %v1412
  %v1433 = vsub.f32 %v1363, %v1415
  %v1434 = vsub.f32 %v1368, %v1418
  %v1435 = vmul.f32 %v1419, 1.442695
  %v1436 = vpow.pop %v1435
  %v1437 = vmul.f32 %v1420, 1.442695
  %v1438 = vpow.pop %v1437
  %v1439 = vmul.f32 %v1421, 1.442695
  %v1440 = vpow.pop %v1439
  %v1441 = vmul.f32 %v1422, 1.442695
  %v1442 = vpow.pop %v1441
  %v1443 = vmul.f32 %v1423, 1.442695
  %v1444 = vpow.pop %v1443
  %v1445 = vmul.f32 %v1424, 1.442695
  %v1446 = vpow.pop %v1445
  %v1447 = vmul.f32 %v1425, 1.442695
  %v1448 = vpow.pop %v1447
  %v1449 = vmul.f32 %v1426, 1.442695
  %v1450 = vpow.pop %v1449
  %v1451 = vmul.f32 %v1427, 1.442695
  %v1452 = vpow.pop %v1451
  %v1453 = vmul.f32 %v1428, 1.442695
  %v1454 = vpow.pop %v1453
  %v1455 = vmul.f32 %v1429, 1.442695
  %v1456 = vpow.pop %v1455
  %v1457 = vmul.f32 %v1430, 1.442695
  %v1458 = vpow.pop %v1457
  %v1459 = vmul.f32 %v1431, 1.442695
  %v1460 = vpow.pop %v1459
  %v1461 = vmul.f32 %v1432, 1.442695
  %v1462 = vpow.pop %v1461
  %v1463 = vmul.f32 %v1433, 1.442695
  %v1464 = vpow.pop %v1463
  %v1465 = vmul.f32 %v1434, 1.442695
  %v1466 = vpow.pop %v1465
  %v1467 = vsel %vm1128, %v1436, 0.0
  %1468 = vadd.xlane.f32.xlu0 %v1467
  %v1469 = vpop.xlane.xlu0 %1468
  %v1470 = vsel %vm1128, %v1438, 0.0
  %1471 = vadd.xlane.f32.xlu0 %v1470
  %v1472 = vpop.xlane.xlu0 %1471
  %v1473 = vsel %vm1128, %v1440, 0.0
  %1474 = vadd.xlane.f32.xlu0 %v1473
  %v1475 = vpop.xlane.xlu0 %1474
  %v1476 = vsel %vm1128, %v1442, 0.0
  %1477 = vadd.xlane.f32.xlu0 %v1476
  %v1478 = vpop.xlane.xlu0 %1477
  %v1479 = vsel %vm1128, %v1444, 0.0
  %1480 = vadd.xlane.f32.xlu0 %v1479
  %v1481 = vpop.xlane.xlu0 %1480
  %v1482 = vsel %vm1128, %v1446, 0.0
  %1483 = vadd.xlane.f32.xlu0 %v1482
  %v1484 = vpop.xlane.xlu0 %1483
  %v1485 = vsel %vm1128, %v1448, 0.0
  %1486 = vadd.xlane.f32.xlu0 %v1485
  %v1487 = vpop.xlane.xlu0 %1486
  %v1488 = vsel %vm1128, %v1450, 0.0
  %1489 = vadd.xlane.f32.xlu0 %v1488
  %v1490 = vpop.xlane.xlu0 %1489
  %v1491 = vsel %vm1128, %v1452, 0.0
  %1492 = vadd.xlane.f32.xlu0 %v1491
  %v1493 = vpop.xlane.xlu0 %1492
  %v1494 = vsel %vm1128, %v1454, 0.0
  %1495 = vadd.xlane.f32.xlu0 %v1494
  %v1496 = vpop.xlane.xlu0 %1495
  %v1497 = vsel %vm1128, %v1456, 0.0
  %1498 = vadd.xlane.f32.xlu0 %v1497
  %v1499 = vpop.xlane.xlu0 %1498
  %v1500 = vsel %vm1128, %v1458, 0.0
  %1501 = vadd.xlane.f32.xlu0 %v1500
  %v1502 = vpop.xlane.xlu0 %1501
  %v1503 = vsel %vm1128, %v1460, 0.0
  %1504 = vadd.xlane.f32.xlu0 %v1503
  %v1505 = vpop.xlane.xlu0 %1504
  %v1506 = vsel %vm1128, %v1462, 0.0
  %1507 = vadd.xlane.f32.xlu0 %v1506
  %v1508 = vpop.xlane.xlu0 %1507
  %v1509 = vsel %vm1128, %v1464, 0.0
  %1510 = vadd.xlane.f32.xlu0 %v1509
  %v1511 = vpop.xlane.xlu0 %1510
  %v1512 = vsel %vm1128, %v1466, 0.0
  %1513 = vadd.xlane.f32.xlu0 %v1512
  %v1514 = vpop.xlane.xlu0 %1513
  %v1515 = vrcp.pop %v1469
  %v1516 = vmul.f32 %v1436, %v1515
  %v1517 = vrcp.pop %v1472
  %v1518 = vmul.f32 %v1438, %v1517
  %v1519 = vrcp.pop %v1475
  %v1520 = vmul.f32 %v1440, %v1519
  %v1521 = vrcp.pop %v1478
  %v1522 = vmul.f32 %v1442, %v1521
  %v1523 = vrcp.pop %v1481
  %v1524 = vmul.f32 %v1444, %v1523
  %v1525 = vrcp.pop %v1484
  %v1526 = vmul.f32 %v1446, %v1525
  %v1527 = vrcp.pop %v1487
  %v1528 = vmul.f32 %v1448, %v1527
  %v1529 = vrcp.pop %v1490
  %v1530 = vmul.f32 %v1450, %v1529
  %v1531 = vrcp.pop %v1493
  %v1532 = vmul.f32 %v1452, %v1531
  %v1533 = vrcp.pop %v1496
  %v1534 = vmul.f32 %v1454, %v1533
  %v1535 = vrcp.pop %v1499
  %v1536 = vmul.f32 %v1456, %v1535
  %v1537 = vrcp.pop %v1502
  %v1538 = vmul.f32 %v1458, %v1537
  %v1539 = vrcp.pop %v1505
  %v1540 = vmul.f32 %v1460, %v1539
  %v1541 = vrcp.pop %v1508
  %v1542 = vmul.f32 %v1462, %v1541
  %v1543 = vrcp.pop %v1511
  %v1544 = vmul.f32 %v1464, %v1543
  %v1545 = vrcp.pop %v1514
  %v1546 = vmul.f32 %v1466, %v1545
  %v1548 = vsel %vm1128, %v1516, 0
  %v1551 = vsel %vm1128, %v1518, 0
  %v1554 = vsel %vm1128, %v1520, 0
  %v1557 = vsel %vm1128, %v1522, 0
  %v1560 = vsel %vm1128, %v1524, 0
  %v1563 = vsel %vm1128, %v1526, 0
  %v1566 = vsel %vm1128, %v1528, 0
  %v1569 = vsel %vm1128, %v1530, 0
  %v1572 = vsel %vm1128, %v983, 0
  %v1575 = vsel %vm1128, %v988, 0
  %1577 = vmatprep.subr.mxu0 0.0
  %1578 = vmatpush1.xpose.msra.mxu0 0.0
  %1579 = vmatprep.subr.mxu0 0.0
  %1580 = vmatpush1.xpose.msra.mxu0 0.0
  %1581 = vmatprep.subr.mxu0 0.0
  %1582 = vmatpush1.xpose.msra.mxu0 0.0
  %1583 = vmatprep.subr.mxu0 0.0
  %1584 = vmatpush1.xpose.msra.mxu0 0.0
  %1585 = vmatprep.subr.mxu0 0.0
  %1586 = vmatpush1.xpose.msra.mxu0 0.0
  %1587 = vmatprep.subr.mxu0 0.0
  %1588 = vmatpush1.xpose.msra.mxu0 0.0
  %1589 = vmatprep.subr.mxu0 0.0
  %1590 = vmatpush1.xpose.msra.mxu0 0.0
  %1591 = vmatprep.subr.mxu0 0.0
  %1592 = vmatpush1.xpose.msra.mxu0 0.0
  %1593 = vmatprep.subr.mxu0 0.0
  %1594 = vmatpush1.xpose.msra.mxu0 0.0
  %1595 = vmatprep.subr.mxu0 0.0
  %1596 = vmatpush1.xpose.msra.mxu0 0.0
  %1597 = vmatprep.subr.mxu0 0.0
  %1598 = vmatpush1.xpose.msra.mxu0 0.0
  %1599 = vmatprep.subr.mxu0 0.0
  %1600 = vmatpush1.xpose.msra.mxu0 0.0
  %1601 = vmatprep.subr.mxu0 0.0
  %1602 = vmatpush1.xpose.msra.mxu0 0.0
  %1603 = vmatprep.subr.mxu0 0.0
  %1604 = vmatpush1.xpose.msra.mxu0 0.0
  %1605 = vmatprep.subr.mxu0 0.0
  %1606 = vmatpush1.xpose.msra.mxu0 %v1575
  %1607 = vmatprep.subr.mxu0 0.0
  %1608 = vmatpush1.xpose.msra.mxu0 %v1572
  %1609 = vmatprep.subr.mxu0 0.0
  %1610 = vmatpush2.xpose.msra.mxu0 0.0
  %1611 = vmatprep.subr.mxu0 0.0
  %1612 = vmatpush2.xpose.msra.mxu0 0.0
  %1613 = vmatprep.subr.mxu0 0.0
  %1614 = vmatpush2.xpose.msra.mxu0 0.0
  %1615 = vmatprep.subr.mxu0 0.0
  %1616 = vmatpush2.xpose.msra.mxu0 0.0
  %1617 = vmatprep.subr.mxu0 0.0
  %1618 = vmatpush2.xpose.msra.mxu0 0.0
  %1619 = vmatprep.subr.mxu0 0.0
  %1620 = vmatpush2.xpose.msra.mxu0 0.0
  %1621 = vmatprep.subr.mxu0 0.0
  %1622 = vmatpush2.xpose.msra.mxu0 0.0
  %1623 = vmatprep.subr.mxu0 0.0
  %1624 = vmatpush2.xpose.msra.mxu0 0.0
  %1625 = vmatprep.subr.mxu0 0.0
  %1626 = vmatpush2.xpose.msra.mxu0 0.0
  %1627 = vmatprep.subr.mxu0 0.0
  %1628 = vmatpush2.xpose.msra.mxu0 0.0
  %1629 = vmatprep.subr.mxu0 0.0
  %1630 = vmatpush2.xpose.msra.mxu0 0.0
  %1631 = vmatprep.subr.mxu0 0.0
  %1632 = vmatpush2.xpose.msra.mxu0 0.0
  %1633 = vmatprep.subr.mxu0 0.0
  %1634 = vmatpush2.xpose.msra.mxu0 0.0
  %1635 = vmatprep.subr.mxu0 0.0
  %1636 = vmatpush2.xpose.msra.mxu0 0.0
  %1637 = vmatprep.subr.mxu0 0.0
  %1638 = vmatpush2.xpose.msra.mxu0 0.0
  %1639 = vmatprep.subr.mxu0 0.0
  %1640 = vmatpush2.xpose.msra.mxu0 0.0
  %1641 = vmatprep.mubr.f32.mxu0 0.0
  %1642 = vmatmul.mubr.f32.gmra.mxu0 %v1548
  %v1643 = vpop.f32.mrf.mxu0
  %v1644 = vadd.f32 0.0, %v1643
  %v1645 = vpop.f32.mrf.mxu0
  %1646 = vmatprep.mubr.f32.mxu0 0.0
  %1647 = vmatmul.mubr.f32.gmra.mxu0 %v1551
  %v1648 = vpop.f32.mrf.mxu0
  %v1649 = vadd.f32 0.0, %v1648
  %v1650 = vpop.f32.mrf.mxu0
  %1651 = vmatprep.mubr.f32.mxu0 0.0
  %1652 = vmatmul.mubr.f32.gmra.mxu0 %v1554
  %v1653 = vpop.f32.mrf.mxu0
  %v1654 = vadd.f32 0.0, %v1653
  %v1655 = vpop.f32.mrf.mxu0
  %1656 = vmatprep.mubr.f32.mxu0 0.0
  %1657 = vmatmul.mubr.f32.gmra.mxu0 %v1557
  %v1658 = vpop.f32.mrf.mxu0
  %v1659 = vadd.f32 0.0, %v1658
  %v1660 = vpop.f32.mrf.mxu0
  %1661 = vmatprep.mubr.f32.mxu0 0.0
  %1662 = vmatmul.mubr.f32.gmra.mxu0 %v1560
  %v1663 = vpop.f32.mrf.mxu0
  %v1664 = vadd.f32 0.0, %v1663
  %v1665 = vpop.f32.mrf.mxu0
  %1666 = vmatprep.mubr.f32.mxu0 0.0
  %1667 = vmatmul.mubr.f32.gmra.mxu0 %v1563
  %v1668 = vpop.f32.mrf.mxu0
  %v1669 = vadd.f32 0.0, %v1668
  %v1670 = vpop.f32.mrf.mxu0
  %1671 = vmatprep.mubr.f32.mxu0 0.0
  %1672 = vmatmul.mubr.f32.gmra.mxu0 %v1566
  %v1673 = vpop.f32.mrf.mxu0
  %v1674 = vadd.f32 0.0, %v1673
  %v1675 = vpop.f32.mrf.mxu0
  %1676 = vmatprep.mubr.f32.mxu0 0.0
  %1677 = vmatmul.mubr.f32.gmra.mxu0 %v1569
  %v1678 = vpop.f32.mrf.mxu0
  %v1679 = vadd.f32 0.0, %v1678
  %v1680 = vpop.f32.mrf.mxu0
  %1681 = vdwg.mxu0
  %v1683 = vsel %vm1128, %v1532, 0
  %v1686 = vsel %vm1128, %v1534, 0
  %v1689 = vsel %vm1128, %v1536, 0
  %v1692 = vsel %vm1128, %v1538, 0
  %v1695 = vsel %vm1128, %v1540, 0
  %v1698 = vsel %vm1128, %v1542, 0
  %v1701 = vsel %vm1128, %v1544, 0
  %v1704 = vsel %vm1128, %v1546, 0
  %v1707 = vsel %vm1128, %v1120, 0
  %v1710 = vsel %vm1128, %v1125, 0
  %1712 = vmatprep.subr.mxu0 0.0
  %1713 = vmatpush1.xpose.msra.mxu0 0.0
  %1714 = vmatprep.subr.mxu0 0.0
  %1715 = vmatpush1.xpose.msra.mxu0 0.0
  %1716 = vmatprep.subr.mxu0 0.0
  %1717 = vmatpush1.xpose.msra.mxu0 0.0
  %1718 = vmatprep.subr.mxu0 0.0
  %1719 = vmatpush1.xpose.msra.mxu0 0.0
  %1720 = vmatprep.subr.mxu0 0.0
  %1721 = vmatpush1.xpose.msra.mxu0 0.0
  %1722 = vmatprep.subr.mxu0 0.0
  %1723 = vmatpush1.xpose.msra.mxu0 0.0
  %1724 = vmatprep.subr.mxu0 0.0
  %1725 = vmatpush1.xpose.msra.mxu0 0.0
  %1726 = vmatprep.subr.mxu0 0.0
  %1727 = vmatpush1.xpose.msra.mxu0 0.0
  %1728 = vmatprep.subr.mxu0 0.0
  %1729 = vmatpush1.xpose.msra.mxu0 0.0
  %1730 = vmatprep.subr.mxu0 0.0
  %1731 = vmatpush1.xpose.msra.mxu0 0.0
  %1732 = vmatprep.subr.mxu0 0.0
  %1733 = vmatpush1.xpose.msra.mxu0 0.0
  %1734 = vmatprep.subr.mxu0 0.0
  %1735 = vmatpush1.xpose.msra.mxu0 0.0
  %1736 = vmatprep.subr.mxu0 0.0
  %1737 = vmatpush1.xpose.msra.mxu0 0.0
  %1738 = vmatprep.subr.mxu0 0.0
  %1739 = vmatpush1.xpose.msra.mxu0 0.0
  %1740 = vmatprep.subr.mxu0 0.0
  %1741 = vmatpush1.xpose.msra.mxu0 %v1710
  %1742 = vmatprep.subr.mxu0 0.0
  %1743 = vmatpush1.xpose.msra.mxu0 %v1707
  %1744 = vmatprep.subr.mxu0 0.0
  %1745 = vmatpush2.xpose.msra.mxu0 0.0
  %1746 = vmatprep.subr.mxu0 0.0
  %1747 = vmatpush2.xpose.msra.mxu0 0.0
  %1748 = vmatprep.subr.mxu0 0.0
  %1749 = vmatpush2.xpose.msra.mxu0 0.0
  %1750 = vmatprep.subr.mxu0 0.0
  %1751 = vmatpush2.xpose.msra.mxu0 0.0
  %1752 = vmatprep.subr.mxu0 0.0
  %1753 = vmatpush2.xpose.msra.mxu0 0.0
  %1754 = vmatprep.subr.mxu0 0.0
  %1755 = vmatpush2.xpose.msra.mxu0 0.0
  %1756 = vmatprep.subr.mxu0 0.0
  %1757 = vmatpush2.xpose.msra.mxu0 0.0
  %1758 = vmatprep.subr.mxu0 0.0
  %1759 = vmatpush2.xpose.msra.mxu0 0.0
  %1760 = vmatprep.subr.mxu0 0.0
  %1761 = vmatpush2.xpose.msra.mxu0 0.0
  %1762 = vmatprep.subr.mxu0 0.0
  %1763 = vmatpush2.xpose.msra.mxu0 0.0
  %1764 = vmatprep.subr.mxu0 0.0
  %1765 = vmatpush2.xpose.msra.mxu0 0.0
  %1766 = vmatprep.subr.mxu0 0.0
  %1767 = vmatpush2.xpose.msra.mxu0 0.0
  %1768 = vmatprep.subr.mxu0 0.0
  %1769 = vmatpush2.xpose.msra.mxu0 0.0
  %1770 = vmatprep.subr.mxu0 0.0
  %1771 = vmatpush2.xpose.msra.mxu0 0.0
  %1772 = vmatprep.subr.mxu0 0.0
  %1773 = vmatpush2.xpose.msra.mxu0 0.0
  %1774 = vmatprep.subr.mxu0 0.0
  %1775 = vmatpush2.xpose.msra.mxu0 0.0
  %1776 = vmatprep.mubr.f32.mxu0 0.0
  %1777 = vmatmul.mubr.f32.gmra.mxu0 %v1683
  %v1778 = vpop.f32.mrf.mxu0
  %v1779 = vadd.f32 0.0, %v1778
  %v1780 = vpop.f32.mrf.mxu0
  %1781 = vmatprep.mubr.f32.mxu0 0.0
  %1782 = vmatmul.mubr.f32.gmra.mxu0 %v1686
  %v1783 = vpop.f32.mrf.mxu0
  %v1784 = vadd.f32 0.0, %v1783
  %v1785 = vpop.f32.mrf.mxu0
  %1786 = vmatprep.mubr.f32.mxu0 0.0
  %1787 = vmatmul.mubr.f32.gmra.mxu0 %v1689
  %v1788 = vpop.f32.mrf.mxu0
  %v1789 = vadd.f32 0.0, %v1788
  %v1790 = vpop.f32.mrf.mxu0
  %1791 = vmatprep.mubr.f32.mxu0 0.0
  %1792 = vmatmul.mubr.f32.gmra.mxu0 %v1692
  %v1793 = vpop.f32.mrf.mxu0
  %v1794 = vadd.f32 0.0, %v1793
  %v1795 = vpop.f32.mrf.mxu0
  %1796 = vmatprep.mubr.f32.mxu0 0.0
  %1797 = vmatmul.mubr.f32.gmra.mxu0 %v1695
  %v1798 = vpop.f32.mrf.mxu0
  %v1799 = vadd.f32 0.0, %v1798
  %v1800 = vpop.f32.mrf.mxu0
  %1801 = vmatprep.mubr.f32.mxu0 0.0
  %1802 = vmatmul.mubr.f32.gmra.mxu0 %v1698
  %v1803 = vpop.f32.mrf.mxu0
  %v1804 = vadd.f32 0.0, %v1803
  %v1805 = vpop.f32.mrf.mxu0
  %1806 = vmatprep.mubr.f32.mxu0 0.0
  %1807 = vmatmul.mubr.f32.gmra.mxu0 %v1701
  %v1808 = vpop.f32.mrf.mxu0
  %v1809 = vadd.f32 0.0, %v1808
  %v1810 = vpop.f32.mrf.mxu0
  %1811 = vmatprep.mubr.f32.mxu0 0.0
  %1812 = vmatmul.mubr.f32.gmra.mxu0 %v1704
  %v1813 = vpop.f32.mrf.mxu0
  %v1814 = vadd.f32 0.0, %v1813
  %v1815 = vpop.f32.mrf.mxu0
  %1816 = vdwg.mxu0
  %s1817 = scalar_lea.vmem %s5, 16
  %v1818 = vld [vmem:[%s1817] sm:$0xff]
  %v1819 = vld [vmem:[%s1817 + $0x8] sm:$0xff]
  %v1820 = vmul.f32 %v1818, %v540
  %v1821 = vmul.f32 %v1819, %v540
  %v1822 = vmul.f32 %v1818, %v544
  %v1823 = vmul.f32 %v1819, %v544
  %1824 = vrot.lane.b32.xlu0 %v434, 80
  %v1825 = vpop.permute.xlu0 %1824
  %1826 = vrot.lane.b32.xlu0 %v439, 80
  %v1827 = vpop.permute.xlu0 %1826
  %1828 = vrot.lane.b32.xlu0 %v444, 80
  %v1829 = vpop.permute.xlu0 %1828
  %1830 = vrot.lane.b32.xlu0 %v449, 80
  %v1831 = vpop.permute.xlu0 %1830
  %1832 = vrot.lane.b32.xlu0 %v454, 80
  %v1833 = vpop.permute.xlu0 %1832
  %1834 = vrot.lane.b32.xlu0 %v459, 80
  %v1835 = vpop.permute.xlu0 %1834
  %1836 = vrot.lane.b32.xlu0 %v464, 80
  %v1837 = vpop.permute.xlu0 %1836
  %1838 = vrot.lane.b32.xlu0 %v469, 80
  %v1839 = vpop.permute.xlu0 %1838
  %1848 = vxpose.xlu0.b32.start [1/16] %v1825, 128
  %1849 = vxpose.xlu0.b32.cont [2/16] %v1827, 128
  %1850 = vxpose.xlu0.b32.cont [3/16] %v1829, 128
  %1851 = vxpose.xlu0.b32.cont [4/16] %v1831, 128
  %1852 = vxpose.xlu0.b32.cont [5/16] %v1833, 128
  %1853 = vxpose.xlu0.b32.cont [6/16] %v1835, 128
  %1854 = vxpose.xlu0.b32.cont [7/16] %v1837, 128
  %1855 = vxpose.xlu0.b32.cont [8/16] %v1839, 128
  %1856 = vxpose.xlu0.b32.cont [9/16] 0.0, 128
  %1857 = vxpose.xlu0.b32.cont [10/16] 0.0, 128
  %1858 = vxpose.xlu0.b32.cont [11/16] 0.0, 128
  %1859 = vxpose.xlu0.b32.cont [12/16] 0.0, 128
  %1860 = vxpose.xlu0.b32.cont [13/16] 0.0, 128
  %1861 = vxpose.xlu0.b32.cont [14/16] 0.0, 128
  %1862 = vxpose.xlu0.b32.cont [15/16] 0.0, 128
  %1863 = vxpose.xlu0.b32.end [16/16] 0.0, 128
  %v1864 = vpop.trf.xlu0
  %v1865 = vpop.trf.xlu0
  %v1866 = vpop.trf.xlu0
  %v1867 = vpop.trf.xlu0
  %v1868 = vpop.trf.xlu0
  %v1869 = vpop.trf.xlu0
  %v1870 = vpop.trf.xlu0
  %v1871 = vpop.trf.xlu0
  %v1872 = vpop.trf.xlu0
  %v1873 = vpop.trf.xlu0
  %v1874 = vpop.trf.xlu0
  %v1875 = vpop.trf.xlu0
  %v1876 = vpop.trf.xlu0
  %v1877 = vpop.trf.xlu0
  %v1878 = vpop.trf.xlu0
  %v1879 = vpop.trf.xlu0
  %v1881 = vsel %vm615, %v1864, 0
  %v1884 = vsel %vm615, %v1865, 0
  %v1887 = vsel %vm615, %v1820, 0
  %v1890 = vsel %vm615, %v1821, 0
  %1892 = vmatprep.subr.mxu0 0.0
  %1893 = vmatpush1.xpose.msra.mxu0 0.0
  %1894 = vmatprep.subr.mxu0 0.0
  %1895 = vmatpush1.xpose.msra.mxu0 0.0
  %1896 = vmatprep.subr.mxu0 0.0
  %1897 = vmatpush1.xpose.msra.mxu0 0.0
  %1898 = vmatprep.subr.mxu0 0.0
  %1899 = vmatpush1.xpose.msra.mxu0 0.0
  %1900 = vmatprep.subr.mxu0 0.0
  %1901 = vmatpush1.xpose.msra.mxu0 0.0
  %1902 = vmatprep.subr.mxu0 0.0
  %1903 = vmatpush1.xpose.msra.mxu0 0.0
  %1904 = vmatprep.subr.mxu0 0.0
  %1905 = vmatpush1.xpose.msra.mxu0 0.0
  %1906 = vmatprep.subr.mxu0 0.0
  %1907 = vmatpush1.xpose.msra.mxu0 0.0
  %1908 = vmatprep.subr.mxu0 0.0
  %1909 = vmatpush1.xpose.msra.mxu0 0.0
  %1910 = vmatprep.subr.mxu0 0.0
  %1911 = vmatpush1.xpose.msra.mxu0 0.0
  %1912 = vmatprep.subr.mxu0 0.0
  %1913 = vmatpush1.xpose.msra.mxu0 0.0
  %1914 = vmatprep.subr.mxu0 0.0
  %1915 = vmatpush1.xpose.msra.mxu0 0.0
  %1916 = vmatprep.subr.mxu0 0.0
  %1917 = vmatpush1.xpose.msra.mxu0 0.0
  %1918 = vmatprep.subr.mxu0 0.0
  %1919 = vmatpush1.xpose.msra.mxu0 0.0
  %1920 = vmatprep.subr.mxu0 0.0
  %1921 = vmatpush1.xpose.msra.mxu0 %v1890
  %1922 = vmatprep.subr.mxu0 0.0
  %1923 = vmatpush1.xpose.msra.mxu0 %v1887
  %1924 = vmatprep.subr.mxu0 0.0
  %1925 = vmatpush2.xpose.msra.mxu0 0.0
  %1926 = vmatprep.subr.mxu0 0.0
  %1927 = vmatpush2.xpose.msra.mxu0 0.0
  %1928 = vmatprep.subr.mxu0 0.0
  %1929 = vmatpush2.xpose.msra.mxu0 0.0
  %1930 = vmatprep.subr.mxu0 0.0
  %1931 = vmatpush2.xpose.msra.mxu0 0.0
  %1932 = vmatprep.subr.mxu0 0.0
  %1933 = vmatpush2.xpose.msra.mxu0 0.0
  %1934 = vmatprep.subr.mxu0 0.0
  %1935 = vmatpush2.xpose.msra.mxu0 0.0
  %1936 = vmatprep.subr.mxu0 0.0
  %1937 = vmatpush2.xpose.msra.mxu0 0.0
  %1938 = vmatprep.subr.mxu0 0.0
  %1939 = vmatpush2.xpose.msra.mxu0 0.0
  %1940 = vmatprep.subr.mxu0 0.0
  %1941 = vmatpush2.xpose.msra.mxu0 0.0
  %1942 = vmatprep.subr.mxu0 0.0
  %1943 = vmatpush2.xpose.msra.mxu0 0.0
  %1944 = vmatprep.subr.mxu0 0.0
  %1945 = vmatpush2.xpose.msra.mxu0 0.0
  %1946 = vmatprep.subr.mxu0 0.0
  %1947 = vmatpush2.xpose.msra.mxu0 0.0
  %1948 = vmatprep.subr.mxu0 0.0
  %1949 = vmatpush2.xpose.msra.mxu0 0.0
  %1950 = vmatprep.subr.mxu0 0.0
  %1951 = vmatpush2.xpose.msra.mxu0 0.0
  %1952 = vmatprep.subr.mxu0 0.0
  %1953 = vmatpush2.xpose.msra.mxu0 0.0
  %1954 = vmatprep.subr.mxu0 0.0
  %1955 = vmatpush2.xpose.msra.mxu0 0.0
  %1956 = vmatprep.mubr.f32.mxu0 0.0
  %1957 = vmatmul.mubr.f32.gmra.mxu0 %v1881
  %v1958 = vpop.f32.mrf.mxu0
  %v1959 = vadd.f32 0.0, %v1958
  %v1960 = vpop.f32.mrf.mxu0
  %1961 = vmatprep.mubr.f32.mxu0 0.0
  %1962 = vmatmul.mubr.f32.gmra.mxu0 %v1884
  %v1963 = vpop.f32.mrf.mxu0
  %v1964 = vadd.f32 0.0, %v1963
  %v1965 = vpop.f32.mrf.mxu0
  %1966 = vdwg.mxu0
  %1967 = vrot.lane.b32.xlu0 %v474, 80
  %v1968 = vpop.permute.xlu0 %1967
  %1969 = vrot.lane.b32.xlu0 %v479, 80
  %v1970 = vpop.permute.xlu0 %1969
  %1971 = vrot.lane.b32.xlu0 %v484, 80
  %v1972 = vpop.permute.xlu0 %1971
  %1973 = vrot.lane.b32.xlu0 %v489, 80
  %v1974 = vpop.permute.xlu0 %1973
  %1975 = vrot.lane.b32.xlu0 %v494, 80
  %v1976 = vpop.permute.xlu0 %1975
  %1977 = vrot.lane.b32.xlu0 %v499, 80
  %v1978 = vpop.permute.xlu0 %1977
  %1979 = vrot.lane.b32.xlu0 %v504, 80
  %v1980 = vpop.permute.xlu0 %1979
  %1981 = vrot.lane.b32.xlu0 %v509, 80
  %v1982 = vpop.permute.xlu0 %1981
  %1991 = vxpose.xlu0.b32.start [1/16] %v1968, 128
  %1992 = vxpose.xlu0.b32.cont [2/16] %v1970, 128
  %1993 = vxpose.xlu0.b32.cont [3/16] %v1972, 128
  %1994 = vxpose.xlu0.b32.cont [4/16] %v1974, 128
  %1995 = vxpose.xlu0.b32.cont [5/16] %v1976, 128
  %1996 = vxpose.xlu0.b32.cont [6/16] %v1978, 128
  %1997 = vxpose.xlu0.b32.cont [7/16] %v1980, 128
  %1998 = vxpose.xlu0.b32.cont [8/16] %v1982, 128
  %1999 = vxpose.xlu0.b32.cont [9/16] 0.0, 128
  %2000 = vxpose.xlu0.b32.cont [10/16] 0.0, 128
  %2001 = vxpose.xlu0.b32.cont [11/16] 0.0, 128
  %2002 = vxpose.xlu0.b32.cont [12/16] 0.0, 128
  %2003 = vxpose.xlu0.b32.cont [13/16] 0.0, 128
  %2004 = vxpose.xlu0.b32.cont [14/16] 0.0, 128
  %2005 = vxpose.xlu0.b32.cont [15/16] 0.0, 128
  %2006 = vxpose.xlu0.b32.end [16/16] 0.0, 128
  %v2007 = vpop.trf.xlu0
  %v2008 = vpop.trf.xlu0
  %v2009 = vpop.trf.xlu0
  %v2010 = vpop.trf.xlu0
  %v2011 = vpop.trf.xlu0
  %v2012 = vpop.trf.xlu0
  %v2013 = vpop.trf.xlu0
  %v2014 = vpop.trf.xlu0
  %v2015 = vpop.trf.xlu0
  %v2016 = vpop.trf.xlu0
  %v2017 = vpop.trf.xlu0
  %v2018 = vpop.trf.xlu0
  %v2019 = vpop.trf.xlu0
  %v2020 = vpop.trf.xlu0
  %v2021 = vpop.trf.xlu0
  %v2022 = vpop.trf.xlu0
  %v2024 = vsel %vm615, %v2007, 0
  %v2027 = vsel %vm615, %v2008, 0
  %v2030 = vsel %vm615, %v1822, 0
  %v2033 = vsel %vm615, %v1823, 0
  %2035 = vmatprep.subr.mxu0 0.0
  %2036 = vmatpush1.xpose.msra.mxu0 0.0
  %2037 = vmatprep.subr.mxu0 0.0
  %2038 = vmatpush1.xpose.msra.mxu0 0.0
  %2039 = vmatprep.subr.mxu0 0.0
  %2040 = vmatpush1.xpose.msra.mxu0 0.0
  %2041 = vmatprep.subr.mxu0 0.0
  %2042 = vmatpush1.xpose.msra.mxu0 0.0
  %2043 = vmatprep.subr.mxu0 0.0
  %2044 = vmatpush1.xpose.msra.mxu0 0.0
  %2045 = vmatprep.subr.mxu0 0.0
  %2046 = vmatpush1.xpose.msra.mxu0 0.0
  %2047 = vmatprep.subr.mxu0 0.0
  %2048 = vmatpush1.xpose.msra.mxu0 0.0
  %2049 = vmatprep.subr.mxu0 0.0
  %2050 = vmatpush1.xpose.msra.mxu0 0.0
  %2051 = vmatprep.subr.mxu0 0.0
  %2052 = vmatpush1.xpose.msra.mxu0 0.0
  %2053 = vmatprep.subr.mxu0 0.0
  %2054 = vmatpush1.xpose.msra.mxu0 0.0
  %2055 = vmatprep.subr.mxu0 0.0
  %2056 = vmatpush1.xpose.msra.mxu0 0.0
  %2057 = vmatprep.subr.mxu0 0.0
  %2058 = vmatpush1.xpose.msra.mxu0 0.0
  %2059 = vmatprep.subr.mxu0 0.0
  %2060 = vmatpush1.xpose.msra.mxu0 0.0
  %2061 = vmatprep.subr.mxu0 0.0
  %2062 = vmatpush1.xpose.msra.mxu0 0.0
  %2063 = vmatprep.subr.mxu0 0.0
  %2064 = vmatpush1.xpose.msra.mxu0 %v2033
  %2065 = vmatprep.subr.mxu0 0.0
  %2066 = vmatpush1.xpose.msra.mxu0 %v2030
  %2067 = vmatprep.subr.mxu0 0.0
  %2068 = vmatpush2.xpose.msra.mxu0 0.0
  %2069 = vmatprep.subr.mxu0 0.0
  %2070 = vmatpush2.xpose.msra.mxu0 0.0
  %2071 = vmatprep.subr.mxu0 0.0
  %2072 = vmatpush2.xpose.msra.mxu0 0.0
  %2073 = vmatprep.subr.mxu0 0.0
  %2074 = vmatpush2.xpose.msra.mxu0 0.0
  %2075 = vmatprep.subr.mxu0 0.0
  %2076 = vmatpush2.xpose.msra.mxu0 0.0
  %2077 = vmatprep.subr.mxu0 0.0
  %2078 = vmatpush2.xpose.msra.mxu0 0.0
  %2079 = vmatprep.subr.mxu0 0.0
  %2080 = vmatpush2.xpose.msra.mxu0 0.0
  %2081 = vmatprep.subr.mxu0 0.0
  %2082 = vmatpush2.xpose.msra.mxu0 0.0
  %2083 = vmatprep.subr.mxu0 0.0
  %2084 = vmatpush2.xpose.msra.mxu0 0.0
  %2085 = vmatprep.subr.mxu0 0.0
  %2086 = vmatpush2.xpose.msra.mxu0 0.0
  %2087 = vmatprep.subr.mxu0 0.0
  %2088 = vmatpush2.xpose.msra.mxu0 0.0
  %2089 = vmatprep.subr.mxu0 0.0
  %2090 = vmatpush2.xpose.msra.mxu0 0.0
  %2091 = vmatprep.subr.mxu0 0.0
  %2092 = vmatpush2.xpose.msra.mxu0 0.0
  %2093 = vmatprep.subr.mxu0 0.0
  %2094 = vmatpush2.xpose.msra.mxu0 0.0
  %2095 = vmatprep.subr.mxu0 0.0
  %2096 = vmatpush2.xpose.msra.mxu0 0.0
  %2097 = vmatprep.subr.mxu0 0.0
  %2098 = vmatpush2.xpose.msra.mxu0 0.0
  %2099 = vmatprep.mubr.f32.mxu0 0.0
  %2100 = vmatmul.mubr.f32.gmra.mxu0 %v2024
  %v2101 = vpop.f32.mrf.mxu0
  %v2102 = vadd.f32 0.0, %v2101
  %v2103 = vpop.f32.mrf.mxu0
  %2104 = vmatprep.mubr.f32.mxu0 0.0
  %2105 = vmatmul.mubr.f32.gmra.mxu0 %v2027
  %v2106 = vpop.f32.mrf.mxu0
  %v2107 = vadd.f32 0.0, %v2106
  %v2108 = vpop.f32.mrf.mxu0
  %2109 = vdwg.mxu0
  %2110 = vrot.lane.b32.xlu0 %v434, 48
  %v2111 = vpop.permute.xlu0 %2110
  %2112 = vrot.lane.b32.xlu0 %v439, 48
  %v2113 = vpop.permute.xlu0 %2112
  %2114 = vrot.lane.b32.xlu0 %v444, 48
  %v2115 = vpop.permute.xlu0 %2114
  %2116 = vrot.lane.b32.xlu0 %v449, 48
  %v2117 = vpop.permute.xlu0 %2116
  %2118 = vrot.lane.b32.xlu0 %v454, 48
  %v2119 = vpop.permute.xlu0 %2118
  %2120 = vrot.lane.b32.xlu0 %v459, 48
  %v2121 = vpop.permute.xlu0 %2120
  %2122 = vrot.lane.b32.xlu0 %v464, 48
  %v2123 = vpop.permute.xlu0 %2122
  %2124 = vrot.lane.b32.xlu0 %v469, 48
  %v2125 = vpop.permute.xlu0 %2124
  %2134 = vxpose.xlu0.b32.start [1/16] %v2111, 128
  %2135 = vxpose.xlu0.b32.cont [2/16] %v2113, 128
  %2136 = vxpose.xlu0.b32.cont [3/16] %v2115, 128
  %2137 = vxpose.xlu0.b32.cont [4/16] %v2117, 128
  %2138 = vxpose.xlu0.b32.cont [5/16] %v2119, 128
  %2139 = vxpose.xlu0.b32.cont [6/16] %v2121, 128
  %2140 = vxpose.xlu0.b32.cont [7/16] %v2123, 128
  %2141 = vxpose.xlu0.b32.cont [8/16] %v2125, 128
  %2142 = vxpose.xlu0.b32.cont [9/16] 0.0, 128
  %2143 = vxpose.xlu0.b32.cont [10/16] 0.0, 128
  %2144 = vxpose.xlu0.b32.cont [11/16] 0.0, 128
  %2145 = vxpose.xlu0.b32.cont [12/16] 0.0, 128
  %2146 = vxpose.xlu0.b32.cont [13/16] 0.0, 128
  %2147 = vxpose.xlu0.b32.cont [14/16] 0.0, 128
  %2148 = vxpose.xlu0.b32.cont [15/16] 0.0, 128
  %2149 = vxpose.xlu0.b32.end [16/16] 0.0, 128
  %v2150 = vpop.trf.xlu0
  %v2151 = vpop.trf.xlu0
  %v2152 = vpop.trf.xlu0
  %v2153 = vpop.trf.xlu0
  %v2154 = vpop.trf.xlu0
  %v2155 = vpop.trf.xlu0
  %v2156 = vpop.trf.xlu0
  %v2157 = vpop.trf.xlu0
  %v2158 = vpop.trf.xlu0
  %v2159 = vpop.trf.xlu0
  %v2160 = vpop.trf.xlu0
  %v2161 = vpop.trf.xlu0
  %v2162 = vpop.trf.xlu0
  %v2163 = vpop.trf.xlu0
  %v2164 = vpop.trf.xlu0
  %v2165 = vpop.trf.xlu0
  %v2167 = vsel %vm615, %v2150, 0
  %v2170 = vsel %vm615, %v2151, 0
  %2172 = vmatprep.subr.mxu0 0.0
  %2173 = vmatpush1.xpose.msra.mxu0 0.0
  %2174 = vmatprep.subr.mxu0 0.0
  %2175 = vmatpush1.xpose.msra.mxu0 0.0
  %2176 = vmatprep.subr.mxu0 0.0
  %2177 = vmatpush1.xpose.msra.mxu0 0.0
  %2178 = vmatprep.subr.mxu0 0.0
  %2179 = vmatpush1.xpose.msra.mxu0 0.0
  %2180 = vmatprep.subr.mxu0 0.0
  %2181 = vmatpush1.xpose.msra.mxu0 0.0
  %2182 = vmatprep.subr.mxu0 0.0
  %2183 = vmatpush1.xpose.msra.mxu0 0.0
  %2184 = vmatprep.subr.mxu0 0.0
  %2185 = vmatpush1.xpose.msra.mxu0 0.0
  %2186 = vmatprep.subr.mxu0 0.0
  %2187 = vmatpush1.xpose.msra.mxu0 0.0
  %2188 = vmatprep.subr.mxu0 0.0
  %2189 = vmatpush1.xpose.msra.mxu0 0.0
  %2190 = vmatprep.subr.mxu0 0.0
  %2191 = vmatpush1.xpose.msra.mxu0 0.0
  %2192 = vmatprep.subr.mxu0 0.0
  %2193 = vmatpush1.xpose.msra.mxu0 0.0
  %2194 = vmatprep.subr.mxu0 0.0
  %2195 = vmatpush1.xpose.msra.mxu0 0.0
  %2196 = vmatprep.subr.mxu0 0.0
  %2197 = vmatpush1.xpose.msra.mxu0 0.0
  %2198 = vmatprep.subr.mxu0 0.0
  %2199 = vmatpush1.xpose.msra.mxu0 0.0
  %2200 = vmatprep.subr.mxu0 0.0
  %2201 = vmatpush1.xpose.msra.mxu0 %v1890
  %2202 = vmatprep.subr.mxu0 0.0
  %2203 = vmatpush1.xpose.msra.mxu0 %v1887
  %2204 = vmatprep.subr.mxu0 0.0
  %2205 = vmatpush2.xpose.msra.mxu0 0.0
  %2206 = vmatprep.subr.mxu0 0.0
  %2207 = vmatpush2.xpose.msra.mxu0 0.0
  %2208 = vmatprep.subr.mxu0 0.0
  %2209 = vmatpush2.xpose.msra.mxu0 0.0
  %2210 = vmatprep.subr.mxu0 0.0
  %2211 = vmatpush2.xpose.msra.mxu0 0.0
  %2212 = vmatprep.subr.mxu0 0.0
  %2213 = vmatpush2.xpose.msra.mxu0 0.0
  %2214 = vmatprep.subr.mxu0 0.0
  %2215 = vmatpush2.xpose.msra.mxu0 0.0
  %2216 = vmatprep.subr.mxu0 0.0
  %2217 = vmatpush2.xpose.msra.mxu0 0.0
  %2218 = vmatprep.subr.mxu0 0.0
  %2219 = vmatpush2.xpose.msra.mxu0 0.0
  %2220 = vmatprep.subr.mxu0 0.0
  %2221 = vmatpush2.xpose.msra.mxu0 0.0
  %2222 = vmatprep.subr.mxu0 0.0
  %2223 = vmatpush2.xpose.msra.mxu0 0.0
  %2224 = vmatprep.subr.mxu0 0.0
  %2225 = vmatpush2.xpose.msra.mxu0 0.0
  %2226 = vmatprep.subr.mxu0 0.0
  %2227 = vmatpush2.xpose.msra.mxu0 0.0
  %2228 = vmatprep.subr.mxu0 0.0
  %2229 = vmatpush2.xpose.msra.mxu0 0.0
  %2230 = vmatprep.subr.mxu0 0.0
  %2231 = vmatpush2.xpose.msra.mxu0 0.0
  %2232 = vmatprep.subr.mxu0 0.0
  %2233 = vmatpush2.xpose.msra.mxu0 0.0
  %2234 = vmatprep.subr.mxu0 0.0
  %2235 = vmatpush2.xpose.msra.mxu0 0.0
  %2236 = vmatprep.mubr.f32.mxu0 0.0
  %2237 = vmatmul.mubr.f32.gmra.mxu0 %v2167
  %v2238 = vpop.f32.mrf.mxu0
  %v2239 = vadd.f32 0.0, %v2238
  %v2240 = vpop.f32.mrf.mxu0
  %2241 = vmatprep.mubr.f32.mxu0 0.0
  %2242 = vmatmul.mubr.f32.gmra.mxu0 %v2170
  %v2243 = vpop.f32.mrf.mxu0
  %v2244 = vadd.f32 0.0, %v2243
  %v2245 = vpop.f32.mrf.mxu0
  %2246 = vdwg.mxu0
  %2247 = vrot.lane.b32.xlu0 %v474, 48
  %v2248 = vpop.permute.xlu0 %2247
  %2249 = vrot.lane.b32.xlu0 %v479, 48
  %v2250 = vpop.permute.xlu0 %2249
  %2251 = vrot.lane.b32.xlu0 %v484, 48
  %v2252 = vpop.permute.xlu0 %2251
  %2253 = vrot.lane.b32.xlu0 %v489, 48
  %v2254 = vpop.permute.xlu0 %2253
  %2255 = vrot.lane.b32.xlu0 %v494, 48
  %v2256 = vpop.permute.xlu0 %2255
  %2257 = vrot.lane.b32.xlu0 %v499, 48
  %v2258 = vpop.permute.xlu0 %2257
  %2259 = vrot.lane.b32.xlu0 %v504, 48
  %v2260 = vpop.permute.xlu0 %2259
  %2261 = vrot.lane.b32.xlu0 %v509, 48
  %v2262 = vpop.permute.xlu0 %2261
  %2271 = vxpose.xlu0.b32.start [1/16] %v2248, 128
  %2272 = vxpose.xlu0.b32.cont [2/16] %v2250, 128
  %2273 = vxpose.xlu0.b32.cont [3/16] %v2252, 128
  %2274 = vxpose.xlu0.b32.cont [4/16] %v2254, 128
  %2275 = vxpose.xlu0.b32.cont [5/16] %v2256, 128
  %2276 = vxpose.xlu0.b32.cont [6/16] %v2258, 128
  %2277 = vxpose.xlu0.b32.cont [7/16] %v2260, 128
  %2278 = vxpose.xlu0.b32.cont [8/16] %v2262, 128
  %2279 = vxpose.xlu0.b32.cont [9/16] 0.0, 128
  %2280 = vxpose.xlu0.b32.cont [10/16] 0.0, 128
  %2281 = vxpose.xlu0.b32.cont [11/16] 0.0, 128
  %2282 = vxpose.xlu0.b32.cont [12/16] 0.0, 128
  %2283 = vxpose.xlu0.b32.cont [13/16] 0.0, 128
  %2284 = vxpose.xlu0.b32.cont [14/16] 0.0, 128
  %2285 = vxpose.xlu0.b32.cont [15/16] 0.0, 128
  %2286 = vxpose.xlu0.b32.end [16/16] 0.0, 128
  %v2287 = vpop.trf.xlu0
  %v2288 = vpop.trf.xlu0
  %v2289 = vpop.trf.xlu0
  %v2290 = vpop.trf.xlu0
  %v2291 = vpop.trf.xlu0
  %v2292 = vpop.trf.xlu0
  %v2293 = vpop.trf.xlu0
  %v2294 = vpop.trf.xlu0
  %v2295 = vpop.trf.xlu0
  %v2296 = vpop.trf.xlu0
  %v2297 = vpop.trf.xlu0
  %v2298 = vpop.trf.xlu0
  %v2299 = vpop.trf.xlu0
  %v2300 = vpop.trf.xlu0
  %v2301 = vpop.trf.xlu0
  %v2302 = vpop.trf.xlu0
  %v2304 = vsel %vm615, %v2287, 0
  %v2307 = vsel %vm615, %v2288, 0
  %2309 = vmatprep.subr.mxu0 0.0
  %2310 = vmatpush1.xpose.msra.mxu0 0.0
  %2311 = vmatprep.subr.mxu0 0.0
  %2312 = vmatpush1.xpose.msra.mxu0 0.0
  %2313 = vmatprep.subr.mxu0 0.0
  %2314 = vmatpush1.xpose.msra.mxu0 0.0
  %2315 = vmatprep.subr.mxu0 0.0
  %2316 = vmatpush1.xpose.msra.mxu0 0.0
  %2317 = vmatprep.subr.mxu0 0.0
  %2318 = vmatpush1.xpose.msra.mxu0 0.0
  %2319 = vmatprep.subr.mxu0 0.0
  %2320 = vmatpush1.xpose.msra.mxu0 0.0
  %2321 = vmatprep.subr.mxu0 0.0
  %2322 = vmatpush1.xpose.msra.mxu0 0.0
  %2323 = vmatprep.subr.mxu0 0.0
  %2324 = vmatpush1.xpose.msra.mxu0 0.0
  %2325 = vmatprep.subr.mxu0 0.0
  %2326 = vmatpush1.xpose.msra.mxu0 0.0
  %2327 = vmatprep.subr.mxu0 0.0
  %2328 = vmatpush1.xpose.msra.mxu0 0.0
  %2329 = vmatprep.subr.mxu0 0.0
  %2330 = vmatpush1.xpose.msra.mxu0 0.0
  %2331 = vmatprep.subr.mxu0 0.0
  %2332 = vmatpush1.xpose.msra.mxu0 0.0
  %2333 = vmatprep.subr.mxu0 0.0
  %2334 = vmatpush1.xpose.msra.mxu0 0.0
  %2335 = vmatprep.subr.mxu0 0.0
  %2336 = vmatpush1.xpose.msra.mxu0 0.0
  %2337 = vmatprep.subr.mxu0 0.0
  %2338 = vmatpush1.xpose.msra.mxu0 %v2033
  %2339 = vmatprep.subr.mxu0 0.0
  %2340 = vmatpush1.xpose.msra.mxu0 %v2030
  %2341 = vmatprep.subr.mxu0 0.0
  %2342 = vmatpush2.xpose.msra.mxu0 0.0
  %2343 = vmatprep.subr.mxu0 0.0
  %2344 = vmatpush2.xpose.msra.mxu0 0.0
  %2345 = vmatprep.subr.mxu0 0.0
  %2346 = vmatpush2.xpose.msra.mxu0 0.0
  %2347 = vmatprep.subr.mxu0 0.0
  %2348 = vmatpush2.xpose.msra.mxu0 0.0
  %2349 = vmatprep.subr.mxu0 0.0
  %2350 = vmatpush2.xpose.msra.mxu0 0.0
  %2351 = vmatprep.subr.mxu0 0.0
  %2352 = vmatpush2.xpose.msra.mxu0 0.0
  %2353 = vmatprep.subr.mxu0 0.0
  %2354 = vmatpush2.xpose.msra.mxu0 0.0
  %2355 = vmatprep.subr.mxu0 0.0
  %2356 = vmatpush2.xpose.msra.mxu0 0.0
  %2357 = vmatprep.subr.mxu0 0.0
  %2358 = vmatpush2.xpose.msra.mxu0 0.0
  %2359 = vmatprep.subr.mxu0 0.0
  %2360 = vmatpush2.xpose.msra.mxu0 0.0
  %2361 = vmatprep.subr.mxu0 0.0
  %2362 = vmatpush2.xpose.msra.mxu0 0.0
  %2363 = vmatprep.subr.mxu0 0.0
  %2364 = vmatpush2.xpose.msra.mxu0 0.0
  %2365 = vmatprep.subr.mxu0 0.0
  %2366 = vmatpush2.xpose.msra.mxu0 0.0
  %2367 = vmatprep.subr.mxu0 0.0
  %2368 = vmatpush2.xpose.msra.mxu0 0.0
  %2369 = vmatprep.subr.mxu0 0.0
  %2370 = vmatpush2.xpose.msra.mxu0 0.0
  %2371 = vmatprep.subr.mxu0 0.0
  %2372 = vmatpush2.xpose.msra.mxu0 0.0
  %2373 = vmatprep.mubr.f32.mxu0 0.0
  %2374 = vmatmul.mubr.f32.gmra.mxu0 %v2304
  %v2375 = vpop.f32.mrf.mxu0
  %v2376 = vadd.f32 0.0, %v2375
  %v2377 = vpop.f32.mrf.mxu0
  %2378 = vmatprep.mubr.f32.mxu0 0.0
  %2379 = vmatmul.mubr.f32.gmra.mxu0 %v2307
  %v2380 = vpop.f32.mrf.mxu0
  %v2381 = vadd.f32 0.0, %v2380
  %v2382 = vpop.f32.mrf.mxu0
  %2383 = vdwg.mxu0
  %2384 = vrot.lane.b32.xlu0 %v434, 112
  %v2385 = vpop.permute.xlu0 %2384
  %2386 = vrot.lane.b32.xlu0 %v439, 112
  %v2387 = vpop.permute.xlu0 %2386
  %2388 = vrot.lane.b32.xlu0 %v444, 112
  %v2389 = vpop.permute.xlu0 %2388
  %2390 = vrot.lane.b32.xlu0 %v449, 112
  %v2391 = vpop.permute.xlu0 %2390
  %2392 = vrot.lane.b32.xlu0 %v454, 112
  %v2393 = vpop.permute.xlu0 %2392
  %2394 = vrot.lane.b32.xlu0 %v459, 112
  %v2395 = vpop.permute.xlu0 %2394
  %2396 = vrot.lane.b32.xlu0 %v464, 112
  %v2397 = vpop.permute.xlu0 %2396
  %2398 = vrot.lane.b32.xlu0 %v469, 112
  %v2399 = vpop.permute.xlu0 %2398
  %v2400 = vsel %vm1128, %v2385, 0
  %v2402 = vsel %vm1128, %v2387, 0
  %v2404 = vsel %vm1128, %v2389, 0
  %v2406 = vsel %vm1128, %v2391, 0
  %v2408 = vsel %vm1128, %v2393, 0
  %v2410 = vsel %vm1128, %v2395, 0
  %v2412 = vsel %vm1128, %v2397, 0
  %v2414 = vsel %vm1128, %v2399, 0
  %2416 = vmatprep.subr.mxu0 0.0
  %2417 = vmatpush1.msra.mxu0 0.0
  %2418 = vmatprep.subr.mxu0 0.0
  %2419 = vmatpush1.msra.mxu0 0.0
  %2420 = vmatprep.subr.mxu0 0.0
  %2421 = vmatpush1.msra.mxu0 0.0
  %2422 = vmatprep.subr.mxu0 0.0
  %2423 = vmatpush1.msra.mxu0 0.0
  %2424 = vmatprep.subr.mxu0 0.0
  %2425 = vmatpush1.msra.mxu0 0.0
  %2426 = vmatprep.subr.mxu0 0.0
  %2427 = vmatpush1.msra.mxu0 0.0
  %2428 = vmatprep.subr.mxu0 0.0
  %2429 = vmatpush1.msra.mxu0 0.0
  %2430 = vmatprep.subr.mxu0 0.0
  %2431 = vmatpush1.msra.mxu0 0.0
  %2432 = vmatprep.subr.mxu0 0.0
  %2433 = vmatpush1.msra.mxu0 0.0
  %2434 = vmatprep.subr.mxu0 0.0
  %2435 = vmatpush1.msra.mxu0 0.0
  %2436 = vmatprep.subr.mxu0 0.0
  %2437 = vmatpush1.msra.mxu0 0.0
  %2438 = vmatprep.subr.mxu0 0.0
  %2439 = vmatpush1.msra.mxu0 0.0
  %2440 = vmatprep.subr.mxu0 0.0
  %2441 = vmatpush1.msra.mxu0 0.0
  %2442 = vmatprep.subr.mxu0 0.0
  %2443 = vmatpush1.msra.mxu0 0.0
  %2444 = vmatprep.subr.mxu0 0.0
  %2445 = vmatpush1.msra.mxu0 %v1964
  %2446 = vmatprep.subr.mxu0 0.0
  %2447 = vmatpush1.msra.mxu0 %v1959
  %2448 = vmatprep.subr.mxu0 0.0
  %2449 = vmatpush2.msra.mxu0 0.0
  %2450 = vmatprep.subr.mxu0 0.0
  %2451 = vmatpush2.msra.mxu0 0.0
  %2452 = vmatprep.subr.mxu0 0.0
  %2453 = vmatpush2.msra.mxu0 0.0
  %2454 = vmatprep.subr.mxu0 0.0
  %2455 = vmatpush2.msra.mxu0 0.0
  %2456 = vmatprep.subr.mxu0 0.0
  %2457 = vmatpush2.msra.mxu0 0.0
  %2458 = vmatprep.subr.mxu0 0.0
  %2459 = vmatpush2.msra.mxu0 0.0
  %2460 = vmatprep.subr.mxu0 0.0
  %2461 = vmatpush2.msra.mxu0 0.0
  %2462 = vmatprep.subr.mxu0 0.0
  %2463 = vmatpush2.msra.mxu0 0.0
  %2464 = vmatprep.subr.mxu0 0.0
  %2465 = vmatpush2.msra.mxu0 0.0
  %2466 = vmatprep.subr.mxu0 0.0
  %2467 = vmatpush2.msra.mxu0 0.0
  %2468 = vmatprep.subr.mxu0 0.0
  %2469 = vmatpush2.msra.mxu0 0.0
  %2470 = vmatprep.subr.mxu0 0.0
  %2471 = vmatpush2.msra.mxu0 0.0
  %2472 = vmatprep.subr.mxu0 0.0
  %2473 = vmatpush2.msra.mxu0 0.0
  %2474 = vmatprep.subr.mxu0 0.0
  %2475 = vmatpush2.msra.mxu0 0.0
  %2476 = vmatprep.subr.mxu0 0.0
  %2477 = vmatpush2.msra.mxu0 0.0
  %2478 = vmatprep.subr.mxu0 0.0
  %2479 = vmatpush2.msra.mxu0 0.0
  %2480 = vmatprep.mubr.f32.mxu0 0.0
  %2481 = vmatmul.mubr.f32.gmra.mxu0 %v2400
  %v2482 = vpop.f32.mrf.mxu0
  %v2483 = vadd.f32 0.0, %v2482
  %v2484 = vpop.f32.mrf.mxu0
  %2485 = vmatprep.mubr.f32.mxu0 0.0
  %2486 = vmatmul.mubr.f32.gmra.mxu0 %v2402
  %v2487 = vpop.f32.mrf.mxu0
  %v2488 = vadd.f32 0.0, %v2487
  %v2489 = vpop.f32.mrf.mxu0
  %2490 = vmatprep.mubr.f32.mxu0 0.0
  %2491 = vmatmul.mubr.f32.gmra.mxu0 %v2404
  %v2492 = vpop.f32.mrf.mxu0
  %v2493 = vadd.f32 0.0, %v2492
  %v2494 = vpop.f32.mrf.mxu0
  %2495 = vmatprep.mubr.f32.mxu0 0.0
  %2496 = vmatmul.mubr.f32.gmra.mxu0 %v2406
  %v2497 = vpop.f32.mrf.mxu0
  %v2498 = vadd.f32 0.0, %v2497
  %v2499 = vpop.f32.mrf.mxu0
  %2500 = vmatprep.mubr.f32.mxu0 0.0
  %2501 = vmatmul.mubr.f32.gmra.mxu0 %v2408
  %v2502 = vpop.f32.mrf.mxu0
  %v2503 = vadd.f32 0.0, %v2502
  %v2504 = vpop.f32.mrf.mxu0
  %2505 = vmatprep.mubr.f32.mxu0 0.0
  %2506 = vmatmul.mubr.f32.gmra.mxu0 %v2410
  %v2507 = vpop.f32.mrf.mxu0
  %v2508 = vadd.f32 0.0, %v2507
  %v2509 = vpop.f32.mrf.mxu0
  %2510 = vmatprep.mubr.f32.mxu0 0.0
  %2511 = vmatmul.mubr.f32.gmra.mxu0 %v2412
  %v2512 = vpop.f32.mrf.mxu0
  %v2513 = vadd.f32 0.0, %v2512
  %v2514 = vpop.f32.mrf.mxu0
  %2515 = vmatprep.mubr.f32.mxu0 0.0
  %2516 = vmatmul.mubr.f32.gmra.mxu0 %v2414
  %v2517 = vpop.f32.mrf.mxu0
  %v2518 = vadd.f32 0.0, %v2517
  %v2519 = vpop.f32.mrf.mxu0
  %2520 = vdwg.mxu0
  %2521 = vrot.lane.b32.xlu0 %v474, 112
  %v2522 = vpop.permute.xlu0 %2521
  %2523 = vrot.lane.b32.xlu0 %v479, 112
  %v2524 = vpop.permute.xlu0 %2523
  %2525 = vrot.lane.b32.xlu0 %v484, 112
  %v2526 = vpop.permute.xlu0 %2525
  %2527 = vrot.lane.b32.xlu0 %v489, 112
  %v2528 = vpop.permute.xlu0 %2527
  %2529 = vrot.lane.b32.xlu0 %v494, 112
  %v2530 = vpop.permute.xlu0 %2529
  %2531 = vrot.lane.b32.xlu0 %v499, 112
  %v2532 = vpop.permute.xlu0 %2531
  %2533 = vrot.lane.b32.xlu0 %v504, 112
  %v2534 = vpop.permute.xlu0 %2533
  %2535 = vrot.lane.b32.xlu0 %v509, 112
  %v2536 = vpop.permute.xlu0 %2535
  %v2537 = vsel %vm1128, %v2522, 0
  %v2539 = vsel %vm1128, %v2524, 0
  %v2541 = vsel %vm1128, %v2526, 0
  %v2543 = vsel %vm1128, %v2528, 0
  %v2545 = vsel %vm1128, %v2530, 0
  %v2547 = vsel %vm1128, %v2532, 0
  %v2549 = vsel %vm1128, %v2534, 0
  %v2551 = vsel %vm1128, %v2536, 0
  %2553 = vmatprep.subr.mxu0 0.0
  %2554 = vmatpush1.msra.mxu0 0.0
  %2555 = vmatprep.subr.mxu0 0.0
  %2556 = vmatpush1.msra.mxu0 0.0
  %2557 = vmatprep.subr.mxu0 0.0
  %2558 = vmatpush1.msra.mxu0 0.0
  %2559 = vmatprep.subr.mxu0 0.0
  %2560 = vmatpush1.msra.mxu0 0.0
  %2561 = vmatprep.subr.mxu0 0.0
  %2562 = vmatpush1.msra.mxu0 0.0
  %2563 = vmatprep.subr.mxu0 0.0
  %2564 = vmatpush1.msra.mxu0 0.0
  %2565 = vmatprep.subr.mxu0 0.0
  %2566 = vmatpush1.msra.mxu0 0.0
  %2567 = vmatprep.subr.mxu0 0.0
  %2568 = vmatpush1.msra.mxu0 0.0
  %2569 = vmatprep.subr.mxu0 0.0
  %2570 = vmatpush1.msra.mxu0 0.0
  %2571 = vmatprep.subr.mxu0 0.0
  %2572 = vmatpush1.msra.mxu0 0.0
  %2573 = vmatprep.subr.mxu0 0.0
  %2574 = vmatpush1.msra.mxu0 0.0
  %2575 = vmatprep.subr.mxu0 0.0
  %2576 = vmatpush1.msra.mxu0 0.0
  %2577 = vmatprep.subr.mxu0 0.0
  %2578 = vmatpush1.msra.mxu0 0.0
  %2579 = vmatprep.subr.mxu0 0.0
  %2580 = vmatpush1.msra.mxu0 0.0
  %2581 = vmatprep.subr.mxu0 0.0
  %2582 = vmatpush1.msra.mxu0 %v2107
  %2583 = vmatprep.subr.mxu0 0.0
  %2584 = vmatpush1.msra.mxu0 %v2102
  %2585 = vmatprep.subr.mxu0 0.0
  %2586 = vmatpush2.msra.mxu0 0.0
  %2587 = vmatprep.subr.mxu0 0.0
  %2588 = vmatpush2.msra.mxu0 0.0
  %2589 = vmatprep.subr.mxu0 0.0
  %2590 = vmatpush2.msra.mxu0 0.0
  %2591 = vmatprep.subr.mxu0 0.0
  %2592 = vmatpush2.msra.mxu0 0.0
  %2593 = vmatprep.subr.mxu0 0.0
  %2594 = vmatpush2.msra.mxu0 0.0
  %2595 = vmatprep.subr.mxu0 0.0
  %2596 = vmatpush2.msra.mxu0 0.0
  %2597 = vmatprep.subr.mxu0 0.0
  %2598 = vmatpush2.msra.mxu0 0.0
  %2599 = vmatprep.subr.mxu0 0.0
  %2600 = vmatpush2.msra.mxu0 0.0
  %2601 = vmatprep.subr.mxu0 0.0
  %2602 = vmatpush2.msra.mxu0 0.0
  %2603 = vmatprep.subr.mxu0 0.0
  %2604 = vmatpush2.msra.mxu0 0.0
  %2605 = vmatprep.subr.mxu0 0.0
  %2606 = vmatpush2.msra.mxu0 0.0
  %2607 = vmatprep.subr.mxu0 0.0
  %2608 = vmatpush2.msra.mxu0 0.0
  %2609 = vmatprep.subr.mxu0 0.0
  %2610 = vmatpush2.msra.mxu0 0.0
  %2611 = vmatprep.subr.mxu0 0.0
  %2612 = vmatpush2.msra.mxu0 0.0
  %2613 = vmatprep.subr.mxu0 0.0
  %2614 = vmatpush2.msra.mxu0 0.0
  %2615 = vmatprep.subr.mxu0 0.0
  %2616 = vmatpush2.msra.mxu0 0.0
  %2617 = vmatprep.mubr.f32.mxu0 0.0
  %2618 = vmatmul.mubr.f32.gmra.mxu0 %v2537
  %v2619 = vpop.f32.mrf.mxu0
  %v2620 = vadd.f32 0.0, %v2619
  %v2621 = vpop.f32.mrf.mxu0
  %2622 = vmatprep.mubr.f32.mxu0 0.0
  %2623 = vmatmul.mubr.f32.gmra.mxu0 %v2539
  %v2624 = vpop.f32.mrf.mxu0
  %v2625 = vadd.f32 0.0, %v2624
  %v2626 = vpop.f32.mrf.mxu0
  %2627 = vmatprep.mubr.f32.mxu0 0.0
  %2628 = vmatmul.mubr.f32.gmra.mxu0 %v2541
  %v2629 = vpop.f32.mrf.mxu0
  %v2630 = vadd.f32 0.0, %v2629
  %v2631 = vpop.f32.mrf.mxu0
  %2632 = vmatprep.mubr.f32.mxu0 0.0
  %2633 = vmatmul.mubr.f32.gmra.mxu0 %v2543
  %v2634 = vpop.f32.mrf.mxu0
  %v2635 = vadd.f32 0.0, %v2634
  %v2636 = vpop.f32.mrf.mxu0
  %2637 = vmatprep.mubr.f32.mxu0 0.0
  %2638 = vmatmul.mubr.f32.gmra.mxu0 %v2545
  %v2639 = vpop.f32.mrf.mxu0
  %v2640 = vadd.f32 0.0, %v2639
  %v2641 = vpop.f32.mrf.mxu0
  %2642 = vmatprep.mubr.f32.mxu0 0.0
  %2643 = vmatmul.mubr.f32.gmra.mxu0 %v2547
  %v2644 = vpop.f32.mrf.mxu0
  %v2645 = vadd.f32 0.0, %v2644
  %v2646 = vpop.f32.mrf.mxu0
  %2647 = vmatprep.mubr.f32.mxu0 0.0
  %2648 = vmatmul.mubr.f32.gmra.mxu0 %v2549
  %v2649 = vpop.f32.mrf.mxu0
  %v2650 = vadd.f32 0.0, %v2649
  %v2651 = vpop.f32.mrf.mxu0
  %2652 = vmatprep.mubr.f32.mxu0 0.0
  %2653 = vmatmul.mubr.f32.gmra.mxu0 %v2551
  %v2654 = vpop.f32.mrf.mxu0
  %v2655 = vadd.f32 0.0, %v2654
  %v2656 = vpop.f32.mrf.mxu0
  %2657 = vdwg.mxu0
  %v2658 = vsel %vm1128, %v2483, -inf
  %2659 = vmax.xlane.f32.xlu0 %v2658
  %v2660 = vpop.xlane.xlu0 %2659
  %v2661 = vsel %vm1128, %v2488, -inf
  %2662 = vmax.xlane.f32.xlu0 %v2661
  %v2663 = vpop.xlane.xlu0 %2662
  %v2664 = vsel %vm1128, %v2493, -inf
  %2665 = vmax.xlane.f32.xlu0 %v2664
  %v2666 = vpop.xlane.xlu0 %2665
  %v2667 = vsel %vm1128, %v2498, -inf
  %2668 = vmax.xlane.f32.xlu0 %v2667
  %v2669 = vpop.xlane.xlu0 %2668
  %v2670 = vsel %vm1128, %v2503, -inf
  %2671 = vmax.xlane.f32.xlu0 %v2670
  %v2672 = vpop.xlane.xlu0 %2671
  %v2673 = vsel %vm1128, %v2508, -inf
  %2674 = vmax.xlane.f32.xlu0 %v2673
  %v2675 = vpop.xlane.xlu0 %2674
  %v2676 = vsel %vm1128, %v2513, -inf
  %2677 = vmax.xlane.f32.xlu0 %v2676
  %v2678 = vpop.xlane.xlu0 %2677
  %v2679 = vsel %vm1128, %v2518, -inf
  %2680 = vmax.xlane.f32.xlu0 %v2679
  %v2681 = vpop.xlane.xlu0 %2680
  %v2682 = vsel %vm1128, %v2620, -inf
  %2683 = vmax.xlane.f32.xlu0 %v2682
  %v2684 = vpop.xlane.xlu0 %2683
  %v2685 = vsel %vm1128, %v2625, -inf
  %2686 = vmax.xlane.f32.xlu0 %v2685
  %v2687 = vpop.xlane.xlu0 %2686
  %v2688 = vsel %vm1128, %v2630, -inf
  %2689 = vmax.xlane.f32.xlu0 %v2688
  %v2690 = vpop.xlane.xlu0 %2689
  %v2691 = vsel %vm1128, %v2635, -inf
  %2692 = vmax.xlane.f32.xlu0 %v2691
  %v2693 = vpop.xlane.xlu0 %2692
  %v2694 = vsel %vm1128, %v2640, -inf
  %2695 = vmax.xlane.f32.xlu0 %v2694
  %v2696 = vpop.xlane.xlu0 %2695
  %v2697 = vsel %vm1128, %v2645, -inf
  %2698 = vmax.xlane.f32.xlu0 %v2697
  %v2699 = vpop.xlane.xlu0 %2698
  %v2700 = vsel %vm1128, %v2650, -inf
  %2701 = vmax.xlane.f32.xlu0 %v2700
  %v2702 = vpop.xlane.xlu0 %2701
  %v2703 = vsel %vm1128, %v2655, -inf
  %2704 = vmax.xlane.f32.xlu0 %v2703
  %v2705 = vpop.xlane.xlu0 %2704
  %v2706 = vsub.f32 %v2483, %v2660
  %v2707 = vsub.f32 %v2488, %v2663
  %v2708 = vsub.f32 %v2493, %v2666
  %v2709 = vsub.f32 %v2498, %v2669
  %v2710 = vsub.f32 %v2503, %v2672
  %v2711 = vsub.f32 %v2508, %v2675
  %v2712 = vsub.f32 %v2513, %v2678
  %v2713 = vsub.f32 %v2518, %v2681
  %v2714 = vsub.f32 %v2620, %v2684
  %v2715 = vsub.f32 %v2625, %v2687
  %v2716 = vsub.f32 %v2630, %v2690
  %v2717 = vsub.f32 %v2635, %v2693
  %v2718 = vsub.f32 %v2640, %v2696
  %v2719 = vsub.f32 %v2645, %v2699
  %v2720 = vsub.f32 %v2650, %v2702
  %v2721 = vsub.f32 %v2655, %v2705
  %v2722 = vmul.f32 %v2706, 1.442695
  %v2723 = vpow.pop %v2722
  %v2724 = vmul.f32 %v2707, 1.442695
  %v2725 = vpow.pop %v2724
  %v2726 = vmul.f32 %v2708, 1.442695
  %v2727 = vpow.pop %v2726
  %v2728 = vmul.f32 %v2709, 1.442695
  %v2729 = vpow.pop %v2728
  %v2730 = vmul.f32 %v2710, 1.442695
  %v2731 = vpow.pop %v2730
  %v2732 = vmul.f32 %v2711, 1.442695
  %v2733 = vpow.pop %v2732
  %v2734 = vmul.f32 %v2712, 1.442695
  %v2735 = vpow.pop %v2734
  %v2736 = vmul.f32 %v2713, 1.442695
  %v2737 = vpow.pop %v2736
  %v2738 = vmul.f32 %v2714, 1.442695
  %v2739 = vpow.pop %v2738
  %v2740 = vmul.f32 %v2715, 1.442695
  %v2741 = vpow.pop %v2740
  %v2742 = vmul.f32 %v2716, 1.442695
  %v2743 = vpow.pop %v2742
  %v2744 = vmul.f32 %v2717, 1.442695
  %v2745 = vpow.pop %v2744
  %v2746 = vmul.f32 %v2718, 1.442695
  %v2747 = vpow.pop %v2746
  %v2748 = vmul.f32 %v2719, 1.442695
  %v2749 = vpow.pop %v2748
  %v2750 = vmul.f32 %v2720, 1.442695
  %v2751 = vpow.pop %v2750
  %v2752 = vmul.f32 %v2721, 1.442695
  %v2753 = vpow.pop %v2752
  %v2754 = vsel %vm1128, %v2723, 0.0
  %2755 = vadd.xlane.f32.xlu0 %v2754
  %v2756 = vpop.xlane.xlu0 %2755
  %v2757 = vsel %vm1128, %v2725, 0.0
  %2758 = vadd.xlane.f32.xlu0 %v2757
  %v2759 = vpop.xlane.xlu0 %2758
  %v2760 = vsel %vm1128, %v2727, 0.0
  %2761 = vadd.xlane.f32.xlu0 %v2760
  %v2762 = vpop.xlane.xlu0 %2761
  %v2763 = vsel %vm1128, %v2729, 0.0
  %2764 = vadd.xlane.f32.xlu0 %v2763
  %v2765 = vpop.xlane.xlu0 %2764
  %v2766 = vsel %vm1128, %v2731, 0.0
  %2767 = vadd.xlane.f32.xlu0 %v2766
  %v2768 = vpop.xlane.xlu0 %2767
  %v2769 = vsel %vm1128, %v2733, 0.0
  %2770 = vadd.xlane.f32.xlu0 %v2769
  %v2771 = vpop.xlane.xlu0 %2770
  %v2772 = vsel %vm1128, %v2735, 0.0
  %2773 = vadd.xlane.f32.xlu0 %v2772
  %v2774 = vpop.xlane.xlu0 %2773
  %v2775 = vsel %vm1128, %v2737, 0.0
  %2776 = vadd.xlane.f32.xlu0 %v2775
  %v2777 = vpop.xlane.xlu0 %2776
  %v2778 = vsel %vm1128, %v2739, 0.0
  %2779 = vadd.xlane.f32.xlu0 %v2778
  %v2780 = vpop.xlane.xlu0 %2779
  %v2781 = vsel %vm1128, %v2741, 0.0
  %2782 = vadd.xlane.f32.xlu0 %v2781
  %v2783 = vpop.xlane.xlu0 %2782
  %v2784 = vsel %vm1128, %v2743, 0.0
  %2785 = vadd.xlane.f32.xlu0 %v2784
  %v2786 = vpop.xlane.xlu0 %2785
  %v2787 = vsel %vm1128, %v2745, 0.0
  %2788 = vadd.xlane.f32.xlu0 %v2787
  %v2789 = vpop.xlane.xlu0 %2788
  %v2790 = vsel %vm1128, %v2747, 0.0
  %2791 = vadd.xlane.f32.xlu0 %v2790
  %v2792 = vpop.xlane.xlu0 %2791
  %v2793 = vsel %vm1128, %v2749, 0.0
  %2794 = vadd.xlane.f32.xlu0 %v2793
  %v2795 = vpop.xlane.xlu0 %2794
  %v2796 = vsel %vm1128, %v2751, 0.0
  %2797 = vadd.xlane.f32.xlu0 %v2796
  %v2798 = vpop.xlane.xlu0 %2797
  %v2799 = vsel %vm1128, %v2753, 0.0
  %2800 = vadd.xlane.f32.xlu0 %v2799
  %v2801 = vpop.xlane.xlu0 %2800
  %v2802 = vrcp.pop %v2756
  %v2803 = vmul.f32 %v2723, %v2802
  %v2804 = vrcp.pop %v2759
  %v2805 = vmul.f32 %v2725, %v2804
  %v2806 = vrcp.pop %v2762
  %v2807 = vmul.f32 %v2727, %v2806
  %v2808 = vrcp.pop %v2765
  %v2809 = vmul.f32 %v2729, %v2808
  %v2810 = vrcp.pop %v2768
  %v2811 = vmul.f32 %v2731, %v2810
  %v2812 = vrcp.pop %v2771
  %v2813 = vmul.f32 %v2733, %v2812
  %v2814 = vrcp.pop %v2774
  %v2815 = vmul.f32 %v2735, %v2814
  %v2816 = vrcp.pop %v2777
  %v2817 = vmul.f32 %v2737, %v2816
  %v2818 = vrcp.pop %v2780
  %v2819 = vmul.f32 %v2739, %v2818
  %v2820 = vrcp.pop %v2783
  %v2821 = vmul.f32 %v2741, %v2820
  %v2822 = vrcp.pop %v2786
  %v2823 = vmul.f32 %v2743, %v2822
  %v2824 = vrcp.pop %v2789
  %v2825 = vmul.f32 %v2745, %v2824
  %v2826 = vrcp.pop %v2792
  %v2827 = vmul.f32 %v2747, %v2826
  %v2828 = vrcp.pop %v2795
  %v2829 = vmul.f32 %v2749, %v2828
  %v2830 = vrcp.pop %v2798
  %v2831 = vmul.f32 %v2751, %v2830
  %v2832 = vrcp.pop %v2801
  %v2833 = vmul.f32 %v2753, %v2832
  %v2835 = vsel %vm1128, %v2803, 0
  %v2838 = vsel %vm1128, %v2805, 0
  %v2841 = vsel %vm1128, %v2807, 0
  %v2844 = vsel %vm1128, %v2809, 0
  %v2847 = vsel %vm1128, %v2811, 0
  %v2850 = vsel %vm1128, %v2813, 0
  %v2853 = vsel %vm1128, %v2815, 0
  %v2856 = vsel %vm1128, %v2817, 0
  %v2859 = vsel %vm1128, %v2239, 0
  %v2862 = vsel %vm1128, %v2244, 0
  %2864 = vmatprep.subr.mxu0 0.0
  %2865 = vmatpush1.xpose.msra.mxu0 0.0
  %2866 = vmatprep.subr.mxu0 0.0
  %2867 = vmatpush1.xpose.msra.mxu0 0.0
  %2868 = vmatprep.subr.mxu0 0.0
  %2869 = vmatpush1.xpose.msra.mxu0 0.0
  %2870 = vmatprep.subr.mxu0 0.0
  %2871 = vmatpush1.xpose.msra.mxu0 0.0
  %2872 = vmatprep.subr.mxu0 0.0
  %2873 = vmatpush1.xpose.msra.mxu0 0.0
  %2874 = vmatprep.subr.mxu0 0.0
  %2875 = vmatpush1.xpose.msra.mxu0 0.0
  %2876 = vmatprep.subr.mxu0 0.0
  %2877 = vmatpush1.xpose.msra.mxu0 0.0
  %2878 = vmatprep.subr.mxu0 0.0
  %2879 = vmatpush1.xpose.msra.mxu0 0.0
  %2880 = vmatprep.subr.mxu0 0.0
  %2881 = vmatpush1.xpose.msra.mxu0 0.0
  %2882 = vmatprep.subr.mxu0 0.0
  %2883 = vmatpush1.xpose.msra.mxu0 0.0
  %2884 = vmatprep.subr.mxu0 0.0
  %2885 = vmatpush1.xpose.msra.mxu0 0.0
  %2886 = vmatprep.subr.mxu0 0.0
  %2887 = vmatpush1.xpose.msra.mxu0 0.0
  %2888 = vmatprep.subr.mxu0 0.0
  %2889 = vmatpush1.xpose.msra.mxu0 0.0
  %2890 = vmatprep.subr.mxu0 0.0
  %2891 = vmatpush1.xpose.msra.mxu0 0.0
  %2892 = vmatprep.subr.mxu0 0.0
  %2893 = vmatpush1.xpose.msra.mxu0 %v2862
  %2894 = vmatprep.subr.mxu0 0.0
  %2895 = vmatpush1.xpose.msra.mxu0 %v2859
  %2896 = vmatprep.subr.mxu0 0.0
  %2897 = vmatpush2.xpose.msra.mxu0 0.0
  %2898 = vmatprep.subr.mxu0 0.0
  %2899 = vmatpush2.xpose.msra.mxu0 0.0
  %2900 = vmatprep.subr.mxu0 0.0
  %2901 = vmatpush2.xpose.msra.mxu0 0.0
  %2902 = vmatprep.subr.mxu0 0.0
  %2903 = vmatpush2.xpose.msra.mxu0 0.0
  %2904 = vmatprep.subr.mxu0 0.0
  %2905 = vmatpush2.xpose.msra.mxu0 0.0
  %2906 = vmatprep.subr.mxu0 0.0
  %2907 = vmatpush2.xpose.msra.mxu0 0.0
  %2908 = vmatprep.subr.mxu0 0.0
  %2909 = vmatpush2.xpose.msra.mxu0 0.0
  %2910 = vmatprep.subr.mxu0 0.0
  %2911 = vmatpush2.xpose.msra.mxu0 0.0
  %2912 = vmatprep.subr.mxu0 0.0
  %2913 = vmatpush2.xpose.msra.mxu0 0.0
  %2914 = vmatprep.subr.mxu0 0.0
  %2915 = vmatpush2.xpose.msra.mxu0 0.0
  %2916 = vmatprep.subr.mxu0 0.0
  %2917 = vmatpush2.xpose.msra.mxu0 0.0
  %2918 = vmatprep.subr.mxu0 0.0
  %2919 = vmatpush2.xpose.msra.mxu0 0.0
  %2920 = vmatprep.subr.mxu0 0.0
  %2921 = vmatpush2.xpose.msra.mxu0 0.0
  %2922 = vmatprep.subr.mxu0 0.0
  %2923 = vmatpush2.xpose.msra.mxu0 0.0
  %2924 = vmatprep.subr.mxu0 0.0
  %2925 = vmatpush2.xpose.msra.mxu0 0.0
  %2926 = vmatprep.subr.mxu0 0.0
  %2927 = vmatpush2.xpose.msra.mxu0 0.0
  %2928 = vmatprep.mubr.f32.mxu0 0.0
  %2929 = vmatmul.mubr.f32.gmra.mxu0 %v2835
  %v2930 = vpop.f32.mrf.mxu0
  %v2931 = vadd.f32 0.0, %v2930
  %v2932 = vpop.f32.mrf.mxu0
  %2933 = vmatprep.mubr.f32.mxu0 0.0
  %2934 = vmatmul.mubr.f32.gmra.mxu0 %v2838
  %v2935 = vpop.f32.mrf.mxu0
  %v2936 = vadd.f32 0.0, %v2935
  %v2937 = vpop.f32.mrf.mxu0
  %2938 = vmatprep.mubr.f32.mxu0 0.0
  %2939 = vmatmul.mubr.f32.gmra.mxu0 %v2841
  %v2940 = vpop.f32.mrf.mxu0
  %v2941 = vadd.f32 0.0, %v2940
  %v2942 = vpop.f32.mrf.mxu0
  %2943 = vmatprep.mubr.f32.mxu0 0.0
  %2944 = vmatmul.mubr.f32.gmra.mxu0 %v2844
  %v2945 = vpop.f32.mrf.mxu0
  %v2946 = vadd.f32 0.0, %v2945
  %v2947 = vpop.f32.mrf.mxu0
  %2948 = vmatprep.mubr.f32.mxu0 0.0
  %2949 = vmatmul.mubr.f32.gmra.mxu0 %v2847
  %v2950 = vpop.f32.mrf.mxu0
  %v2951 = vadd.f32 0.0, %v2950
  %v2952 = vpop.f32.mrf.mxu0
  %2953 = vmatprep.mubr.f32.mxu0 0.0
  %2954 = vmatmul.mubr.f32.gmra.mxu0 %v2850
  %v2955 = vpop.f32.mrf.mxu0
  %v2956 = vadd.f32 0.0, %v2955
  %v2957 = vpop.f32.mrf.mxu0
  %2958 = vmatprep.mubr.f32.mxu0 0.0
  %2959 = vmatmul.mubr.f32.gmra.mxu0 %v2853
  %v2960 = vpop.f32.mrf.mxu0
  %v2961 = vadd.f32 0.0, %v2960
  %v2962 = vpop.f32.mrf.mxu0
  %2963 = vmatprep.mubr.f32.mxu0 0.0
  %2964 = vmatmul.mubr.f32.gmra.mxu0 %v2856
  %v2965 = vpop.f32.mrf.mxu0
  %v2966 = vadd.f32 0.0, %v2965
  %v2967 = vpop.f32.mrf.mxu0
  %2968 = vdwg.mxu0
  %v2970 = vsel %vm1128, %v2819, 0
  %v2973 = vsel %vm1128, %v2821, 0
  %v2976 = vsel %vm1128, %v2823, 0
  %v2979 = vsel %vm1128, %v2825, 0
  %v2982 = vsel %vm1128, %v2827, 0
  %v2985 = vsel %vm1128, %v2829, 0
  %v2988 = vsel %vm1128, %v2831, 0
  %v2991 = vsel %vm1128, %v2833, 0
  %v2994 = vsel %vm1128, %v2376, 0
  %v2997 = vsel %vm1128, %v2381, 0
  %2999 = vmatprep.subr.mxu0 0.0
  %3000 = vmatpush1.xpose.msra.mxu0 0.0
  %3001 = vmatprep.subr.mxu0 0.0
  %3002 = vmatpush1.xpose.msra.mxu0 0.0
  %3003 = vmatprep.subr.mxu0 0.0
  %3004 = vmatpush1.xpose.msra.mxu0 0.0
  %3005 = vmatprep.subr.mxu0 0.0
  %3006 = vmatpush1.xpose.msra.mxu0 0.0
  %3007 = vmatprep.subr.mxu0 0.0
  %3008 = vmatpush1.xpose.msra.mxu0 0.0
  %3009 = vmatprep.subr.mxu0 0.0
  %3010 = vmatpush1.xpose.msra.mxu0 0.0
  %3011 = vmatprep.subr.mxu0 0.0
  %3012 = vmatpush1.xpose.msra.mxu0 0.0
  %3013 = vmatprep.subr.mxu0 0.0
  %3014 = vmatpush1.xpose.msra.mxu0 0.0
  %3015 = vmatprep.subr.mxu0 0.0
  %3016 = vmatpush1.xpose.msra.mxu0 0.0
  %3017 = vmatprep.subr.mxu0 0.0
  %3018 = vmatpush1.xpose.msra.mxu0 0.0
  %3019 = vmatprep.subr.mxu0 0.0
  %3020 = vmatpush1.xpose.msra.mxu0 0.0
  %3021 = vmatprep.subr.mxu0 0.0
  %3022 = vmatpush1.xpose.msra.mxu0 0.0
  %3023 = vmatprep.subr.mxu0 0.0
  %3024 = vmatpush1.xpose.msra.mxu0 0.0
  %3025 = vmatprep.subr.mxu0 0.0
  %3026 = vmatpush1.xpose.msra.mxu0 0.0
  %3027 = vmatprep.subr.mxu0 0.0
  %3028 = vmatpush1.xpose.msra.mxu0 %v2997
  %3029 = vmatprep.subr.mxu0 0.0
  %3030 = vmatpush1.xpose.msra.mxu0 %v2994
  %3031 = vmatprep.subr.mxu0 0.0
  %3032 = vmatpush2.xpose.msra.mxu0 0.0
  %3033 = vmatprep.subr.mxu0 0.0
  %3034 = vmatpush2.xpose.msra.mxu0 0.0
  %3035 = vmatprep.subr.mxu0 0.0
  %3036 = vmatpush2.xpose.msra.mxu0 0.0
  %3037 = vmatprep.subr.mxu0 0.0
  %3038 = vmatpush2.xpose.msra.mxu0 0.0
  %3039 = vmatprep.subr.mxu0 0.0
  %3040 = vmatpush2.xpose.msra.mxu0 0.0
  %3041 = vmatprep.subr.mxu0 0.0
  %3042 = vmatpush2.xpose.msra.mxu0 0.0
  %3043 = vmatprep.subr.mxu0 0.0
  %3044 = vmatpush2.xpose.msra.mxu0 0.0
  %3045 = vmatprep.subr.mxu0 0.0
  %3046 = vmatpush2.xpose.msra.mxu0 0.0
  %3047 = vmatprep.subr.mxu0 0.0
  %3048 = vmatpush2.xpose.msra.mxu0 0.0
  %3049 = vmatprep.subr.mxu0 0.0
  %3050 = vmatpush2.xpose.msra.mxu0 0.0
  %3051 = vmatprep.subr.mxu0 0.0
  %3052 = vmatpush2.xpose.msra.mxu0 0.0
  %3053 = vmatprep.subr.mxu0 0.0
  %3054 = vmatpush2.xpose.msra.mxu0 0.0
  %3055 = vmatprep.subr.mxu0 0.0
  %3056 = vmatpush2.xpose.msra.mxu0 0.0
  %3057 = vmatprep.subr.mxu0 0.0
  %3058 = vmatpush2.xpose.msra.mxu0 0.0
  %3059 = vmatprep.subr.mxu0 0.0
  %3060 = vmatpush2.xpose.msra.mxu0 0.0
  %3061 = vmatprep.subr.mxu0 0.0
  %3062 = vmatpush2.xpose.msra.mxu0 0.0
  %3063 = vmatprep.mubr.f32.mxu0 0.0
  %3064 = vmatmul.mubr.f32.gmra.mxu0 %v2970
  %v3065 = vpop.f32.mrf.mxu0
  %v3066 = vadd.f32 0.0, %v3065
  %v3067 = vpop.f32.mrf.mxu0
  %3068 = vmatprep.mubr.f32.mxu0 0.0
  %3069 = vmatmul.mubr.f32.gmra.mxu0 %v2973
  %v3070 = vpop.f32.mrf.mxu0
  %v3071 = vadd.f32 0.0, %v3070
  %v3072 = vpop.f32.mrf.mxu0
  %3073 = vmatprep.mubr.f32.mxu0 0.0
  %3074 = vmatmul.mubr.f32.gmra.mxu0 %v2976
  %v3075 = vpop.f32.mrf.mxu0
  %v3076 = vadd.f32 0.0, %v3075
  %v3077 = vpop.f32.mrf.mxu0
  %3078 = vmatprep.mubr.f32.mxu0 0.0
  %3079 = vmatmul.mubr.f32.gmra.mxu0 %v2979
  %v3080 = vpop.f32.mrf.mxu0
  %v3081 = vadd.f32 0.0, %v3080
  %v3082 = vpop.f32.mrf.mxu0
  %3083 = vmatprep.mubr.f32.mxu0 0.0
  %3084 = vmatmul.mubr.f32.gmra.mxu0 %v2982
  %v3085 = vpop.f32.mrf.mxu0
  %v3086 = vadd.f32 0.0, %v3085
  %v3087 = vpop.f32.mrf.mxu0
  %3088 = vmatprep.mubr.f32.mxu0 0.0
  %3089 = vmatmul.mubr.f32.gmra.mxu0 %v2985
  %v3090 = vpop.f32.mrf.mxu0
  %v3091 = vadd.f32 0.0, %v3090
  %v3092 = vpop.f32.mrf.mxu0
  %3093 = vmatprep.mubr.f32.mxu0 0.0
  %3094 = vmatmul.mubr.f32.gmra.mxu0 %v2988
  %v3095 = vpop.f32.mrf.mxu0
  %v3096 = vadd.f32 0.0, %v3095
  %v3097 = vpop.f32.mrf.mxu0
  %3098 = vmatprep.mubr.f32.mxu0 0.0
  %3099 = vmatmul.mubr.f32.gmra.mxu0 %v2991
  %v3100 = vpop.f32.mrf.mxu0
  %v3101 = vadd.f32 0.0, %v3100
  %v3102 = vpop.f32.mrf.mxu0
  %3103 = vdwg.mxu0
  %3120 = vrot.lane.b32.xlu0 %v2931, 16
  %v3121 = vpop.permute.xlu0 %3120
  %3122 = vrot.lane.b32.xlu0 %v2936, 16
  %v3123 = vpop.permute.xlu0 %3122
  %3124 = vrot.lane.b32.xlu0 %v2941, 16
  %v3125 = vpop.permute.xlu0 %3124
  %3126 = vrot.lane.b32.xlu0 %v2946, 16
  %v3127 = vpop.permute.xlu0 %3126
  %3128 = vrot.lane.b32.xlu0 %v2951, 16
  %v3129 = vpop.permute.xlu0 %3128
  %3130 = vrot.lane.b32.xlu0 %v2956, 16
  %v3131 = vpop.permute.xlu0 %3130
  %3132 = vrot.lane.b32.xlu0 %v2961, 16
  %v3133 = vpop.permute.xlu0 %3132
  %3134 = vrot.lane.b32.xlu0 %v2966, 16
  %v3135 = vpop.permute.xlu0 %3134
  %3136 = vrot.lane.b32.xlu0 %v3066, 16
  %v3137 = vpop.permute.xlu0 %3136
  %3138 = vrot.lane.b32.xlu0 %v3071, 16
  %v3139 = vpop.permute.xlu0 %3138
  %3140 = vrot.lane.b32.xlu0 %v3076, 16
  %v3141 = vpop.permute.xlu0 %3140
  %3142 = vrot.lane.b32.xlu0 %v3081, 16
  %v3143 = vpop.permute.xlu0 %3142
  %3144 = vrot.lane.b32.xlu0 %v3086, 16
  %v3145 = vpop.permute.xlu0 %3144
  %3146 = vrot.lane.b32.xlu0 %v3091, 16
  %v3147 = vpop.permute.xlu0 %3146
  %3148 = vrot.lane.b32.xlu0 %v3096, 16
  %v3149 = vpop.permute.xlu0 %3148
  %3150 = vrot.lane.b32.xlu0 %v3101, 16
  %v3151 = vpop.permute.xlu0 %3150
  %v3168 = vsel %vm1128, %v1644, %v3121
  %v3169 = vsel %vm1128, %v1649, %v3123
  %v3170 = vsel %vm1128, %v1654, %v3125
  %v3171 = vsel %vm1128, %v1659, %v3127
  %v3172 = vsel %vm1128, %v1664, %v3129
  %v3173 = vsel %vm1128, %v1669, %v3131
  %v3174 = vsel %vm1128, %v1674, %v3133
  %v3175 = vsel %vm1128, %v1679, %v3135
  %v3176 = vsel %vm1128, %v1779, %v3137
  %v3177 = vsel %vm1128, %v1784, %v3139
  %v3178 = vsel %vm1128, %v1789, %v3141
  %v3179 = vsel %vm1128, %v1794, %v3143
  %v3180 = vsel %vm1128, %v1799, %v3145
  %v3181 = vsel %vm1128, %v1804, %v3147
  %v3182 = vsel %vm1128, %v1809, %v3149
  %v3183 = vsel %vm1128, %v1814, %v3151
  %v3184 = vld [vmem:[%s6] sm:$0xff]
  %v3185 = vld [vmem:[%s6 + $0x8] sm:$0xff]
  %v3186 = vld [vmem:[%s6 + $0x10] sm:$0xff]
  %v3187 = vld [vmem:[%s6 + $0x18] sm:$0xff]
  %v3188 = vlaneseq
  %v3189 = vshrl.u32 %v3188, 7
  %v3190 = vsub.s32 0, %v3189
  %v3191 = vrot.slane %v56, %v3190
  %v3193 = vsel %vm58, %v3168, 0
  %v3196 = vsel %vm58, %v3169, 0
  %v3199 = vsel %vm58, %v3170, 0
  %v3202 = vsel %vm58, %v3171, 0
  %v3205 = vsel %vm58, %v3172, 0
  %v3208 = vsel %vm58, %v3173, 0
  %v3211 = vsel %vm58, %v3174, 0
  %v3214 = vsel %vm58, %v3175, 0
  %v3217 = vsel %vm58, %v3176, 0
  %v3220 = vsel %vm58, %v3177, 0
  %v3223 = vsel %vm58, %v3178, 0
  %v3226 = vsel %vm58, %v3179, 0
  %v3229 = vsel %vm58, %v3180, 0
  %v3232 = vsel %vm58, %v3181, 0
  %v3235 = vsel %vm58, %v3182, 0
  %v3238 = vsel %vm58, %v3183, 0
  %3240 = vmatprep.subr.mxu0 0.0
  %3241 = vmatpush1.msra.mxu0 0.0
  %3242 = vmatprep.subr.mxu0 0.0
  %3243 = vmatpush1.msra.mxu0 0.0
  %3244 = vmatprep.subr.mxu0 0.0
  %3245 = vmatpush1.msra.mxu0 0.0
  %3246 = vmatprep.subr.mxu0 0.0
  %3247 = vmatpush1.msra.mxu0 0.0
  %3248 = vmatprep.subr.mxu0 0.0
  %3249 = vmatpush1.msra.mxu0 0.0
  %3250 = vmatprep.subr.mxu0 0.0
  %3251 = vmatpush1.msra.mxu0 0.0
  %3252 = vmatprep.subr.mxu0 0.0
  %3253 = vmatpush1.msra.mxu0 0.0
  %3254 = vmatprep.subr.mxu0 0.0
  %3255 = vmatpush1.msra.mxu0 0.0
  %3256 = vmatprep.subr.mxu0 0.0
  %3257 = vmatpush1.msra.mxu0 0.0
  %3258 = vmatprep.subr.mxu0 0.0
  %3259 = vmatpush1.msra.mxu0 0.0
  %3260 = vmatprep.subr.mxu0 0.0
  %3261 = vmatpush1.msra.mxu0 0.0
  %3262 = vmatprep.subr.mxu0 0.0
  %3263 = vmatpush1.msra.mxu0 0.0
  %3264 = vmatprep.subr.mxu0 0.0
  %3265 = vmatpush1.msra.mxu0 %v3187
  %3266 = vmatprep.subr.mxu0 0.0
  %3267 = vmatpush1.msra.mxu0 %v3186
  %3268 = vmatprep.subr.mxu0 0.0
  %3269 = vmatpush1.msra.mxu0 %v3185
  %3270 = vmatprep.subr.mxu0 0.0
  %3271 = vmatpush1.msra.mxu0 %v3184
  %3272 = vmatprep.subr.mxu0 0.0
  %3273 = vmatpush2.msra.mxu0 0.0
  %3274 = vmatprep.subr.mxu0 0.0
  %3275 = vmatpush2.msra.mxu0 0.0
  %3276 = vmatprep.subr.mxu0 0.0
  %3277 = vmatpush2.msra.mxu0 0.0
  %3278 = vmatprep.subr.mxu0 0.0
  %3279 = vmatpush2.msra.mxu0 0.0
  %3280 = vmatprep.subr.mxu0 0.0
  %3281 = vmatpush2.msra.mxu0 0.0
  %3282 = vmatprep.subr.mxu0 0.0
  %3283 = vmatpush2.msra.mxu0 0.0
  %3284 = vmatprep.subr.mxu0 0.0
  %3285 = vmatpush2.msra.mxu0 0.0
  %3286 = vmatprep.subr.mxu0 0.0
  %3287 = vmatpush2.msra.mxu0 0.0
  %3288 = vmatprep.subr.mxu0 0.0
  %3289 = vmatpush2.msra.mxu0 0.0
  %3290 = vmatprep.subr.mxu0 0.0
  %3291 = vmatpush2.msra.mxu0 0.0
  %3292 = vmatprep.subr.mxu0 0.0
  %3293 = vmatpush2.msra.mxu0 0.0
  %3294 = vmatprep.subr.mxu0 0.0
  %3295 = vmatpush2.msra.mxu0 0.0
  %3296 = vmatprep.subr.mxu0 0.0
  %3297 = vmatpush2.msra.mxu0 0.0
  %3298 = vmatprep.subr.mxu0 0.0
  %3299 = vmatpush2.msra.mxu0 0.0
  %3300 = vmatprep.subr.mxu0 0.0
  %3301 = vmatpush2.msra.mxu0 0.0
  %3302 = vmatprep.subr.mxu0 0.0
  %3303 = vmatpush2.msra.mxu0 0.0
  %3304 = vmatprep.mubr.f32.mxu0 0.0
  %3305 = vmatmul.mubr.f32.gmra.mxu0 %v3193
  %v3306 = vpop.f32.mrf.mxu0
  %v3307 = vadd.f32 %v3191, %v3306
  %v3308 = vpop.f32.mrf.mxu0
  %3309 = vmatprep.mubr.f32.mxu0 0.0
  %3310 = vmatmul.mubr.f32.gmra.mxu0 %v3196
  %v3311 = vpop.f32.mrf.mxu0
  %v3312 = vadd.f32 %v3191, %v3311
  %v3313 = vpop.f32.mrf.mxu0
  %3314 = vmatprep.mubr.f32.mxu0 0.0
  %3315 = vmatmul.mubr.f32.gmra.mxu0 %v3199
  %v3316 = vpop.f32.mrf.mxu0
  %v3317 = vadd.f32 %v3191, %v3316
  %v3318 = vpop.f32.mrf.mxu0
  %3319 = vmatprep.mubr.f32.mxu0 0.0
  %3320 = vmatmul.mubr.f32.gmra.mxu0 %v3202
  %v3321 = vpop.f32.mrf.mxu0
  %v3322 = vadd.f32 %v3191, %v3321
  %v3323 = vpop.f32.mrf.mxu0
  %3324 = vmatprep.mubr.f32.mxu0 0.0
  %3325 = vmatmul.mubr.f32.gmra.mxu0 %v3205
  %v3326 = vpop.f32.mrf.mxu0
  %v3327 = vadd.f32 %v3191, %v3326
  %v3328 = vpop.f32.mrf.mxu0
  %3329 = vmatprep.mubr.f32.mxu0 0.0
  %3330 = vmatmul.mubr.f32.gmra.mxu0 %v3208
  %v3331 = vpop.f32.mrf.mxu0
  %v3332 = vadd.f32 %v3191, %v3331
  %v3333 = vpop.f32.mrf.mxu0
  %3334 = vmatprep.mubr.f32.mxu0 0.0
  %3335 = vmatmul.mubr.f32.gmra.mxu0 %v3211
  %v3336 = vpop.f32.mrf.mxu0
  %v3337 = vadd.f32 %v3191, %v3336
  %v3338 = vpop.f32.mrf.mxu0
  %3339 = vmatprep.mubr.f32.mxu0 0.0
  %3340 = vmatmul.mubr.f32.gmra.mxu0 %v3214
  %v3341 = vpop.f32.mrf.mxu0
  %v3342 = vadd.f32 %v3191, %v3341
  %v3343 = vpop.f32.mrf.mxu0
  %3344 = vmatprep.mubr.f32.mxu0 0.0
  %3345 = vmatmul.mubr.f32.gmra.mxu0 %v3217
  %v3346 = vpop.f32.mrf.mxu0
  %v3347 = vadd.f32 %v3191, %v3346
  %v3348 = vpop.f32.mrf.mxu0
  %3349 = vmatprep.mubr.f32.mxu0 0.0
  %3350 = vmatmul.mubr.f32.gmra.mxu0 %v3220
  %v3351 = vpop.f32.mrf.mxu0
  %v3352 = vadd.f32 %v3191, %v3351
  %v3353 = vpop.f32.mrf.mxu0
  %3354 = vmatprep.mubr.f32.mxu0 0.0
  %3355 = vmatmul.mubr.f32.gmra.mxu0 %v3223
  %v3356 = vpop.f32.mrf.mxu0
  %v3357 = vadd.f32 %v3191, %v3356
  %v3358 = vpop.f32.mrf.mxu0
  %3359 = vmatprep.mubr.f32.mxu0 0.0
  %3360 = vmatmul.mubr.f32.gmra.mxu0 %v3226
  %v3361 = vpop.f32.mrf.mxu0
  %v3362 = vadd.f32 %v3191, %v3361
  %v3363 = vpop.f32.mrf.mxu0
  %3364 = vmatprep.mubr.f32.mxu0 0.0
  %3365 = vmatmul.mubr.f32.gmra.mxu0 %v3229
  %v3366 = vpop.f32.mrf.mxu0
  %v3367 = vadd.f32 %v3191, %v3366
  %v3368 = vpop.f32.mrf.mxu0
  %3369 = vmatprep.mubr.f32.mxu0 0.0
  %3370 = vmatmul.mubr.f32.gmra.mxu0 %v3232
  %v3371 = vpop.f32.mrf.mxu0
  %v3372 = vadd.f32 %v3191, %v3371
  %v3373 = vpop.f32.mrf.mxu0
  %3374 = vmatprep.mubr.f32.mxu0 0.0
  %3375 = vmatmul.mubr.f32.gmra.mxu0 %v3235
  %v3376 = vpop.f32.mrf.mxu0
  %v3377 = vadd.f32 %v3191, %v3376
  %v3378 = vpop.f32.mrf.mxu0
  %3379 = vmatprep.mubr.f32.mxu0 0.0
  %3380 = vmatmul.mubr.f32.gmra.mxu0 %v3238
  %v3381 = vpop.f32.mrf.mxu0
  %v3382 = vadd.f32 %v3191, %v3381
  %v3383 = vpop.f32.mrf.mxu0
  %3384 = vdwg.mxu0
  %v3385 = vadd.f32 %v3307, %v35
  %v3386 = vadd.f32 %v3312, %v36
  %v3387 = vadd.f32 %v3317, %v37
  %v3388 = vadd.f32 %v3322, %v38
  %v3389 = vadd.f32 %v3327, %v39
  %v3390 = vadd.f32 %v3332, %v40
  %v3391 = vadd.f32 %v3337, %v41
  %v3392 = vadd.f32 %v3342, %v42
  %v3393 = vadd.f32 %v3347, %v43
  %v3394 = vadd.f32 %v3352, %v44
  %v3395 = vadd.f32 %v3357, %v45
  %v3396 = vadd.f32 %v3362, %v46
  %v3397 = vadd.f32 %v3367, %v47
  %v3398 = vadd.f32 %v3372, %v48
  %v3399 = vadd.f32 %v3377, %v49
  %v3400 = vadd.f32 %v3382, %v50
  %v3401 = vsel %vm58, %v3385, 0.0
  %3402 = vadd.xlane.f32.xlu0 %v3401
  %v3403 = vpop.xlane.xlu0 %3402
  %v3404 = vsel %vm58, %v3386, 0.0
  %3405 = vadd.xlane.f32.xlu0 %v3404
  %v3406 = vpop.xlane.xlu0 %3405
  %v3407 = vsel %vm58, %v3387, 0.0
  %3408 = vadd.xlane.f32.xlu0 %v3407
  %v3409 = vpop.xlane.xlu0 %3408
  %v3410 = vsel %vm58, %v3388, 0.0
  %3411 = vadd.xlane.f32.xlu0 %v3410
  %v3412 = vpop.xlane.xlu0 %3411
  %v3413 = vsel %vm58, %v3389, 0.0
  %3414 = vadd.xlane.f32.xlu0 %v3413
  %v3415 = vpop.xlane.xlu0 %3414
  %v3416 = vsel %vm58, %v3390, 0.0
  %3417 = vadd.xlane.f32.xlu0 %v3416
  %v3418 = vpop.xlane.xlu0 %3417
  %v3419 = vsel %vm58, %v3391, 0.0
  %3420 = vadd.xlane.f32.xlu0 %v3419
  %v3421 = vpop.xlane.xlu0 %3420
  %v3422 = vsel %vm58, %v3392, 0.0
  %3423 = vadd.xlane.f32.xlu0 %v3422
  %v3424 = vpop.xlane.xlu0 %3423
  %v3425 = vsel %vm58, %v3393, 0.0
  %3426 = vadd.xlane.f32.xlu0 %v3425
  %v3427 = vpop.xlane.xlu0 %3426
  %v3428 = vsel %vm58, %v3394, 0.0
  %3429 = vadd.xlane.f32.xlu0 %v3428
  %v3430 = vpop.xlane.xlu0 %3429
  %v3431 = vsel %vm58, %v3395, 0.0
  %3432 = vadd.xlane.f32.xlu0 %v3431
  %v3433 = vpop.xlane.xlu0 %3432
  %v3434 = vsel %vm58, %v3396, 0.0
  %3435 = vadd.xlane.f32.xlu0 %v3434
  %v3436 = vpop.xlane.xlu0 %3435
  %v3437 = vsel %vm58, %v3397, 0.0
  %3438 = vadd.xlane.f32.xlu0 %v3437
  %v3439 = vpop.xlane.xlu0 %3438
  %v3440 = vsel %vm58, %v3398, 0.0
  %3441 = vadd.xlane.f32.xlu0 %v3440
  %v3442 = vpop.xlane.xlu0 %3441
  %v3443 = vsel %vm58, %v3399, 0.0
  %3444 = vadd.xlane.f32.xlu0 %v3443
  %v3445 = vpop.xlane.xlu0 %3444
  %v3446 = vsel %vm58, %v3400, 0.0
  %3447 = vadd.xlane.f32.xlu0 %v3446
  %v3448 = vpop.xlane.xlu0 %3447
  %v3449 = vmul.f32 %v3403, %v107
  %v3450 = vmul.f32 %v3406, %v107
  %v3451 = vmul.f32 %v3409, %v107
  %v3452 = vmul.f32 %v3412, %v107
  %v3453 = vmul.f32 %v3415, %v107
  %v3454 = vmul.f32 %v3418, %v107
  %v3455 = vmul.f32 %v3421, %v107
  %v3456 = vmul.f32 %v3424, %v107
  %v3457 = vmul.f32 %v3427, %v107
  %v3458 = vmul.f32 %v3430, %v107
  %v3459 = vmul.f32 %v3433, %v107
  %v3460 = vmul.f32 %v3436, %v107
  %v3461 = vmul.f32 %v3439, %v107
  %v3462 = vmul.f32 %v3442, %v107
  %v3463 = vmul.f32 %v3445, %v107
  %v3464 = vmul.f32 %v3448, %v107
  %v3465 = vsub.f32 %v3385, %v3449
  %v3466 = vsub.f32 %v3386, %v3450
  %v3467 = vsub.f32 %v3387, %v3451
  %v3468 = vsub.f32 %v3388, %v3452
  %v3469 = vsub.f32 %v3389, %v3453
  %v3470 = vsub.f32 %v3390, %v3454
  %v3471 = vsub.f32 %v3391, %v3455
  %v3472 = vsub.f32 %v3392, %v3456
  %v3473 = vsub.f32 %v3393, %v3457
  %v3474 = vsub.f32 %v3394, %v3458
  %v3475 = vsub.f32 %v3395, %v3459
  %v3476 = vsub.f32 %v3396, %v3460
  %v3477 = vsub.f32 %v3397, %v3461
  %v3478 = vsub.f32 %v3398, %v3462
  %v3479 = vsub.f32 %v3399, %v3463
  %v3480 = vsub.f32 %v3400, %v3464
  %v3481 = vmul.f32 %v3465, %v3465
  %v3482 = vmul.f32 %v3466, %v3466
  %v3483 = vmul.f32 %v3467, %v3467
  %v3484 = vmul.f32 %v3468, %v3468
  %v3485 = vmul.f32 %v3469, %v3469
  %v3486 = vmul.f32 %v3470, %v3470
  %v3487 = vmul.f32 %v3471, %v3471
  %v3488 = vmul.f32 %v3472, %v3472
  %v3489 = vmul.f32 %v3473, %v3473
  %v3490 = vmul.f32 %v3474, %v3474
  %v3491 = vmul.f32 %v3475, %v3475
  %v3492 = vmul.f32 %v3476, %v3476
  %v3493 = vmul.f32 %v3477, %v3477
  %v3494 = vmul.f32 %v3478, %v3478
  %v3495 = vmul.f32 %v3479, %v3479
  %v3496 = vmul.f32 %v3480, %v3480
  %v3497 = vsel %vm58, %v3481, 0.0
  %3498 = vadd.xlane.f32.xlu0 %v3497
  %v3499 = vpop.xlane.xlu0 %3498
  %v3500 = vsel %vm58, %v3482, 0.0
  %3501 = vadd.xlane.f32.xlu0 %v3500
  %v3502 = vpop.xlane.xlu0 %3501
  %v3503 = vsel %vm58, %v3483, 0.0
  %3504 = vadd.xlane.f32.xlu0 %v3503
  %v3505 = vpop.xlane.xlu0 %3504
  %v3506 = vsel %vm58, %v3484, 0.0
  %3507 = vadd.xlane.f32.xlu0 %v3506
  %v3508 = vpop.xlane.xlu0 %3507
  %v3509 = vsel %vm58, %v3485, 0.0
  %3510 = vadd.xlane.f32.xlu0 %v3509
  %v3511 = vpop.xlane.xlu0 %3510
  %v3512 = vsel %vm58, %v3486, 0.0
  %3513 = vadd.xlane.f32.xlu0 %v3512
  %v3514 = vpop.xlane.xlu0 %3513
  %v3515 = vsel %vm58, %v3487, 0.0
  %3516 = vadd.xlane.f32.xlu0 %v3515
  %v3517 = vpop.xlane.xlu0 %3516
  %v3518 = vsel %vm58, %v3488, 0.0
  %3519 = vadd.xlane.f32.xlu0 %v3518
  %v3520 = vpop.xlane.xlu0 %3519
  %v3521 = vsel %vm58, %v3489, 0.0
  %3522 = vadd.xlane.f32.xlu0 %v3521
  %v3523 = vpop.xlane.xlu0 %3522
  %v3524 = vsel %vm58, %v3490, 0.0
  %3525 = vadd.xlane.f32.xlu0 %v3524
  %v3526 = vpop.xlane.xlu0 %3525
  %v3527 = vsel %vm58, %v3491, 0.0
  %3528 = vadd.xlane.f32.xlu0 %v3527
  %v3529 = vpop.xlane.xlu0 %3528
  %v3530 = vsel %vm58, %v3492, 0.0
  %3531 = vadd.xlane.f32.xlu0 %v3530
  %v3532 = vpop.xlane.xlu0 %3531
  %v3533 = vsel %vm58, %v3493, 0.0
  %3534 = vadd.xlane.f32.xlu0 %v3533
  %v3535 = vpop.xlane.xlu0 %3534
  %v3536 = vsel %vm58, %v3494, 0.0
  %3537 = vadd.xlane.f32.xlu0 %v3536
  %v3538 = vpop.xlane.xlu0 %3537
  %v3539 = vsel %vm58, %v3495, 0.0
  %3540 = vadd.xlane.f32.xlu0 %v3539
  %v3541 = vpop.xlane.xlu0 %3540
  %v3542 = vsel %vm58, %v3496, 0.0
  %3543 = vadd.xlane.f32.xlu0 %v3542
  %v3544 = vpop.xlane.xlu0 %3543
  %v3545 = vmul.f32 %v3499, %v107
  %v3546 = vmul.f32 %v3502, %v107
  %v3547 = vmul.f32 %v3505, %v107
  %v3548 = vmul.f32 %v3508, %v107
  %v3549 = vmul.f32 %v3511, %v107
  %v3550 = vmul.f32 %v3514, %v107
  %v3551 = vmul.f32 %v3517, %v107
  %v3552 = vmul.f32 %v3520, %v107
  %v3553 = vmul.f32 %v3523, %v107
  %v3554 = vmul.f32 %v3526, %v107
  %v3555 = vmul.f32 %v3529, %v107
  %v3556 = vmul.f32 %v3532, %v107
  %v3557 = vmul.f32 %v3535, %v107
  %v3558 = vmul.f32 %v3538, %v107
  %v3559 = vmul.f32 %v3541, %v107
  %v3560 = vmul.f32 %v3544, %v107
  %v3561 = vadd.f32 %v3545, 1e-05
  %v3562 = vadd.f32 %v3546, 1e-05
  %v3563 = vadd.f32 %v3547, 1e-05
  %v3564 = vadd.f32 %v3548, 1e-05
  %v3565 = vadd.f32 %v3549, 1e-05
  %v3566 = vadd.f32 %v3550, 1e-05
  %v3567 = vadd.f32 %v3551, 1e-05
  %v3568 = vadd.f32 %v3552, 1e-05
  %v3569 = vadd.f32 %v3553, 1e-05
  %v3570 = vadd.f32 %v3554, 1e-05
  %v3571 = vadd.f32 %v3555, 1e-05
  %v3572 = vadd.f32 %v3556, 1e-05
  %v3573 = vadd.f32 %v3557, 1e-05
  %v3574 = vadd.f32 %v3558, 1e-05
  %v3575 = vadd.f32 %v3559, 1e-05
  %v3576 = vadd.f32 %v3560, 1e-05
  %v3577 = vrsqrt.pop %v3561
  %v3578 = vrsqrt.pop %v3562
  %v3579 = vrsqrt.pop %v3563
  %v3580 = vrsqrt.pop %v3564
  %v3581 = vrsqrt.pop %v3565
  %v3582 = vrsqrt.pop %v3566
  %v3583 = vrsqrt.pop %v3567
  %v3584 = vrsqrt.pop %v3568
  %v3585 = vrsqrt.pop %v3569
  %v3586 = vrsqrt.pop %v3570
  %v3587 = vrsqrt.pop %v3571
  %v3588 = vrsqrt.pop %v3572
  %v3589 = vrsqrt.pop %v3573
  %v3590 = vrsqrt.pop %v3574
  %v3591 = vrsqrt.pop %v3575
  %v3592 = vrsqrt.pop %v3576
  %v3593 = vmul.f32 %v3465, %v3577
  %v3594 = vmul.f32 %v3466, %v3578
  %v3595 = vmul.f32 %v3467, %v3579
  %v3596 = vmul.f32 %v3468, %v3580
  %v3597 = vmul.f32 %v3469, %v3581
  %v3598 = vmul.f32 %v3470, %v3582
  %v3599 = vmul.f32 %v3471, %v3583
  %v3600 = vmul.f32 %v3472, %v3584
  %v3601 = vmul.f32 %v3473, %v3585
  %v3602 = vmul.f32 %v3474, %v3586
  %v3603 = vmul.f32 %v3475, %v3587
  %v3604 = vmul.f32 %v3476, %v3588
  %v3605 = vmul.f32 %v3477, %v3589
  %v3606 = vmul.f32 %v3478, %v3590
  %v3607 = vmul.f32 %v3479, %v3591
  %v3608 = vmul.f32 %v3480, %v3592
  %v3609 = vlaneseq
  %v3610 = vshrl.u32 %v3609, 7
  %v3611 = vsub.s32 0, %v3610
  %v3612 = vrot.slane %v54, %v3611
  %v3613 = vmul.f32 %v3593, %v3612
  %v3614 = vmul.f32 %v3594, %v3612
  %v3615 = vmul.f32 %v3595, %v3612
  %v3616 = vmul.f32 %v3596, %v3612
  %v3617 = vmul.f32 %v3597, %v3612
  %v3618 = vmul.f32 %v3598, %v3612
  %v3619 = vmul.f32 %v3599, %v3612
  %v3620 = vmul.f32 %v3600, %v3612
  %v3621 = vmul.f32 %v3601, %v3612
  %v3622 = vmul.f32 %v3602, %v3612
  %v3623 = vmul.f32 %v3603, %v3612
  %v3624 = vmul.f32 %v3604, %v3612
  %v3625 = vmul.f32 %v3605, %v3612
  %v3626 = vmul.f32 %v3606, %v3612
  %v3627 = vmul.f32 %v3607, %v3612
  %v3628 = vmul.f32 %v3608, %v3612
  %v3629 = vlaneseq
  %v3630 = vshrl.u32 %v3629, 7
  %v3631 = vsub.s32 0, %v3630
  %v3632 = vrot.slane %v55, %v3631
  %v3633 = vadd.f32 %v3613, %v3632
  %v3634 = vadd.f32 %v3614, %v3632
  %v3635 = vadd.f32 %v3615, %v3632
  %v3636 = vadd.f32 %v3616, %v3632
  %v3637 = vadd.f32 %v3617, %v3632
  %v3638 = vadd.f32 %v3618, %v3632
  %v3639 = vadd.f32 %v3619, %v3632
  %v3640 = vadd.f32 %v3620, %v3632
  %v3641 = vadd.f32 %v3621, %v3632
  %v3642 = vadd.f32 %v3622, %v3632
  %v3643 = vadd.f32 %v3623, %v3632
  %v3644 = vadd.f32 %v3624, %v3632
  %v3645 = vadd.f32 %v3625, %v3632
  %v3646 = vadd.f32 %v3626, %v3632
  %v3647 = vadd.f32 %v3627, %v3632
  %v3648 = vadd.f32 %v3628, %v3632
  %v3649 = vld [vmem:[%s7] sm:$0xff]
  %v3650 = vld [vmem:[%s7 + $0x8] sm:$0xff]
  %v3651 = vld [vmem:[%s7 + $0x10] sm:$0xff]
  %v3652 = vld [vmem:[%s7 + $0x18] sm:$0xff]
  %v3653 = vld [vmem:[%s8] sm:$0x1]
  %v3655 = vlaneseq
  %v3656 = vshrl.u32 %v3655, 7
  %v3657 = vsub.s32 0, %v3656
  %v3658 = vrot.slane %v3653, %v3657
  %v3661 = vsel %vm58, %v3633, 0
  %v3664 = vsel %vm58, %v3634, 0
  %v3667 = vsel %vm58, %v3635, 0
  %v3670 = vsel %vm58, %v3636, 0
  %v3673 = vsel %vm58, %v3637, 0
  %v3676 = vsel %vm58, %v3638, 0
  %v3679 = vsel %vm58, %v3639, 0
  %v3682 = vsel %vm58, %v3640, 0
  %v3685 = vsel %vm58, %v3641, 0
  %v3688 = vsel %vm58, %v3642, 0
  %v3691 = vsel %vm58, %v3643, 0
  %v3694 = vsel %vm58, %v3644, 0
  %v3697 = vsel %vm58, %v3645, 0
  %v3700 = vsel %vm58, %v3646, 0
  %v3703 = vsel %vm58, %v3647, 0
  %v3706 = vsel %vm58, %v3648, 0
  %3708 = vmatprep.subr.mxu0 0.0
  %3709 = vmatpush1.msra.mxu0 0.0
  %3710 = vmatprep.subr.mxu0 0.0
  %3711 = vmatpush1.msra.mxu0 0.0
  %3712 = vmatprep.subr.mxu0 0.0
  %3713 = vmatpush1.msra.mxu0 0.0
  %3714 = vmatprep.subr.mxu0 0.0
  %3715 = vmatpush1.msra.mxu0 0.0
  %3716 = vmatprep.subr.mxu0 0.0
  %3717 = vmatpush1.msra.mxu0 0.0
  %3718 = vmatprep.subr.mxu0 0.0
  %3719 = vmatpush1.msra.mxu0 0.0
  %3720 = vmatprep.subr.mxu0 0.0
  %3721 = vmatpush1.msra.mxu0 0.0
  %3722 = vmatprep.subr.mxu0 0.0
  %3723 = vmatpush1.msra.mxu0 0.0
  %3724 = vmatprep.subr.mxu0 0.0
  %3725 = vmatpush1.msra.mxu0 0.0
  %3726 = vmatprep.subr.mxu0 0.0
  %3727 = vmatpush1.msra.mxu0 0.0
  %3728 = vmatprep.subr.mxu0 0.0
  %3729 = vmatpush1.msra.mxu0 0.0
  %3730 = vmatprep.subr.mxu0 0.0
  %3731 = vmatpush1.msra.mxu0 0.0
  %3732 = vmatprep.subr.mxu0 0.0
  %3733 = vmatpush1.msra.mxu0 %v3652
  %3734 = vmatprep.subr.mxu0 0.0
  %3735 = vmatpush1.msra.mxu0 %v3651
  %3736 = vmatprep.subr.mxu0 0.0
  %3737 = vmatpush1.msra.mxu0 %v3650
  %3738 = vmatprep.subr.mxu0 0.0
  %3739 = vmatpush1.msra.mxu0 %v3649
  %3740 = vmatprep.subr.mxu0 0.0
  %3741 = vmatpush2.msra.mxu0 0.0
  %3742 = vmatprep.subr.mxu0 0.0
  %3743 = vmatpush2.msra.mxu0 0.0
  %3744 = vmatprep.subr.mxu0 0.0
  %3745 = vmatpush2.msra.mxu0 0.0
  %3746 = vmatprep.subr.mxu0 0.0
  %3747 = vmatpush2.msra.mxu0 0.0
  %3748 = vmatprep.subr.mxu0 0.0
  %3749 = vmatpush2.msra.mxu0 0.0
  %3750 = vmatprep.subr.mxu0 0.0
  %3751 = vmatpush2.msra.mxu0 0.0
  %3752 = vmatprep.subr.mxu0 0.0
  %3753 = vmatpush2.msra.mxu0 0.0
  %3754 = vmatprep.subr.mxu0 0.0
  %3755 = vmatpush2.msra.mxu0 0.0
  %3756 = vmatprep.subr.mxu0 0.0
  %3757 = vmatpush2.msra.mxu0 0.0
  %3758 = vmatprep.subr.mxu0 0.0
  %3759 = vmatpush2.msra.mxu0 0.0
  %3760 = vmatprep.subr.mxu0 0.0
  %3761 = vmatpush2.msra.mxu0 0.0
  %3762 = vmatprep.subr.mxu0 0.0
  %3763 = vmatpush2.msra.mxu0 0.0
  %3764 = vmatprep.subr.mxu0 0.0
  %3765 = vmatpush2.msra.mxu0 0.0
  %3766 = vmatprep.subr.mxu0 0.0
  %3767 = vmatpush2.msra.mxu0 0.0
  %3768 = vmatprep.subr.mxu0 0.0
  %3769 = vmatpush2.msra.mxu0 0.0
  %3770 = vmatprep.subr.mxu0 0.0
  %3771 = vmatpush2.msra.mxu0 0.0
  %3772 = vmatprep.mubr.f32.mxu0 0.0
  %3773 = vmatmul.mubr.f32.gmra.mxu0 %v3661
  %v3774 = vpop.f32.mrf.mxu0
  %v3775 = vadd.f32 %v3658, %v3774
  %v3776 = vpop.f32.mrf.mxu0
  %3777 = vmatprep.mubr.f32.mxu0 0.0
  %3778 = vmatmul.mubr.f32.gmra.mxu0 %v3664
  %v3779 = vpop.f32.mrf.mxu0
  %v3780 = vadd.f32 %v3658, %v3779
  %v3781 = vpop.f32.mrf.mxu0
  %3782 = vmatprep.mubr.f32.mxu0 0.0
  %3783 = vmatmul.mubr.f32.gmra.mxu0 %v3667
  %v3784 = vpop.f32.mrf.mxu0
  %v3785 = vadd.f32 %v3658, %v3784
  %v3786 = vpop.f32.mrf.mxu0
  %3787 = vmatprep.mubr.f32.mxu0 0.0
  %3788 = vmatmul.mubr.f32.gmra.mxu0 %v3670
  %v3789 = vpop.f32.mrf.mxu0
  %v3790 = vadd.f32 %v3658, %v3789
  %v3791 = vpop.f32.mrf.mxu0
  %3792 = vmatprep.mubr.f32.mxu0 0.0
  %3793 = vmatmul.mubr.f32.gmra.mxu0 %v3673
  %v3794 = vpop.f32.mrf.mxu0
  %v3795 = vadd.f32 %v3658, %v3794
  %v3796 = vpop.f32.mrf.mxu0
  %3797 = vmatprep.mubr.f32.mxu0 0.0
  %3798 = vmatmul.mubr.f32.gmra.mxu0 %v3676
  %v3799 = vpop.f32.mrf.mxu0
  %v3800 = vadd.f32 %v3658, %v3799
  %v3801 = vpop.f32.mrf.mxu0
  %3802 = vmatprep.mubr.f32.mxu0 0.0
  %3803 = vmatmul.mubr.f32.gmra.mxu0 %v3679
  %v3804 = vpop.f32.mrf.mxu0
  %v3805 = vadd.f32 %v3658, %v3804
  %v3806 = vpop.f32.mrf.mxu0
  %3807 = vmatprep.mubr.f32.mxu0 0.0
  %3808 = vmatmul.mubr.f32.gmra.mxu0 %v3682
  %v3809 = vpop.f32.mrf.mxu0
  %v3810 = vadd.f32 %v3658, %v3809
  %v3811 = vpop.f32.mrf.mxu0
  %3812 = vmatprep.mubr.f32.mxu0 0.0
  %3813 = vmatmul.mubr.f32.gmra.mxu0 %v3685
  %v3814 = vpop.f32.mrf.mxu0
  %v3815 = vadd.f32 %v3658, %v3814
  %v3816 = vpop.f32.mrf.mxu0
  %3817 = vmatprep.mubr.f32.mxu0 0.0
  %3818 = vmatmul.mubr.f32.gmra.mxu0 %v3688
  %v3819 = vpop.f32.mrf.mxu0
  %v3820 = vadd.f32 %v3658, %v3819
  %v3821 = vpop.f32.mrf.mxu0
  %3822 = vmatprep.mubr.f32.mxu0 0.0
  %3823 = vmatmul.mubr.f32.gmra.mxu0 %v3691
  %v3824 = vpop.f32.mrf.mxu0
  %v3825 = vadd.f32 %v3658, %v3824
  %v3826 = vpop.f32.mrf.mxu0
  %3827 = vmatprep.mubr.f32.mxu0 0.0
  %3828 = vmatmul.mubr.f32.gmra.mxu0 %v3694
  %v3829 = vpop.f32.mrf.mxu0
  %v3830 = vadd.f32 %v3658, %v3829
  %v3831 = vpop.f32.mrf.mxu0
  %3832 = vmatprep.mubr.f32.mxu0 0.0
  %3833 = vmatmul.mubr.f32.gmra.mxu0 %v3697
  %v3834 = vpop.f32.mrf.mxu0
  %v3835 = vadd.f32 %v3658, %v3834
  %v3836 = vpop.f32.mrf.mxu0
  %3837 = vmatprep.mubr.f32.mxu0 0.0
  %3838 = vmatmul.mubr.f32.gmra.mxu0 %v3700
  %v3839 = vpop.f32.mrf.mxu0
  %v3840 = vadd.f32 %v3658, %v3839
  %v3841 = vpop.f32.mrf.mxu0
  %3842 = vmatprep.mubr.f32.mxu0 0.0
  %3843 = vmatmul.mubr.f32.gmra.mxu0 %v3703
  %v3844 = vpop.f32.mrf.mxu0
  %v3845 = vadd.f32 %v3658, %v3844
  %v3846 = vpop.f32.mrf.mxu0
  %3847 = vmatprep.mubr.f32.mxu0 0.0
  %3848 = vmatmul.mubr.f32.gmra.mxu0 %v3706
  %v3849 = vpop.f32.mrf.mxu0
  %v3850 = vadd.f32 %v3658, %v3849
  %v3851 = vpop.f32.mrf.mxu0
  %3852 = vdwg.mxu0
  %v3853 = vmul.f32 %v3775, 0.5
  %v3854 = vmul.f32 %v3780, 0.5
  %v3855 = vmul.f32 %v3785, 0.5
  %v3856 = vmul.f32 %v3790, 0.5
  %v3857 = vmul.f32 %v3795, 0.5
  %v3858 = vmul.f32 %v3800, 0.5
  %v3859 = vmul.f32 %v3805, 0.5
  %v3860 = vmul.f32 %v3810, 0.5
  %v3861 = vmul.f32 %v3815, 0.5
  %v3862 = vmul.f32 %v3820, 0.5
  %v3863 = vmul.f32 %v3825, 0.5
  %v3864 = vmul.f32 %v3830, 0.5
  %v3865 = vmul.f32 %v3835, 0.5
  %v3866 = vmul.f32 %v3840, 0.5
  %v3867 = vmul.f32 %v3845, 0.5
  %v3868 = vmul.f32 %v3850, 0.5
  %v3869 = vmul.f32 %v3775, 0.70710677
  %v3870 = vmul.f32 %v3780, 0.70710677
  %v3871 = vmul.f32 %v3785, 0.70710677
  %v3872 = vmul.f32 %v3790, 0.70710677
  %v3873 = vmul.f32 %v3795, 0.70710677
  %v3874 = vmul.f32 %v3800, 0.70710677
  %v3875 = vmul.f32 %v3805, 0.70710677
  %v3876 = vmul.f32 %v3810, 0.70710677
  %v3877 = vmul.f32 %v3815, 0.70710677
  %v3878 = vmul.f32 %v3820, 0.70710677
  %v3879 = vmul.f32 %v3825, 0.70710677
  %v3880 = vmul.f32 %v3830, 0.70710677
  %v3881 = vmul.f32 %v3835, 0.70710677
  %v3882 = vmul.f32 %v3840, 0.70710677
  %v3883 = vmul.f32 %v3845, 0.70710677
  %v3884 = vmul.f32 %v3850, 0.70710677
  %v3885 = verf.f32.pop %v3869
  %v3886 = verf.f32.pop %v3870
  %v3887 = verf.f32.pop %v3871
  %v3888 = verf.f32.pop %v3872
  %v3889 = verf.f32.pop %v3873
  %v3890 = verf.f32.pop %v3874
  %v3891 = verf.f32.pop %v3875
  %v3892 = verf.f32.pop %v3876
  %v3893 = verf.f32.pop %v3877
  %v3894 = verf.f32.pop %v3878
  %v3895 = verf.f32.pop %v3879
  %v3896 = verf.f32.pop %v3880
  %v3897 = verf.f32.pop %v3881
  %v3898 = verf.f32.pop %v3882
  %v3899 = verf.f32.pop %v3883
  %v3900 = verf.f32.pop %v3884
  %v3901 = vadd.f32 %v3885, 1.0
  %v3902 = vadd.f32 %v3886, 1.0
  %v3903 = vadd.f32 %v3887, 1.0
  %v3904 = vadd.f32 %v3888, 1.0
  %v3905 = vadd.f32 %v3889, 1.0
  %v3906 = vadd.f32 %v3890, 1.0
  %v3907 = vadd.f32 %v3891, 1.0
  %v3908 = vadd.f32 %v3892, 1.0
  %v3909 = vadd.f32 %v3893, 1.0
  %v3910 = vadd.f32 %v3894, 1.0
  %v3911 = vadd.f32 %v3895, 1.0
  %v3912 = vadd.f32 %v3896, 1.0
  %v3913 = vadd.f32 %v3897, 1.0
  %v3914 = vadd.f32 %v3898, 1.0
  %v3915 = vadd.f32 %v3899, 1.0
  %v3916 = vadd.f32 %v3900, 1.0
  %v3917 = vmul.f32 %v3853, %v3901
  %v3918 = vmul.f32 %v3854, %v3902
  %v3919 = vmul.f32 %v3855, %v3903
  %v3920 = vmul.f32 %v3856, %v3904
  %v3921 = vmul.f32 %v3857, %v3905
  %v3922 = vmul.f32 %v3858, %v3906
  %v3923 = vmul.f32 %v3859, %v3907
  %v3924 = vmul.f32 %v3860, %v3908
  %v3925 = vmul.f32 %v3861, %v3909
  %v3926 = vmul.f32 %v3862, %v3910
  %v3927 = vmul.f32 %v3863, %v3911
  %v3928 = vmul.f32 %v3864, %v3912
  %v3929 = vmul.f32 %v3865, %v3913
  %v3930 = vmul.f32 %v3866, %v3914
  %v3931 = vmul.f32 %v3867, %v3915
  %v3932 = vmul.f32 %v3868, %v3916
  %v3933 = vld [vmem:[%s9] sm:$0xff]
  %v3934 = vld [vmem:[%s9 + $0x8] sm:$0xff]
  %v3935 = vld [vmem:[%s9 + $0x10] sm:$0xff]
  %v3936 = vld [vmem:[%s9 + $0x18] sm:$0xff]
  %v3937 = vld [vmem:[%s9 + $0x20] sm:$0xff]
  %v3938 = vld [vmem:[%s9 + $0x28] sm:$0xff]
  %v3939 = vld [vmem:[%s9 + $0x30] sm:$0xff]
  %v3940 = vld [vmem:[%s9 + $0x38] sm:$0xff]
  %v3941 = vlaneseq
  %v3942 = vshrl.u32 %v3941, 7
  %v3943 = vsub.s32 0, %v3942
  %v3944 = vrot.slane %v57, %v3943
  %v3946 = vsel %vm615, %v3917, 0
  %v3949 = vsel %vm615, %v3918, 0
  %v3952 = vsel %vm615, %v3919, 0
  %v3955 = vsel %vm615, %v3920, 0
  %v3958 = vsel %vm615, %v3921, 0
  %v3961 = vsel %vm615, %v3922, 0
  %v3964 = vsel %vm615, %v3923, 0
  %v3967 = vsel %vm615, %v3924, 0
  %v3970 = vsel %vm615, %v3925, 0
  %v3973 = vsel %vm615, %v3926, 0
  %v3976 = vsel %vm615, %v3927, 0
  %v3979 = vsel %vm615, %v3928, 0
  %v3982 = vsel %vm615, %v3929, 0
  %v3985 = vsel %vm615, %v3930, 0
  %v3988 = vsel %vm615, %v3931, 0
  %v3991 = vsel %vm615, %v3932, 0
  %3993 = vmatprep.subr.mxu0 0.0
  %3994 = vmatpush1.msra.mxu0 0.0
  %3995 = vmatprep.subr.mxu0 0.0
  %3996 = vmatpush1.msra.mxu0 0.0
  %3997 = vmatprep.subr.mxu0 0.0
  %3998 = vmatpush1.msra.mxu0 0.0
  %3999 = vmatprep.subr.mxu0 0.0
  %4000 = vmatpush1.msra.mxu0 0.0
  %4001 = vmatprep.subr.mxu0 0.0
  %4002 = vmatpush1.msra.mxu0 0.0
  %4003 = vmatprep.subr.mxu0 0.0
  %4004 = vmatpush1.msra.mxu0 0.0
  %4005 = vmatprep.subr.mxu0 0.0
  %4006 = vmatpush1.msra.mxu0 0.0
  %4007 = vmatprep.subr.mxu0 0.0
  %4008 = vmatpush1.msra.mxu0 0.0
  %4009 = vmatprep.subr.mxu0 0.0
  %4010 = vmatpush1.msra.mxu0 %v3940
  %4011 = vmatprep.subr.mxu0 0.0
  %4012 = vmatpush1.msra.mxu0 %v3939
  %4013 = vmatprep.subr.mxu0 0.0
  %4014 = vmatpush1.msra.mxu0 %v3938
  %4015 = vmatprep.subr.mxu0 0.0
  %4016 = vmatpush1.msra.mxu0 %v3937
  %4017 = vmatprep.subr.mxu0 0.0
  %4018 = vmatpush1.msra.mxu0 %v3936
  %4019 = vmatprep.subr.mxu0 0.0
  %4020 = vmatpush1.msra.mxu0 %v3935
  %4021 = vmatprep.subr.mxu0 0.0
  %4022 = vmatpush1.msra.mxu0 %v3934
  %4023 = vmatprep.subr.mxu0 0.0
  %4024 = vmatpush1.msra.mxu0 %v3933
  %4025 = vmatprep.subr.mxu0 0.0
  %4026 = vmatpush2.msra.mxu0 0.0
  %4027 = vmatprep.subr.mxu0 0.0
  %4028 = vmatpush2.msra.mxu0 0.0
  %4029 = vmatprep.subr.mxu0 0.0
  %4030 = vmatpush2.msra.mxu0 0.0
  %4031 = vmatprep.subr.mxu0 0.0
  %4032 = vmatpush2.msra.mxu0 0.0
  %4033 = vmatprep.subr.mxu0 0.0
  %4034 = vmatpush2.msra.mxu0 0.0
  %4035 = vmatprep.subr.mxu0 0.0
  %4036 = vmatpush2.msra.mxu0 0.0
  %4037 = vmatprep.subr.mxu0 0.0
  %4038 = vmatpush2.msra.mxu0 0.0
  %4039 = vmatprep.subr.mxu0 0.0
  %4040 = vmatpush2.msra.mxu0 0.0
  %4041 = vmatprep.subr.mxu0 0.0
  %4042 = vmatpush2.msra.mxu0 0.0
  %4043 = vmatprep.subr.mxu0 0.0
  %4044 = vmatpush2.msra.mxu0 0.0
  %4045 = vmatprep.subr.mxu0 0.0
  %4046 = vmatpush2.msra.mxu0 0.0
  %4047 = vmatprep.subr.mxu0 0.0
  %4048 = vmatpush2.msra.mxu0 0.0
  %4049 = vmatprep.subr.mxu0 0.0
  %4050 = vmatpush2.msra.mxu0 0.0
  %4051 = vmatprep.subr.mxu0 0.0
  %4052 = vmatpush2.msra.mxu0 0.0
  %4053 = vmatprep.subr.mxu0 0.0
  %4054 = vmatpush2.msra.mxu0 0.0
  %4055 = vmatprep.subr.mxu0 0.0
  %4056 = vmatpush2.msra.mxu0 0.0
  %4057 = vmatprep.mubr.f32.mxu0 0.0
  %4058 = vmatmul.mubr.f32.gmra.mxu0 %v3946
  %v4059 = vpop.f32.mrf.mxu0
  %v4060 = vadd.f32 %v3944, %v4059
  %v4061 = vpop.f32.mrf.mxu0
  %4062 = vmatprep.mubr.f32.mxu0 0.0
  %4063 = vmatmul.mubr.f32.gmra.mxu0 %v3949
  %v4064 = vpop.f32.mrf.mxu0
  %v4065 = vadd.f32 %v3944, %v4064
  %v4066 = vpop.f32.mrf.mxu0
  %4067 = vmatprep.mubr.f32.mxu0 0.0
  %4068 = vmatmul.mubr.f32.gmra.mxu0 %v3952
  %v4069 = vpop.f32.mrf.mxu0
  %v4070 = vadd.f32 %v3944, %v4069
  %v4071 = vpop.f32.mrf.mxu0
  %4072 = vmatprep.mubr.f32.mxu0 0.0
  %4073 = vmatmul.mubr.f32.gmra.mxu0 %v3955
  %v4074 = vpop.f32.mrf.mxu0
  %v4075 = vadd.f32 %v3944, %v4074
  %v4076 = vpop.f32.mrf.mxu0
  %4077 = vmatprep.mubr.f32.mxu0 0.0
  %4078 = vmatmul.mubr.f32.gmra.mxu0 %v3958
  %v4079 = vpop.f32.mrf.mxu0
  %v4080 = vadd.f32 %v3944, %v4079
  %v4081 = vpop.f32.mrf.mxu0
  %4082 = vmatprep.mubr.f32.mxu0 0.0
  %4083 = vmatmul.mubr.f32.gmra.mxu0 %v3961
  %v4084 = vpop.f32.mrf.mxu0
  %v4085 = vadd.f32 %v3944, %v4084
  %v4086 = vpop.f32.mrf.mxu0
  %4087 = vmatprep.mubr.f32.mxu0 0.0
  %4088 = vmatmul.mubr.f32.gmra.mxu0 %v3964
  %v4089 = vpop.f32.mrf.mxu0
  %v4090 = vadd.f32 %v3944, %v4089
  %v4091 = vpop.f32.mrf.mxu0
  %4092 = vmatprep.mubr.f32.mxu0 0.0
  %4093 = vmatmul.mubr.f32.gmra.mxu0 %v3967
  %v4094 = vpop.f32.mrf.mxu0
  %v4095 = vadd.f32 %v3944, %v4094
  %v4096 = vpop.f32.mrf.mxu0
  %4097 = vmatprep.mubr.f32.mxu0 0.0
  %4098 = vmatmul.mubr.f32.gmra.mxu0 %v3970
  %v4099 = vpop.f32.mrf.mxu0
  %v4100 = vadd.f32 %v3944, %v4099
  %v4101 = vpop.f32.mrf.mxu0
  %4102 = vmatprep.mubr.f32.mxu0 0.0
  %4103 = vmatmul.mubr.f32.gmra.mxu0 %v3973
  %v4104 = vpop.f32.mrf.mxu0
  %v4105 = vadd.f32 %v3944, %v4104
  %v4106 = vpop.f32.mrf.mxu0
  %4107 = vmatprep.mubr.f32.mxu0 0.0
  %4108 = vmatmul.mubr.f32.gmra.mxu0 %v3976
  %v4109 = vpop.f32.mrf.mxu0
  %v4110 = vadd.f32 %v3944, %v4109
  %v4111 = vpop.f32.mrf.mxu0
  %4112 = vmatprep.mubr.f32.mxu0 0.0
  %4113 = vmatmul.mubr.f32.gmra.mxu0 %v3979
  %v4114 = vpop.f32.mrf.mxu0
  %v4115 = vadd.f32 %v3944, %v4114
  %v4116 = vpop.f32.mrf.mxu0
  %4117 = vmatprep.mubr.f32.mxu0 0.0
  %4118 = vmatmul.mubr.f32.gmra.mxu0 %v3982
  %v4119 = vpop.f32.mrf.mxu0
  %v4120 = vadd.f32 %v3944, %v4119
  %v4121 = vpop.f32.mrf.mxu0
  %4122 = vmatprep.mubr.f32.mxu0 0.0
  %4123 = vmatmul.mubr.f32.gmra.mxu0 %v3985
  %v4124 = vpop.f32.mrf.mxu0
  %v4125 = vadd.f32 %v3944, %v4124
  %v4126 = vpop.f32.mrf.mxu0
  %4127 = vmatprep.mubr.f32.mxu0 0.0
  %4128 = vmatmul.mubr.f32.gmra.mxu0 %v3988
  %v4129 = vpop.f32.mrf.mxu0
  %v4130 = vadd.f32 %v3944, %v4129
  %v4131 = vpop.f32.mrf.mxu0
  %4132 = vmatprep.mubr.f32.mxu0 0.0
  %4133 = vmatmul.mubr.f32.gmra.mxu0 %v3991
  %v4134 = vpop.f32.mrf.mxu0
  %v4135 = vadd.f32 %v3944, %v4134
  %v4136 = vpop.f32.mrf.mxu0
  %4137 = vdwg.mxu0
  %v4138 = vadd.f32 %v4060, %v3385
  %v4139 = vadd.f32 %v4065, %v3386
  %v4140 = vadd.f32 %v4070, %v3387
  %v4141 = vadd.f32 %v4075, %v3388
  %v4142 = vadd.f32 %v4080, %v3389
  %v4143 = vadd.f32 %v4085, %v3390
  %v4144 = vadd.f32 %v4090, %v3391
  %v4145 = vadd.f32 %v4095, %v3392
  %v4146 = vadd.f32 %v4100, %v3393
  %v4147 = vadd.f32 %v4105, %v3394
  %v4148 = vadd.f32 %v4110, %v3395
  %v4149 = vadd.f32 %v4115, %v3396
  %v4150 = vadd.f32 %v4120, %v3397
  %v4151 = vadd.f32 %v4125, %v3398
  %v4152 = vadd.f32 %v4130, %v3399
  %v4153 = vadd.f32 %v4135, %v3400
  %4154 = vst.msk [vmem:[%s10] sm:$0xff] %vm58, %v4138
  %4155 = vst.msk [vmem:[%s10 + $0x8] sm:$0xff] %vm58, %v4139
  %4156 = vst.msk [vmem:[%s10 + $0x10] sm:$0xff] %vm58, %v4140
  %4157 = vst.msk [vmem:[%s10 + $0x18] sm:$0xff] %vm58, %v4141
  %4158 = vst.msk [vmem:[%s10 + $0x20] sm:$0xff] %vm58, %v4142
  %4159 = vst.msk [vmem:[%s10 + $0x28] sm:$0xff] %vm58, %v4143
  %4160 = vst.msk [vmem:[%s10 + $0x30] sm:$0xff] %vm58, %v4144
  %4161 = vst.msk [vmem:[%s10 + $0x38] sm:$0xff] %vm58, %v4145
  %4162 = vst.msk [vmem:[%s10 + $0x40] sm:$0xff] %vm58, %v4146
  %4163 = vst.msk [vmem:[%s10 + $0x48] sm:$0xff] %vm58, %v4147
  %4164 = vst.msk [vmem:[%s10 + $0x50] sm:$0xff] %vm58, %v4148
  %4165 = vst.msk [vmem:[%s10 + $0x58] sm:$0xff] %vm58, %v4149
  %4166 = vst.msk [vmem:[%s10 + $0x60] sm:$0xff] %vm58, %v4150
  %4167 = vst.msk [vmem:[%s10 + $0x68] sm:$0xff] %vm58, %v4151
  %4168 = vst.msk [vmem:[%s10 + $0x70] sm:$0xff] %vm58, %v4152
  %4169 = vst.msk [vmem:[%s10 + $0x78] sm:$0xff] %vm58, %v4153
  // Predicated region
  $region42: #{tpu_custom_call.1} parent=0 // pred_check
    _
  $region43: #{tpu_custom_call.1} parent=0 // pred_check_branch
    %4171 = sbr.rel (0) target = $region45
  $region44: #{tpu_custom_call.1} parent=0 // pred_region
    _
  $region45: #{tpu_custom_call.1} parent=0 // pred_fallthru
    _
  // Predicated region
  $region46: #{tpu_custom_call.1} parent=0 // pred_check
    _
  $region47: #{tpu_custom_call.1} parent=0 // pred_check_branch
    %4173 = sbr.rel (0) target = $region49
  $region48: #{tpu_custom_call.1} parent=0 // pred_region
    _
  $region49: #{tpu_custom_call.1} parent=0 // pred_fallthru
    _

</llo_original>
